<compile_context>
chip_gen: v7x
topology: tpu7x:2x2x1
jax: 0.10.0
libtpu: 0.0.40
codegen_flags: <defaults>
</compile_context>

<pallas_src>
import numpy as np
import jax
import jax.numpy as jnp
from jax.experimental import pallas as pl
from jax.experimental.pallas import tpu as pltpu

# ---- module hyperparameters (mirror DownsamplingBlock.__init__) -------------
N_INPUTS = 4
N_SHORTCUT = 8
N_OUTPUTS = 8
KERNEL_SIZE = 5
STRIDE = 2          # assert stride > 1
DEPTH = 2
NEG_SLOPE = 0.01    # F.leaky_relu default negative_slope

TD_TILE = 512       # down-conv output tile width (lanes); shortcut tile = TD*stride
SEL_TD = 128        # decimation chunk width (output lanes per selection matmul)


def _make_kernel(conv_dims, k, stride, ts_tile, td_tile, halo, p_cols,
                 neg_slope, n_pre, sel_td):
    """conv_dims: tuple of (c_in_padded, c_out) for every conv (pre+post+down)."""
    n_convs = len(conv_dims)
    bias_col = p_cols - 1
    sel_ts = sel_td * stride

    def conv_lrelu(p_ref, a, idx):
        c_in_pad, c_out = conv_dims[idx]
        w_in = a.shape[1]
        # Pad channels up to a multiple of 8 sublanes so the im2col concat is
        # sublane-aligned (only the first conv, c_in=4, actually pads).
        if a.shape[0] < c_in_pad:
            a = jnp.concatenate(
                [a, jnp.zeros((c_in_pad - a.shape[0], w_in), jnp.float32)],
                axis=0)
        w_out = w_in - k + 1
        # im2col: fold the K taps into the contraction -> ONE matmul per conv.
        cols = jnp.concatenate([a[:, j:j + w_out] for j in range(k)], axis=0)
        w = p_ref[idx, 0:c_out, 0:k * c_in_pad]              # (c_out, k*c_in)
        b = p_ref[idx, 0:c_out, bias_col:bias_col + 1]       # (c_out, 1)
        y = jnp.dot(w, cols, preferred_element_type=jnp.float32) + b
        return jnp.where(y >= 0.0, y, neg_slope * y)

    def kernel(xa_ref, xb_ref, p_ref, sel_ref, out_ref, short_ref):
        # halo'd input window for this (batch, time-tile) grid point:
        # main ts_tile-wide block + first `halo` columns of the neighbour block.
        a = jnp.concatenate([xa_ref[0], xb_ref[0, :, 0:halo]],
                            axis=1).astype(jnp.float32)      # (c_in, ts+halo)

        # pre-shortcut convs
        idx = 0
        for _ in range(n_pre):
            a = conv_lrelu(p_ref, a, idx)
            idx += 1
        short_ref[0, :, :] = a[:, 0:ts_tile].astype(short_ref.dtype)

        # post-shortcut convs
        o = a
        for _ in range(n_convs - n_pre - 1):
            o = conv_lrelu(p_ref, o, idx)
            idx += 1

        # strided down-conv: stride-1 conv at full rate (exactly ts_tile wide,
        # never written to HBM), then decimate every `stride`-th column with a
        # grid-invariant 0/1 selection matrix applied in fixed-width chunks
        # (cost linear in tile width; sel operand fixed at sel_ts x sel_td).
        d_full = conv_lrelu(p_ref, o, idx)                   # (c_out, ts_tile)
        sel = sel_ref[...]                                   # (sel_ts, sel_td)
        chunks = [
            jnp.dot(d_full[:, c * sel_ts:(c + 1) * sel_ts], sel,
                    preferred_element_type=jnp.float32)
            for c in range(td_tile // sel_td)
        ]
        out_ref[0, :, :] = jnp.concatenate(chunks, axis=1).astype(out_ref.dtype)

    return kernel


def pack_downsampling_params(pre_params, post_params, down_params, stride,
                             sel_td=SEL_TD):
    """Pack all conv weights/biases into one lane-dense slab (numpy, once)."""
    all_params = list(pre_params) + list(post_params) + [down_params]
    k = all_params[0][0].shape[0]
    conv_dims = []
    for (w, _) in all_params:
        kk, co, ci = w.shape
        assert kk == k
        conv_dims.append((((ci + 7) // 8) * 8, co))          # (c_in_padded, c_out)
    c_max = max(co for (_, co) in conv_dims)
    ci_pad_max = max(cp for (cp, _) in conv_dims)
    p_cols = k * ci_pad_max + 1                              # + bias column

    slab = np.zeros((len(all_params), c_max, p_cols), np.float32)
    for i, (w, b) in enumerate(all_params):
        kk, co, ci = w.shape
        ci_pad = conv_dims[i][0]
        w_np = np.asarray(w, np.float32)                     # (k, co, ci)
        b_np = np.asarray(b, np.float32)                     # (co, 1)
        w_pad = np.zeros((kk, co, ci_pad), np.float32)
        w_pad[:, :, :ci] = w_np
        # row layout [o, j*ci_pad + c] matches the kernel's im2col tap order
        w_mat = np.transpose(w_pad, (1, 0, 2)).reshape(co, kk * ci_pad)
        slab[i, :co, :kk * ci_pad] = w_mat
        slab[i, :co, p_cols - 1] = b_np[:, 0]

    # grid-invariant decimation matrix: sel[r, t] = (r == t*stride)
    sel_np = np.zeros((sel_td * stride, sel_td), np.float32)
    sel_np[np.arange(sel_td) * stride, np.arange(sel_td)] = 1.0

    return (jnp.asarray(slab), jnp.asarray(sel_np), tuple(conv_dims), k,
            p_cols, len(pre_params), len(post_params))


def downsampling_block(x, packed, stride, td_tile=TD_TILE, sel_td=SEL_TD):
    slab, sel, conv_dims, k, p_cols, n_pre, n_post = packed
    B, c_in0, T = x.shape
    c_short = conv_dims[n_pre - 1][1]
    c_out = conv_dims[-1][1]

    # true ("valid") output lengths of the PyTorch module
    t_short = T - n_pre * (k - 1)
    t_post = t_short - n_post * (k - 1)
    assert t_post >= k, "input too short for this DownsamplingBlock"
    t_down = (t_post - k) // stride + 1

    # time tiling: each grid step emits td_tile down columns and
    # ts_tile = td_tile*stride shortcut columns (both lane-dense).
    ts_tile = td_tile * stride
    halo = (k - 1) * (n_pre + n_post + 1)
    assert halo <= 128 and ts_tile % 128 == 0, "halo/tile config unsupported"
    assert td_tile % sel_td == 0 and sel.shape == (sel_td * stride, sel_td)
    nt = max(pl.cdiv(t_short, ts_tile), pl.cdiv(t_down, td_tile))
    t_pad_in = (nt + 1) * ts_tile            # one extra tile feeds the halo view
    x_pad = jnp.pad(x, ((0, 0), (0, 0), (0, t_pad_in - T)))

    kernel = _make_kernel(conv_dims, k, stride, ts_tile, td_tile, halo,
                          p_cols, NEG_SLOPE, n_pre, sel_td)

    # advisory cost estimate for XLA's scheduler
    flops_per_step = 0
    w_cur = ts_tile + halo
    for (ci_pad, co) in conv_dims:
        w_cur -= (k - 1)
        flops_per_step += 2 * co * k * ci_pad * w_cur
    flops_per_step += 2 * c_out * (sel_td * stride) * td_tile
    bytes_per_step = 4 * (c_in0 * (ts_tile + 128)
                          + c_out * td_tile + c_short * ts_tile)
    n_steps = B * nt
    cost = pl.CostEstimate(flops=n_steps * flops_per_step, transcendentals=0,
                           bytes_accessed=n_steps * bytes_per_step
                           + 4 * (slab.size + sel.size))

    out_pad, short_pad = pl.pallas_call(
        kernel,
        grid=(B, nt),
        in_specs=[
            # main time tile of the input
            pl.BlockSpec((1, c_in0, ts_tile), lambda b, t: (b, 0, t)),
            # neighbour block supplying the halo columns (static in-kernel slice)
            pl.BlockSpec((1, c_in0, 128),
                         lambda b, t: (b, 0, (t + 1) * (ts_tile // 128))),
            # packed weights/biases, constant block index -> fetched once
            pl.BlockSpec((len(conv_dims), slab.shape[1], p_cols),
                         lambda b, t: (0, 0, 0)),
            # grid-invariant decimation selection matrix
            pl.BlockSpec((sel_td * stride, sel_td), lambda b, t: (0, 0)),
        ],
        out_specs=(
            pl.BlockSpec((1, c_out, td_tile), lambda b, t: (b, 0, t)),
            pl.BlockSpec((1, c_short, ts_tile), lambda b, t: (b, 0, t)),
        ),
        out_shape=(
            jax.ShapeDtypeStruct((B, c_out, nt * td_tile), x.dtype),
            jax.ShapeDtypeStruct((B, c_short, nt * ts_tile), x.dtype),
        ),
        compiler_params=pltpu.CompilerParams(
            dimension_semantics=("parallel", "parallel"),
            vmem_limit_bytes=64 * 1024 * 1024),
        cost_estimate=cost,
    )(x_pad, x_pad, slab, sel)

    # trim tile padding back to the true valid-conv lengths
    return out_pad[:, :, :t_down], short_pad[:, :, :t_short]


# ---- deterministic parameter init (PyTorch Conv1d default: U(-1/sqrt(fan),..))
def init_conv_params(key, c_in, c_out, k):
    kw, kb = jax.random.split(key)
    bound = 1.0 / ((c_in * k) ** 0.5)
    w = jax.random.uniform(kw, (k, c_out, c_in), jnp.float32, -bound, bound)
    b = jax.random.uniform(kb, (c_out, 1), jnp.float32, -bound, bound)
    return w, b


# ---- pure-JAX reference ------------------------------------------------------
def ref_conv1d_lrelu(x, w, b, stride):
    w_oik = jnp.transpose(w, (1, 2, 0))  # (Cout, Cin, K)
    y = jax.lax.conv_general_dilated(
        x, w_oik, window_strides=(stride,), padding="VALID",
        dimension_numbers=("NCH", "OIH", "NCH"))
    y = y + b[None, :, :]
    return jnp.where(y >= 0, y, NEG_SLOPE * y)


if __name__ == "__main__":
    key = jax.random.PRNGKey(0)
    keys = jax.random.split(key, 1 + 2 * DEPTH + 1)

    # two time tiles (ts_tile=1024) + ragged/padded tail; grid = (2, 2)
    B, T = 2, 1200
    x = jax.random.normal(keys[0], (B, N_INPUTS, T), jnp.float32)

    ki = 1
    pre_params, c = [], N_INPUTS
    for _ in range(DEPTH):
        pre_params.append(init_conv_params(keys[ki], c, N_SHORTCUT, KERNEL_SIZE))
        c = N_SHORTCUT
        ki += 1
    post_params = []
    for _ in range(DEPTH):
        post_params.append(init_conv_params(keys[ki], c, N_OUTPUTS, KERNEL_SIZE))
        c = N_OUTPUTS
        ki += 1
    down_params = init_conv_params(keys[ki], N_OUTPUTS, N_OUTPUTS, KERNEL_SIZE)

    # pack parameters ONCE (numpy, outside the hot path)
    packed = pack_downsampling_params(pre_params, post_params, down_params,
                                      STRIDE, SEL_TD)

    out, shortcut = downsampling_block(x, packed, STRIDE)
    out, shortcut = jax.block_until_ready((out, shortcut))

    # reference forward
    s_ref = x
    for (w, b) in pre_params:
        s_ref = ref_conv1d_lrelu(s_ref, w, b, 1)
    o_ref = s_ref
    for (w, b) in post_params:
        o_ref = ref_conv1d_lrelu(o_ref, w, b, 1)
    o_ref = ref_conv1d_lrelu(o_ref, down_params[0], down_params[1], STRIDE)

    assert out.shape == o_ref.shape, (out.shape, o_ref.shape)
    assert shortcut.shape == s_ref.shape, (shortcut.shape, s_ref.shape)
    assert jnp.allclose(out, o_ref, atol=1e-4, rtol=1e-4)
    assert jnp.allclose(shortcut, s_ref, atol=1e-4, rtol=1e-4)
    print("KERNEL_OK")
</pallas_src>

<mosaic_0001>
module attributes {stable_mosaic.version = 11 : i64} {
  func.func @kernel(%arg0: i32, %arg1: i32, %arg2: memref<1x4x1024xf32, #tpu.memory_space<vmem>>, %arg3: memref<1x4x128xf32, #tpu.memory_space<vmem>>, %arg4: memref<5x8x41xf32, #tpu.memory_space<vmem>>, %arg5: memref<256x128xf32, #tpu.memory_space<vmem>>, %arg6: memref<1x8x512xf32, #tpu.memory_space<vmem>>, %arg7: memref<1x8x1024xf32, #tpu.memory_space<vmem>>) attributes {dimension_semantics = [#tpu.dimension_semantics<parallel>, #tpu.dimension_semantics<parallel>], iteration_bounds = array<i64: 2, 2>, scalar_prefetch = 0 : i64, scratch_operands = 0 : i64, tpu.core_type = #tpu.core_type<tc>, window_params = [{transform_indices = @transform_0, window_bounds = array<i64: 1, 4, 1024>}, {transform_indices = @transform_1, window_bounds = array<i64: 1, 4, 128>}, {pipeline_mode = #tpu.pipeline_mode<synchronous>, transform_indices = @transform_2, window_bounds = array<i64: 5, 8, 41>}, {pipeline_mode = #tpu.pipeline_mode<synchronous>, transform_indices = @transform_3, window_bounds = array<i64: 256, 128>}, {transform_indices = @transform_4, window_bounds = array<i64: 1, 8, 512>}, {transform_indices = @transform_5, window_bounds = array<i64: 1, 8, 1024>}]} {
    %c0 = arith.constant 0 : index
    %c0_0 = arith.constant 0 : index
    %c0_1 = arith.constant 0 : index
    %0 = vector.load %arg2[%c0, %c0_0, %c0_1] : memref<1x4x1024xf32, #tpu.memory_space<vmem>>, vector<1x4x1024xf32>
    %1 = vector.shape_cast %0 : vector<1x4x1024xf32> to vector<4x1024xf32>
    %c0_2 = arith.constant 0 : index
    %c0_3 = arith.constant 0 : index
    %c0_4 = arith.constant 0 : index
    %2 = vector.load %arg3[%c0_2, %c0_3, %c0_4] : memref<1x4x128xf32, #tpu.memory_space<vmem>>, vector<1x4x20xf32>
    %3 = vector.shape_cast %2 : vector<1x4x20xf32> to vector<4x20xf32>
    %4 = tpu.concatenate %1, %3 in 1 : vector<4x1024xf32>, vector<4x20xf32> -> vector<4x1044xf32>
    %cst = arith.constant 0.000000e+00 : f32
    %5 = vector.broadcast %cst : f32 to vector<4x1044xf32>
    %6 = tpu.concatenate %4, %5 in 0 : vector<4x1044xf32>, vector<4x1044xf32> -> vector<8x1044xf32>
    %7 = vector.extract_strided_slice %6 {offsets = [0, 0], sizes = [8, 1040], strides = [1, 1]} : vector<8x1044xf32> to vector<8x1040xf32>
    %8 = vector.extract_strided_slice %6 {offsets = [0, 1], sizes = [8, 1040], strides = [1, 1]} : vector<8x1044xf32> to vector<8x1040xf32>
    %9 = vector.extract_strided_slice %6 {offsets = [0, 2], sizes = [8, 1040], strides = [1, 1]} : vector<8x1044xf32> to vector<8x1040xf32>
    %10 = vector.extract_strided_slice %6 {offsets = [0, 3], sizes = [8, 1040], strides = [1, 1]} : vector<8x1044xf32> to vector<8x1040xf32>
    %11 = vector.extract_strided_slice %6 {offsets = [0, 4], sizes = [8, 1040], strides = [1, 1]} : vector<8x1044xf32> to vector<8x1040xf32>
    %12 = tpu.concatenate %7, %8, %9, %10, %11 in 0 : vector<8x1040xf32>, vector<8x1040xf32>, vector<8x1040xf32>, vector<8x1040xf32>, vector<8x1040xf32> -> vector<40x1040xf32>
    %c0_5 = arith.constant 0 : index
    %c0_6 = arith.constant 0 : index
    %c0_7 = arith.constant 0 : index
    %13 = vector.load %arg4[%c0_5, %c0_6, %c0_7] : memref<5x8x41xf32, #tpu.memory_space<vmem>>, vector<1x8x40xf32>
    %14 = vector.shape_cast %13 : vector<1x8x40xf32> to vector<8x40xf32>
    %c0_8 = arith.constant 0 : index
    %c0_9 = arith.constant 0 : index
    %c40 = arith.constant 40 : index
    %15 = vector.load %arg4[%c0_8, %c0_9, %c40] : memref<5x8x41xf32, #tpu.memory_space<vmem>>, vector<1x8x1xf32>
    %16 = vector.shape_cast %15 : vector<1x8x1xf32> to vector<8x1xf32>
    %cst_10 = arith.constant dense<0.000000e+00> : vector<8x1040xf32>
    %17 = tpu.matmul %14, %12, %cst_10 {dimension_numbers = #tpu.dot_dimension_numbers<[1], [0], [0], [1], [0, 0, 1, 1], [], []>} : vector<8x40xf32>, vector<40x1040xf32>, vector<8x1040xf32> -> vector<8x1040xf32>
    %18 = vector.broadcast %16 : vector<8x1xf32> to vector<8x1040xf32>
    %19 = arith.addf %17, %18 : vector<8x1040xf32>
    %cst_11 = arith.constant 0.000000e+00 : f32
    %20 = vector.broadcast %cst_11 : f32 to vector<8x1040xf32>
    %21 = arith.cmpf oge, %19, %20 : vector<8x1040xf32>
    %cst_12 = arith.constant 0.00999999977 : f32
    %22 = vector.broadcast %cst_12 : f32 to vector<8x1040xf32>
    %23 = arith.mulf %22, %19 : vector<8x1040xf32>
    %24 = arith.select %21, %19, %23 : vector<8x1040xi1>, vector<8x1040xf32>
    %25 = vector.extract_strided_slice %24 {offsets = [0, 0], sizes = [8, 1036], strides = [1, 1]} : vector<8x1040xf32> to vector<8x1036xf32>
    %26 = vector.extract_strided_slice %24 {offsets = [0, 1], sizes = [8, 1036], strides = [1, 1]} : vector<8x1040xf32> to vector<8x1036xf32>
    %27 = vector.extract_strided_slice %24 {offsets = [0, 2], sizes = [8, 1036], strides = [1, 1]} : vector<8x1040xf32> to vector<8x1036xf32>
    %28 = vector.extract_strided_slice %24 {offsets = [0, 3], sizes = [8, 1036], strides = [1, 1]} : vector<8x1040xf32> to vector<8x1036xf32>
    %29 = vector.extract_strided_slice %24 {offsets = [0, 4], sizes = [8, 1036], strides = [1, 1]} : vector<8x1040xf32> to vector<8x1036xf32>
    %30 = tpu.concatenate %25, %26, %27, %28, %29 in 0 : vector<8x1036xf32>, vector<8x1036xf32>, vector<8x1036xf32>, vector<8x1036xf32>, vector<8x1036xf32> -> vector<40x1036xf32>
    %c1 = arith.constant 1 : index
    %c0_13 = arith.constant 0 : index
    %c0_14 = arith.constant 0 : index
    %31 = vector.load %arg4[%c1, %c0_13, %c0_14] : memref<5x8x41xf32, #tpu.memory_space<vmem>>, vector<1x8x40xf32>
    %32 = vector.shape_cast %31 : vector<1x8x40xf32> to vector<8x40xf32>
    %c1_15 = arith.constant 1 : index
    %c0_16 = arith.constant 0 : index
    %c40_17 = arith.constant 40 : index
    %33 = vector.load %arg4[%c1_15, %c0_16, %c40_17] : memref<5x8x41xf32, #tpu.memory_space<vmem>>, vector<1x8x1xf32>
    %34 = vector.shape_cast %33 : vector<1x8x1xf32> to vector<8x1xf32>
    %cst_18 = arith.constant dense<0.000000e+00> : vector<8x1036xf32>
    %35 = tpu.matmul %32, %30, %cst_18 {dimension_numbers = #tpu.dot_dimension_numbers<[1], [0], [0], [1], [0, 0, 1, 1], [], []>} : vector<8x40xf32>, vector<40x1036xf32>, vector<8x1036xf32> -> vector<8x1036xf32>
    %36 = vector.broadcast %34 : vector<8x1xf32> to vector<8x1036xf32>
    %37 = arith.addf %35, %36 : vector<8x1036xf32>
    %cst_19 = arith.constant 0.000000e+00 : f32
    %38 = vector.broadcast %cst_19 : f32 to vector<8x1036xf32>
    %39 = arith.cmpf oge, %37, %38 : vector<8x1036xf32>
    %cst_20 = arith.constant 0.00999999977 : f32
    %40 = vector.broadcast %cst_20 : f32 to vector<8x1036xf32>
    %41 = arith.mulf %40, %37 : vector<8x1036xf32>
    %42 = arith.select %39, %37, %41 : vector<8x1036xi1>, vector<8x1036xf32>
    %43 = vector.extract_strided_slice %42 {offsets = [0, 0], sizes = [8, 1024], strides = [1, 1]} : vector<8x1036xf32> to vector<8x1024xf32>
    %c0_21 = arith.constant 0 : index
    %c0_22 = arith.constant 0 : index
    %c0_23 = arith.constant 0 : index
    %44 = vector.load %arg7[%c0_21, %c0_22, %c0_23] : memref<1x8x1024xf32, #tpu.memory_space<vmem>>, vector<1x8x1024xf32>
    %45 = vector.shape_cast %44 : vector<1x8x1024xf32> to vector<8x1024xf32>
    %46 = vector.shape_cast %43 : vector<8x1024xf32> to vector<1x8x1024xf32>
    tpu.vector_store %arg7[%c0_21, %c0_22, %c0_23], %46 {strides = array<i32>} : memref<1x8x1024xf32, #tpu.memory_space<vmem>>, vector<1x8x1024xf32>,
    %47 = vector.extract_strided_slice %42 {offsets = [0, 0], sizes = [8, 1032], strides = [1, 1]} : vector<8x1036xf32> to vector<8x1032xf32>
    %48 = vector.extract_strided_slice %42 {offsets = [0, 1], sizes = [8, 1032], strides = [1, 1]} : vector<8x1036xf32> to vector<8x1032xf32>
    %49 = vector.extract_strided_slice %42 {offsets = [0, 2], sizes = [8, 1032], strides = [1, 1]} : vector<8x1036xf32> to vector<8x1032xf32>
    %50 = vector.extract_strided_slice %42 {offsets = [0, 3], sizes = [8, 1032], strides = [1, 1]} : vector<8x1036xf32> to vector<8x1032xf32>
    %51 = vector.extract_strided_slice %42 {offsets = [0, 4], sizes = [8, 1032], strides = [1, 1]} : vector<8x1036xf32> to vector<8x1032xf32>
    %52 = tpu.concatenate %47, %48, %49, %50, %51 in 0 : vector<8x1032xf32>, vector<8x1032xf32>, vector<8x1032xf32>, vector<8x1032xf32>, vector<8x1032xf32> -> vector<40x1032xf32>
    %c2 = arith.constant 2 : index
    %c0_24 = arith.constant 0 : index
    %c0_25 = arith.constant 0 : index
    %53 = vector.load %arg4[%c2, %c0_24, %c0_25] : memref<5x8x41xf32, #tpu.memory_space<vmem>>, vector<1x8x40xf32>
    %54 = vector.shape_cast %53 : vector<1x8x40xf32> to vector<8x40xf32>
    %c2_26 = arith.constant 2 : index
    %c0_27 = arith.constant 0 : index
    %c40_28 = arith.constant 40 : index
    %55 = vector.load %arg4[%c2_26, %c0_27, %c40_28] : memref<5x8x41xf32, #tpu.memory_space<vmem>>, vector<1x8x1xf32>
    %56 = vector.shape_cast %55 : vector<1x8x1xf32> to vector<8x1xf32>
    %cst_29 = arith.constant dense<0.000000e+00> : vector<8x1032xf32>
    %57 = tpu.matmul %54, %52, %cst_29 {dimension_numbers = #tpu.dot_dimension_numbers<[1], [0], [0], [1], [0, 0, 1, 1], [], []>} : vector<8x40xf32>, vector<40x1032xf32>, vector<8x1032xf32> -> vector<8x1032xf32>
    %58 = vector.broadcast %56 : vector<8x1xf32> to vector<8x1032xf32>
    %59 = arith.addf %57, %58 : vector<8x1032xf32>
    %cst_30 = arith.constant 0.000000e+00 : f32
    %60 = vector.broadcast %cst_30 : f32 to vector<8x1032xf32>
    %61 = arith.cmpf oge, %59, %60 : vector<8x1032xf32>
    %cst_31 = arith.constant 0.00999999977 : f32
    %62 = vector.broadcast %cst_31 : f32 to vector<8x1032xf32>
    %63 = arith.mulf %62, %59 : vector<8x1032xf32>
    %64 = arith.select %61, %59, %63 : vector<8x1032xi1>, vector<8x1032xf32>
    %65 = vector.extract_strided_slice %64 {offsets = [0, 0], sizes = [8, 1028], strides = [1, 1]} : vector<8x1032xf32> to vector<8x1028xf32>
    %66 = vector.extract_strided_slice %64 {offsets = [0, 1], sizes = [8, 1028], strides = [1, 1]} : vector<8x1032xf32> to vector<8x1028xf32>
    %67 = vector.extract_strided_slice %64 {offsets = [0, 2], sizes = [8, 1028], strides = [1, 1]} : vector<8x1032xf32> to vector<8x1028xf32>
    %68 = vector.extract_strided_slice %64 {offsets = [0, 3], sizes = [8, 1028], strides = [1, 1]} : vector<8x1032xf32> to vector<8x1028xf32>
    %69 = vector.extract_strided_slice %64 {offsets = [0, 4], sizes = [8, 1028], strides = [1, 1]} : vector<8x1032xf32> to vector<8x1028xf32>
    %70 = tpu.concatenate %65, %66, %67, %68, %69 in 0 : vector<8x1028xf32>, vector<8x1028xf32>, vector<8x1028xf32>, vector<8x1028xf32>, vector<8x1028xf32> -> vector<40x1028xf32>
    %c3 = arith.constant 3 : index
    %c0_32 = arith.constant 0 : index
    %c0_33 = arith.constant 0 : index
    %71 = vector.load %arg4[%c3, %c0_32, %c0_33] : memref<5x8x41xf32, #tpu.memory_space<vmem>>, vector<1x8x40xf32>
    %72 = vector.shape_cast %71 : vector<1x8x40xf32> to vector<8x40xf32>
    %c3_34 = arith.constant 3 : index
    %c0_35 = arith.constant 0 : index
    %c40_36 = arith.constant 40 : index
    %73 = vector.load %arg4[%c3_34, %c0_35, %c40_36] : memref<5x8x41xf32, #tpu.memory_space<vmem>>, vector<1x8x1xf32>
    %74 = vector.shape_cast %73 : vector<1x8x1xf32> to vector<8x1xf32>
    %cst_37 = arith.constant dense<0.000000e+00> : vector<8x1028xf32>
    %75 = tpu.matmul %72, %70, %cst_37 {dimension_numbers = #tpu.dot_dimension_numbers<[1], [0], [0], [1], [0, 0, 1, 1], [], []>} : vector<8x40xf32>, vector<40x1028xf32>, vector<8x1028xf32> -> vector<8x1028xf32>
    %76 = vector.broadcast %74 : vector<8x1xf32> to vector<8x1028xf32>
    %77 = arith.addf %75, %76 : vector<8x1028xf32>
    %cst_38 = arith.constant 0.000000e+00 : f32
    %78 = vector.broadcast %cst_38 : f32 to vector<8x1028xf32>
    %79 = arith.cmpf oge, %77, %78 : vector<8x1028xf32>
    %cst_39 = arith.constant 0.00999999977 : f32
    %80 = vector.broadcast %cst_39 : f32 to vector<8x1028xf32>
    %81 = arith.mulf %80, %77 : vector<8x1028xf32>
    %82 = arith.select %79, %77, %81 : vector<8x1028xi1>, vector<8x1028xf32>
    %83 = vector.extract_strided_slice %82 {offsets = [0, 0], sizes = [8, 1024], strides = [1, 1]} : vector<8x1028xf32> to vector<8x1024xf32>
    %84 = vector.extract_strided_slice %82 {offsets = [0, 1], sizes = [8, 1024], strides = [1, 1]} : vector<8x1028xf32> to vector<8x1024xf32>
    %85 = vector.extract_strided_slice %82 {offsets = [0, 2], sizes = [8, 1024], strides = [1, 1]} : vector<8x1028xf32> to vector<8x1024xf32>
    %86 = vector.extract_strided_slice %82 {offsets = [0, 3], sizes = [8, 1024], strides = [1, 1]} : vector<8x1028xf32> to vector<8x1024xf32>
    %87 = vector.extract_strided_slice %82 {offsets = [0, 4], sizes = [8, 1024], strides = [1, 1]} : vector<8x1028xf32> to vector<8x1024xf32>
    %88 = tpu.concatenate %83, %84, %85, %86, %87 in 0 : vector<8x1024xf32>, vector<8x1024xf32>, vector<8x1024xf32>, vector<8x1024xf32>, vector<8x1024xf32> -> vector<40x1024xf32>
    %c4 = arith.constant 4 : index
    %c0_40 = arith.constant 0 : index
    %c0_41 = arith.constant 0 : index
    %89 = vector.load %arg4[%c4, %c0_40, %c0_41] : memref<5x8x41xf32, #tpu.memory_space<vmem>>, vector<1x8x40xf32>
    %90 = vector.shape_cast %89 : vector<1x8x40xf32> to vector<8x40xf32>
    %c4_42 = arith.constant 4 : index
    %c0_43 = arith.constant 0 : index
    %c40_44 = arith.constant 40 : index
    %91 = vector.load %arg4[%c4_42, %c0_43, %c40_44] : memref<5x8x41xf32, #tpu.memory_space<vmem>>, vector<1x8x1xf32>
    %92 = vector.shape_cast %91 : vector<1x8x1xf32> to vector<8x1xf32>
    %cst_45 = arith.constant dense<0.000000e+00> : vector<8x1024xf32>
    %93 = tpu.matmul %90, %88, %cst_45 {dimension_numbers = #tpu.dot_dimension_numbers<[1], [0], [0], [1], [0, 0, 1, 1], [], []>} : vector<8x40xf32>, vector<40x1024xf32>, vector<8x1024xf32> -> vector<8x1024xf32>
    %94 = vector.broadcast %92 : vector<8x1xf32> to vector<8x1024xf32>
    %95 = arith.addf %93, %94 : vector<8x1024xf32>
    %cst_46 = arith.constant 0.000000e+00 : f32
    %96 = vector.broadcast %cst_46 : f32 to vector<8x1024xf32>
    %97 = arith.cmpf oge, %95, %96 : vector<8x1024xf32>
    %cst_47 = arith.constant 0.00999999977 : f32
    %98 = vector.broadcast %cst_47 : f32 to vector<8x1024xf32>
    %99 = arith.mulf %98, %95 : vector<8x1024xf32>
    %100 = arith.select %97, %95, %99 : vector<8x1024xi1>, vector<8x1024xf32>
    %c0_48 = arith.constant 0 : index
    %c0_49 = arith.constant 0 : index
    %101 = vector.load %arg5[%c0_48, %c0_49] : memref<256x128xf32, #tpu.memory_space<vmem>>, vector<256x128xf32>
    %102 = vector.extract_strided_slice %100 {offsets = [0, 0], sizes = [8, 256], strides = [1, 1]} : vector<8x1024xf32> to vector<8x256xf32>
    %cst_50 = arith.constant dense<0.000000e+00> : vector<8x128xf32>
    %103 = tpu.matmul %102, %101, %cst_50 {dimension_numbers = #tpu.dot_dimension_numbers<[1], [0], [0], [1], [0, 0, 1, 1], [], []>} : vector<8x256xf32>, vector<256x128xf32>, vector<8x128xf32> -> vector<8x128xf32>
    %104 = vector.extract_strided_slice %100 {offsets = [0, 256], sizes = [8, 256], strides = [1, 1]} : vector<8x1024xf32> to vector<8x256xf32>
    %cst_51 = arith.constant dense<0.000000e+00> : vector<8x128xf32>
    %105 = tpu.matmul %104, %101, %cst_51 {dimension_numbers = #tpu.dot_dimension_numbers<[1], [0], [0], [1], [0, 0, 1, 1], [], []>} : vector<8x256xf32>, vector<256x128xf32>, vector<8x128xf32> -> vector<8x128xf32>
    %106 = vector.extract_strided_slice %100 {offsets = [0, 512], sizes = [8, 256], strides = [1, 1]} : vector<8x1024xf32> to vector<8x256xf32>
    %cst_52 = arith.constant dense<0.000000e+00> : vector<8x128xf32>
    %107 = tpu.matmul %106, %101, %cst_52 {dimension_numbers = #tpu.dot_dimension_numbers<[1], [0], [0], [1], [0, 0, 1, 1], [], []>} : vector<8x256xf32>, vector<256x128xf32>, vector<8x128xf32> -> vector<8x128xf32>
    %108 = vector.extract_strided_slice %100 {offsets = [0, 768], sizes = [8, 256], strides = [1, 1]} : vector<8x1024xf32> to vector<8x256xf32>
    %cst_53 = arith.constant dense<0.000000e+00> : vector<8x128xf32>
    %109 = tpu.matmul %108, %101, %cst_53 {dimension_numbers = #tpu.dot_dimension_numbers<[1], [0], [0], [1], [0, 0, 1, 1], [], []>} : vector<8x256xf32>, vector<256x128xf32>, vector<8x128xf32> -> vector<8x128xf32>
    %110 = tpu.concatenate %103, %105, %107, %109 in 1 : vector<8x128xf32>, vector<8x128xf32>, vector<8x128xf32>, vector<8x128xf32> -> vector<8x512xf32>
    %c0_54 = arith.constant 0 : index
    %c0_55 = arith.constant 0 : index
    %c0_56 = arith.constant 0 : index
    %111 = vector.load %arg6[%c0_54, %c0_55, %c0_56] : memref<1x8x512xf32, #tpu.memory_space<vmem>>, vector<1x8x512xf32>
    %112 = vector.shape_cast %111 : vector<1x8x512xf32> to vector<8x512xf32>
    %113 = vector.shape_cast %110 : vector<8x512xf32> to vector<1x8x512xf32>
    tpu.vector_store %arg6[%c0_54, %c0_55, %c0_56], %113 {strides = array<i32>} : memref<1x8x512xf32, #tpu.memory_space<vmem>>, vector<1x8x512xf32>,
    return
  }
  func.func @transform_0(%arg0: i32, %arg1: i32) -> (i32, i32, i32) {
    %c0_i32 = arith.constant 0 : i32
    %c0_i32_0 = arith.constant 0 : i32
    return %arg0, %c0_i32, %arg1 : i32, i32, i32
  }
  func.func @transform_1(%arg0: i32, %arg1: i32) -> (i32, i32, i32) {
    %c1_i32 = arith.constant 1 : i32
    %0 = arith.addi %arg1, %c1_i32 : i32
    %c8_i32 = arith.constant 8 : i32
    %1 = arith.muli %0, %c8_i32 : i32
    %c0_i32 = arith.constant 0 : i32
    %c0_i32_0 = arith.constant 0 : i32
    return %arg0, %c0_i32, %1 : i32, i32, i32
  }
  func.func @transform_2(%arg0: i32, %arg1: i32) -> (i32, i32, i32) {
    %c0_i32 = arith.constant 0 : i32
    %c0_i32_0 = arith.constant 0 : i32
    %c0_i32_1 = arith.constant 0 : i32
    %c0_i32_2 = arith.constant 0 : i32
    return %c0_i32, %c0_i32_0, %c0_i32_1 : i32, i32, i32
  }
  func.func @transform_3(%arg0: i32, %arg1: i32) -> (i32, i32) {
    %c0_i32 = arith.constant 0 : i32
    %c0_i32_0 = arith.constant 0 : i32
    %c0_i32_1 = arith.constant 0 : i32
    return %c0_i32, %c0_i32_0 : i32, i32
  }
  func.func @transform_4(%arg0: i32, %arg1: i32) -> (i32, i32, i32) {
    %c0_i32 = arith.constant 0 : i32
    %c0_i32_0 = arith.constant 0 : i32
    return %arg0, %c0_i32, %arg1 : i32, i32, i32
  }
  func.func @transform_5(%arg0: i32, %arg1: i32) -> (i32, i32, i32) {
    %c0_i32 = arith.constant 0 : i32
    %c0_i32_0 = arith.constant 0 : i32
    return %arg0, %c0_i32, %arg1 : i32, i32, i32
  }
}

</mosaic_0001>

<llo_original>
// kernel: tpu_custom_call.1
$region0: #{tpu_custom_call.1}
  #allocation0 [shape = 'u32[]', space=smem, size = 0x4, offset = 0x4, fixed_abs, tag = 'smem constant byte address 0x4 - core index']
  #allocation1 [shape = 'u32[144,128]{1,0:T(1,128)}', space=vmem, size = 0x12000, scoped, tag = 'internal scratch']
  %s0 = inlined_call_operand.hbm [shape: f32[2,4,3072], index: 0, kind: input, shape index: {}]
  %s1 = inlined_call_operand.hbm [shape: f32[2,4,3072], index: 1, kind: input, shape index: {}]
  %s2 = inlined_call_operand.hbm [shape: f32[5,8,41], index: 2, kind: input, shape index: {}]
  %s3 = inlined_call_operand.hbm [shape: f32[256,128], index: 3, kind: input, shape index: {}]
  %s4 = inlined_call_operand.hbm [shape: f32[2,8,1024], index: 4, kind: output, shape index: {0}]
  %s5 = inlined_call_operand.hbm [shape: f32[2,8,2048], index: 5, kind: output, shape index: {1}]
  %6 = xla_tuple %s4, %s5
  %s7 = sld [smem:[#allocation0]]
  $region73: #{tpu_custom_call.1} parent=0
    _
  %s9 = ssub.s32 1, %s7
  %s10 = scalar_select 0, %s9, %s7
  $region1: #{tpu_custom_call.1} parent=0
    #allocation2 [shape = 'u8[32768]{0}', space=vmem, size = 0x8000, scoped, tag = 'input window, operand 0']
    #allocation3 [shape = 's32[2]{0}', space=sflag, size = 0x8, scoped, tag = 'scoped memory for tpu_custom_call.1']
    #allocation4 [shape = 's32[2]{0}', space=sflag, size = 0x8, scoped, tag = 'scoped memory for tpu_custom_call.1']
    #allocation5 [shape = 'u8[4096]{0}', space=vmem, size = 0x1000, scoped, tag = 'input window, operand 1']
    #allocation6 [shape = 's32[2]{0}', space=sflag, size = 0x8, scoped, tag = 'scoped memory for tpu_custom_call.1']
    #allocation7 [shape = 'u8[20480]{0}', space=vmem, size = 0x5000, scoped, tag = 'input window, operand 2, single buffered']
    #allocation8 [shape = 'u8[131072]{0}', space=vmem, size = 0x20000, scoped, tag = 'input window, operand 3, single buffered']
    #allocation9 [shape = 's32[1]{0}', space=sflag, size = 0x4, scoped, tag = 'scoped memory for tpu_custom_call.1']
    #allocation10 [shape = 'u8[32768]{0}', space=vmem, size = 0x8000, scoped, tag = 'output window, operand 0']
    #allocation11 [shape = 'u8[65536]{0}', space=vmem, size = 0x10000, scoped, tag = 'output window, operand 1']
    #allocation12 [shape = 's32[2]{0}', space=sflag, size = 0x8, scoped, tag = 'scoped memory for tpu_custom_call.1']
    %11 = vsyncpa [#allocation3], 0
    %s12 = scalar_lea.sflag [#allocation3], 1
    %13 = vsyncpa %s12, 0
    %14 = vsyncpa [#allocation6], 0
    %s15 = scalar_lea.sflag [#allocation6], 1
    %16 = vsyncpa %s15, 0
    %17 = vsyncpa [#allocation9], 0
    %18 = vsyncpa [#allocation4], 0
    %s19 = scalar_lea.sflag [#allocation4], 1
    %20 = vsyncpa %s19, 0
    %21 = vsyncpa [#allocation12], 0
    %s22 = scalar_lea.sflag [#allocation12], 1
    %23 = vsyncpa %s22, 0
    loop: start=0, step=1, limit=6
    $region2: #{tpu_custom_call.1} parent=1 // loop_pre_header
      _
    $region3: #{tpu_custom_call.1} parent=1 // loop_header
      %s25 = sphi 0, %s29
      %p26 = scmp.ge.s32.totalorder %s25, 6
      %s32 = sphi 0, %s44
      %s33 = sphi 0, %s40
      %s34 = sphi 0, %s32
      %s35 = sphi 0, %s33
      %s36 = sphi 0, %s34
      %s37 = sphi 0, %s35
      %s49 = sphi 0, %s51
      %s52 = sphi 0, %s49
      %s53 = sphi 0, %s52
      %s69 = sphi 0, %s53
      %s81 = sphi 0, %s83
      %s84 = sphi 0, %s81
      %s85 = sphi 0, %s84
      %s101 = sphi 0, %s85
      %s105 = sphi 0, %s105
      %s107 = sphi 0, %s105
      %s108 = sphi 0, %s107
      %s122 = sphi 0, %s108
      %s126 = sphi 0, %s126
      %s128 = sphi 0, %s126
      %s129 = sphi 0, %s128
      %s143 = sphi 0, %s129
      %s151 = sphi 0, %s153
      %s154 = sphi 0, %s151
      %s155 = sphi 0, %s154
      %s171 = sphi 0, %s155
      %s179 = sphi 0, %s181
      %s182 = sphi 0, %s179
      %s183 = sphi 0, %s182
      %s199 = sphi 0, %s183
    $region4: #{tpu_custom_call.1} parent=1 // loop_header_branch
      %28 = sbr.rel (%p26) target = $region8
    $region5: #{tpu_custom_call.1} parent=1 // loop_body
      %s30 = ssub.s32 %s25, 1
      %s31 = ssub.s32 %s25, 2
      %s38 = sadd.s32 1, %s33
      %p39 = scmp.ge.s32.totalorder %s38, 2
      %s40 = scalar_select %p39, 0, %s38
      %s41 = sadd.s32 1, %s32
      %s42 = scalar_select %p39, %s41, %s32
      %p43 = scmp.ge.s32.totalorder %s42, 2
      %s44 = scalar_select %p43, 0, %s42
      %s45 = ssub.s32 %s32, %s44
      %s46 = ssub.s32 %s33, %s40
      %s47 = sor.u32 %s45, %s46
      %p48 = scmp.eq.s32.totalorder %s47, 0
      %s50 = sadd.s32 %s49, 1
      %s51 = scalar_select %p48, %s49, %s50
      %p54 = pneg %p48
      %p55 = scmp.eq.s32.totalorder %s25, 3
      %p56 = por %p54, %p55
      %p57 = scmp.ne.s32.totalorder %s49, %s52
      %p58 = scmp.eq.s32.totalorder %s25, 0
      %p59 = por %p57, %p58
      %p60 = scmp.ne.s32.totalorder %s49, %s52
      %p61 = scmp.eq.s32.totalorder %s30, 3
      %p62 = por %p60, %p61
      %p63 = scmp.ne.s32.totalorder %s52, %s53
      %p64 = scmp.eq.s32.totalorder %s30, 0
      %p65 = por %p63, %p64
      %p66 = scmp.ne.s32.totalorder %s52, %s53
      %p67 = scmp.eq.s32.totalorder %s31, 3
      %p68 = por %p66, %p67
      %p70 = scmp.ne.s32.totalorder %s53, %s69
      %p71 = scmp.eq.s32.totalorder %s31, 0
      %p72 = por %p70, %p71
      %s73 = sadd.s32 %s33, 1
      %s74 = smul.u32 %s73, 8
      %s75 = sadd.s32 %s40, 1
      %s76 = smul.u32 %s75, 8
      %s77 = ssub.s32 %s32, %s44
      %s78 = ssub.s32 %s74, %s76
      %s79 = sor.u32 %s77, %s78
      %p80 = scmp.eq.s32.totalorder %s79, 0
      %s82 = sadd.s32 %s81, 1
      %s83 = scalar_select %p80, %s81, %s82
      %p86 = pneg %p80
      %p87 = scmp.eq.s32.totalorder %s25, 3
      %p88 = por %p86, %p87
      %p89 = scmp.ne.s32.totalorder %s81, %s84
      %p90 = scmp.eq.s32.totalorder %s25, 0
      %p91 = por %p89, %p90
      %p92 = scmp.ne.s32.totalorder %s81, %s84
      %p93 = scmp.eq.s32.totalorder %s30, 3
      %p94 = por %p92, %p93
      %p95 = scmp.ne.s32.totalorder %s84, %s85
      %p96 = scmp.eq.s32.totalorder %s30, 0
      %p97 = por %p95, %p96
      %p98 = scmp.ne.s32.totalorder %s84, %s85
      %p99 = scmp.eq.s32.totalorder %s31, 3
      %p100 = por %p98, %p99
      %p102 = scmp.ne.s32.totalorder %s85, %s101
      %p103 = scmp.eq.s32.totalorder %s31, 0
      %p104 = por %p102, %p103
      %s106 = sadd.s32 %s105, 1
      %p109 = scmp.eq.s32.totalorder %s25, 3
      %p110 = scmp.ne.s32.totalorder %s105, %s107
      %p111 = scmp.eq.s32.totalorder %s25, 0
      %p112 = por %p110, %p111
      %p113 = scmp.ne.s32.totalorder %s105, %s107
      %p114 = scmp.eq.s32.totalorder %s30, 3
      %p115 = por %p113, %p114
      %p116 = scmp.ne.s32.totalorder %s107, %s108
      %p117 = scmp.eq.s32.totalorder %s30, 0
      %p118 = por %p116, %p117
      %p119 = scmp.ne.s32.totalorder %s107, %s108
      %p120 = scmp.eq.s32.totalorder %s31, 3
      %p121 = por %p119, %p120
      %p123 = scmp.ne.s32.totalorder %s108, %s122
      %p124 = scmp.eq.s32.totalorder %s31, 0
      %p125 = por %p123, %p124
      %s127 = sadd.s32 %s126, 1
      %p130 = scmp.eq.s32.totalorder %s25, 3
      %p131 = scmp.ne.s32.totalorder %s126, %s128
      %p132 = scmp.eq.s32.totalorder %s25, 0
      %p133 = por %p131, %p132
      %p134 = scmp.ne.s32.totalorder %s126, %s128
      %p135 = scmp.eq.s32.totalorder %s30, 3
      %p136 = por %p134, %p135
      %p137 = scmp.ne.s32.totalorder %s128, %s129
      %p138 = scmp.eq.s32.totalorder %s30, 0
      %p139 = por %p137, %p138
      %p140 = scmp.ne.s32.totalorder %s128, %s129
      %p141 = scmp.eq.s32.totalorder %s31, 3
      %p142 = por %p140, %p141
      %p144 = scmp.ne.s32.totalorder %s129, %s143
      %p145 = scmp.eq.s32.totalorder %s31, 0
      %p146 = por %p144, %p145
      %s147 = ssub.s32 %s32, %s44
      %s148 = ssub.s32 %s33, %s40
      %s149 = sor.u32 %s147, %s148
      %p150 = scmp.eq.s32.totalorder %s149, 0
      %s152 = sadd.s32 %s151, 1
      %s153 = scalar_select %p150, %s151, %s152
      %p156 = pneg %p150
      %p157 = scmp.eq.s32.totalorder %s25, 3
      %p158 = por %p156, %p157
      %p159 = scmp.ne.s32.totalorder %s151, %s154
      %p160 = scmp.eq.s32.totalorder %s25, 0
      %p161 = por %p159, %p160
      %p162 = scmp.ne.s32.totalorder %s151, %s154
      %p163 = scmp.eq.s32.totalorder %s30, 3
      %p164 = por %p162, %p163
      %p165 = scmp.ne.s32.totalorder %s154, %s155
      %p166 = scmp.eq.s32.totalorder %s30, 0
      %p167 = por %p165, %p166
      %p168 = scmp.ne.s32.totalorder %s154, %s155
      %p169 = scmp.eq.s32.totalorder %s31, 3
      %p170 = por %p168, %p169
      %p172 = scmp.ne.s32.totalorder %s155, %s171
      %p173 = scmp.eq.s32.totalorder %s31, 0
      %p174 = por %p172, %p173
      %s175 = ssub.s32 %s32, %s44
      %s176 = ssub.s32 %s33, %s40
      %s177 = sor.u32 %s175, %s176
      %p178 = scmp.eq.s32.totalorder %s177, 0
      %s180 = sadd.s32 %s179, 1
      %s181 = scalar_select %p178, %s179, %s180
      %p184 = pneg %p178
      %p185 = scmp.eq.s32.totalorder %s25, 3
      %p186 = por %p184, %p185
      %p187 = scmp.ne.s32.totalorder %s179, %s182
      %p188 = scmp.eq.s32.totalorder %s25, 0
      %p189 = por %p187, %p188
      %p190 = scmp.ne.s32.totalorder %s179, %s182
      %p191 = scmp.eq.s32.totalorder %s30, 3
      %p192 = por %p190, %p191
      %p193 = scmp.ne.s32.totalorder %s182, %s183
      %p194 = scmp.eq.s32.totalorder %s30, 0
      %p195 = por %p193, %p194
      %p196 = scmp.ne.s32.totalorder %s182, %s183
      %p197 = scmp.eq.s32.totalorder %s31, 3
      %p198 = por %p196, %p197
      %p200 = scmp.ne.s32.totalorder %s183, %s199
      %p201 = scmp.eq.s32.totalorder %s31, 0
      %p202 = por %p200, %p201
      %p203 = scmp.le.s32.totalorder 1, %s25
      %p204 = scmp.lt.s32.totalorder %s25, 5
      %p205 = pnand %p203, %p204
      %p206 = pneg %p205
      // Predicated region
      $region9: #{tpu_custom_call.1} parent=5 // pred_check
        _
      $region10: #{tpu_custom_call.1} parent=5 // pred_check_branch
        %208 = sbr.rel (%p205) target = $region12
      $region11: #{tpu_custom_call.1} parent=5 // pred_region
        %s209 = ssub.s32 %s25, 1
        // Predicated region
        $region13: #{tpu_custom_call.1} parent=11 // pred_check
          %p210 = pneg %p118
        $region14: #{tpu_custom_call.1} parent=11 // pred_check_branch
          %212 = sbr.rel (%p210) target = $region16
        $region15: #{tpu_custom_call.1} parent=11 // pred_region
          %s214 = ssub.s32 640, 640
          %215 = vsyncadd [#allocation6], %s214
          %s216 = sshll.u32 [#allocation7], 4
          %s217 = int_to_ptr.vmem [resolvable:$true] %s216
          %222 = dma.hbm_to_vmem [thread:$0]  %s2, 640, %s217, [#allocation6], 128, 128, 8
        $region16: #{tpu_custom_call.1} parent=11 // pred_fallthru
          _
        // Predicated region
        $region17: #{tpu_custom_call.1} parent=11 // pred_check
          %p223 = pneg %p139
        $region18: #{tpu_custom_call.1} parent=11 // pred_check_branch
          %225 = sbr.rel (%p223) target = $region20
        $region19: #{tpu_custom_call.1} parent=11 // pred_region
          %s227 = ssub.s32 4096, 4096
          %228 = vsyncadd [#allocation9], %s227
          %s229 = sshll.u32 [#allocation8], 4
          %s230 = int_to_ptr.vmem [resolvable:$true] %s229
          %235 = dma.hbm_to_vmem [thread:$0]  %s3, 4096, %s230, [#allocation9], 128, 128, 8
        $region20: #{tpu_custom_call.1} parent=11 // pred_fallthru
          _
      $region12: #{tpu_custom_call.1} parent=5 // pred_fallthru
        _
      %p236 = scmp.lt.s32.totalorder %s25, 4
      // Predicated region
      $region21: #{tpu_custom_call.1} parent=5 // pred_check
        %p237 = pneg %p236
      $region22: #{tpu_custom_call.1} parent=5 // pred_check_branch
        %239 = sbr.rel (%p237) target = $region24
      $region23: #{tpu_custom_call.1} parent=5 // pred_region
        // Predicated region
        $region25: #{tpu_custom_call.1} parent=23 // pred_check
          %p240 = pneg %p59
        $region26: #{tpu_custom_call.1} parent=23 // pred_check_branch
          %242 = sbr.rel (%p240) target = $region28
        $region27: #{tpu_custom_call.1} parent=23 // pred_region
          %s243 = sand.u32 %s49, 1
          %s244 = scalar_lea.sflag [#allocation3], %s243
          %s245 = sand.u32 %s49, 1
          %s246 = smul.addr %s245, 32
          %s247 = scalar_lea.vmem [#allocation2], %s246
          %s248 = smul.u32 8, %s33
          %s250 = ssub.s32 512, 512
          %251 = vsyncadd %s244, %s250
          %s252 = smul.addr %s32, 24
          %s253 = sadd.s32 %s248, %s252
          %s254 = smul.addr %s253, 64
          %s255 = scalar_lea.hbm %s0, %s254
          %s257 = sshll.u32 %s247, 4
          %s258 = int_to_ptr.vmem [resolvable:$true] %s257
          %260 = dma.hbm_to_vmem [thread:$0]  %s255, 512, %s258, %s244
        $region28: #{tpu_custom_call.1} parent=23 // pred_fallthru
          _
        // Predicated region
        $region29: #{tpu_custom_call.1} parent=23 // pred_check
          %p261 = pneg %p91
        $region30: #{tpu_custom_call.1} parent=23 // pred_check_branch
          %263 = sbr.rel (%p261) target = $region32
        $region31: #{tpu_custom_call.1} parent=23 // pred_region
          %s264 = sand.u32 %s25, 1
          %s265 = scalar_lea.sflag [#allocation6], %s264
          %s266 = sand.u32 %s81, 1
          %s267 = smul.addr %s266, 4
          %s268 = scalar_lea.vmem [#allocation5], %s267
          %s269 = sadd.s32 %s33, 1
          %s270 = smul.u32 %s269, 8
          %s272 = ssub.s32 64, 64
          %273 = vsyncadd %s265, %s272
          %s274 = smul.addr %s32, 24
          %s275 = sadd.s32 %s270, %s274
          %s276 = smul.addr %s275, 64
          %s277 = scalar_lea.hbm %s1, %s276
          %s279 = sshll.u32 %s268, 4
          %s280 = int_to_ptr.vmem [resolvable:$true] %s279
          %282 = dma.hbm_to_vmem [thread:$0]  %s277, 64, %s280, %s265
        $region32: #{tpu_custom_call.1} parent=23 // pred_fallthru
          _
      $region24: #{tpu_custom_call.1} parent=5 // pred_fallthru
        _
      %p283 = scmp.le.s32.totalorder 1, %s25
      %p284 = scmp.lt.s32.totalorder %s25, 5
      %p285 = pnand %p283, %p284
      %p286 = pneg %p285
      // Predicated region
      $region33: #{tpu_custom_call.1} parent=5 // pred_check
        _
      $region34: #{tpu_custom_call.1} parent=5 // pred_check_branch
        %288 = sbr.rel (%p285) target = $region36
      $region35: #{tpu_custom_call.1} parent=5 // pred_region
        %s289 = ssub.s32 %s25, 1
        %s290 = sand.u32 %s52, 1
        %s291 = scalar_lea.sflag [#allocation3], %s290
        %s292 = sand.u32 %s52, 1
        %s293 = smul.addr %s292, 32
        %s294 = scalar_lea.vmem [#allocation2], %s293
        // Predicated region
        $region37: #{tpu_custom_call.1} parent=35 // pred_check
          %p295 = pneg %p65
        $region38: #{tpu_custom_call.1} parent=35 // pred_check_branch
          %297 = sbr.rel (%p295) target = $region40
        $region39: #{tpu_custom_call.1} parent=35 // pred_region
          %298 = dma.done %s291, 512
        $region40: #{tpu_custom_call.1} parent=35 // pred_fallthru
          _
        %s299 = sand.u32 %s30, 1
        %s300 = scalar_lea.sflag [#allocation6], %s299
        %s301 = sand.u32 %s84, 1
        %s302 = smul.addr %s301, 4
        %s303 = scalar_lea.vmem [#allocation5], %s302
        // Predicated region
        $region41: #{tpu_custom_call.1} parent=35 // pred_check
          %p304 = pneg %p97
        $region42: #{tpu_custom_call.1} parent=35 // pred_check_branch
          %306 = sbr.rel (%p304) target = $region44
        $region43: #{tpu_custom_call.1} parent=35 // pred_region
          %307 = dma.done %s300, 64
        $region44: #{tpu_custom_call.1} parent=35 // pred_fallthru
          _
        // Predicated region
        $region45: #{tpu_custom_call.1} parent=35 // pred_check
          %p308 = pneg %p118
        $region46: #{tpu_custom_call.1} parent=35 // pred_check_branch
          %310 = sbr.rel (%p308) target = $region48
        $region47: #{tpu_custom_call.1} parent=35 // pred_region
          %311 = dma.done [#allocation6], 640
        $region48: #{tpu_custom_call.1} parent=35 // pred_fallthru
          _
        // Predicated region
        $region49: #{tpu_custom_call.1} parent=35 // pred_check
          %p312 = pneg %p139
        $region50: #{tpu_custom_call.1} parent=35 // pred_check_branch
          %314 = sbr.rel (%p312) target = $region52
        $region51: #{tpu_custom_call.1} parent=35 // pred_region
          %315 = dma.done [#allocation9], 4096
        $region52: #{tpu_custom_call.1} parent=35 // pred_fallthru
          _
        %s316 = sand.u32 %s52, 1
        %s317 = scalar_lea.sflag [#allocation3], %s316
        %s318 = sand.u32 %s52, 1
        %s319 = smul.addr %s318, 32
        %s320 = scalar_lea.vmem [#allocation2], %s319
        %p321 = pneg %p65
        %p322 = pneg %p62
        %s323 = sand.u32 %s30, 1
        %s324 = scalar_lea.sflag [#allocation6], %s323
        %s325 = sand.u32 %s84, 1
        %s326 = smul.addr %s325, 4
        %s327 = scalar_lea.vmem [#allocation5], %s326
        %p328 = pneg %p97
        %p329 = pneg %p94
        %p330 = pneg %p118
        %p331 = pneg %p115
        %p332 = pneg %p139
        %p333 = pneg %p136
        %p334 = pneg %p167
        %p335 = pneg %p164
        %s336 = sand.u32 %s154, 1
        %s337 = scalar_lea.sflag [#allocation4], %s336
        %s338 = sand.u32 %s154, 1
        %s339 = smul.addr %s338, 32
        %s340 = scalar_lea.vmem [#allocation10], %s339
        %p341 = pneg %p195
        %p342 = pneg %p192
        %s343 = sand.u32 %s182, 1
        %s344 = scalar_lea.sflag [#allocation12], %s343
        %s345 = sand.u32 %s182, 1
        %s346 = smul.addr %s345, 64
        %s347 = scalar_lea.vmem [#allocation11], %s346
        %s348 = smul.u32 8, %s35
        %s349 = sadd.s32 %s35, 1
        %s350 = smul.u32 %s349, 8
        %s351 = smul.u32 4, %s35
        %s352 = smul.u32 8, %s35
        %v353 = vld [vmem:[%s294] sm:$0xff]
        %v354 = vld [vmem:[%s294 + $0x8] sm:$0xff]
        %v355 = vld [vmem:[%s294 + $0x10] sm:$0xff]
        %v356 = vld [vmem:[%s294 + $0x18] sm:$0xff]
        %v357 = vld [vmem:[%s303] sm:$0xf]
        %v362 = vcombine.high %v353, %v353
        %v363 = vcombine.high %v354, %v354
        %v364 = vcombine.high %v355, %v355
        %v365 = vcombine.high %v356, %v356
        %vm370 = vcmask 1043456
        %v371 = vsel %vm370, %v353, 0.0
        %v372 = vsel %vm370, %v362, 0.0
        %v373 = vsel %vm370, %v354, 0.0
        %v374 = vsel %vm370, %v363, 0.0
        %v375 = vsel %vm370, %v355, 0.0
        %v376 = vsel %vm370, %v364, 0.0
        %v377 = vsel %vm370, %v356, 0.0
        %v378 = vsel %vm370, %v365, 0.0
        %v379 = vsel %vm370, %v357, 0.0
        %389 = vrot.lane.b32.xlu0 %v371, 127
        %v390 = vpop.permute.xlu0 %389
        %391 = vrot.lane.b32.xlu0 %v372, 127
        %v392 = vpop.permute.xlu0 %391
        %393 = vrot.lane.b32.xlu0 %v373, 127
        %v394 = vpop.permute.xlu0 %393
        %395 = vrot.lane.b32.xlu0 %v374, 127
        %v396 = vpop.permute.xlu0 %395
        %397 = vrot.lane.b32.xlu0 %v375, 127
        %v398 = vpop.permute.xlu0 %397
        %399 = vrot.lane.b32.xlu0 %v376, 127
        %v400 = vpop.permute.xlu0 %399
        %401 = vrot.lane.b32.xlu0 %v377, 127
        %v402 = vpop.permute.xlu0 %401
        %403 = vrot.lane.b32.xlu0 %v378, 127
        %v404 = vpop.permute.xlu0 %403
        %405 = vrot.lane.b32.xlu0 %v379, 127
        %v406 = vpop.permute.xlu0 %405
        %vm407 = vcmask 1039360
        %v408 = vsel %vm407, %v390, %v392
        %v409 = vsel %vm407, %v392, %v394
        %v410 = vsel %vm407, %v394, %v396
        %v411 = vsel %vm407, %v396, %v398
        %v412 = vsel %vm407, %v398, %v400
        %v413 = vsel %vm407, %v400, %v402
        %v414 = vsel %vm407, %v402, %v404
        %v415 = vsel %vm407, %v404, %v406
        %425 = vrot.lane.b32.xlu0 %v371, 126
        %v426 = vpop.permute.xlu0 %425
        %427 = vrot.lane.b32.xlu0 %v372, 126
        %v428 = vpop.permute.xlu0 %427
        %429 = vrot.lane.b32.xlu0 %v373, 126
        %v430 = vpop.permute.xlu0 %429
        %431 = vrot.lane.b32.xlu0 %v374, 126
        %v432 = vpop.permute.xlu0 %431
        %433 = vrot.lane.b32.xlu0 %v375, 126
        %v434 = vpop.permute.xlu0 %433
        %435 = vrot.lane.b32.xlu0 %v376, 126
        %v436 = vpop.permute.xlu0 %435
        %437 = vrot.lane.b32.xlu0 %v377, 126
        %v438 = vpop.permute.xlu0 %437
        %439 = vrot.lane.b32.xlu0 %v378, 126
        %v440 = vpop.permute.xlu0 %439
        %441 = vrot.lane.b32.xlu0 %v379, 126
        %v442 = vpop.permute.xlu0 %441
        %vm443 = vcmask 1031168
        %v444 = vsel %vm443, %v426, %v428
        %v445 = vsel %vm443, %v428, %v430
        %v446 = vsel %vm443, %v430, %v432
        %v447 = vsel %vm443, %v432, %v434
        %v448 = vsel %vm443, %v434, %v436
        %v449 = vsel %vm443, %v436, %v438
        %v450 = vsel %vm443, %v438, %v440
        %v451 = vsel %vm443, %v440, %v442
        %461 = vrot.lane.b32.xlu0 %v371, 125
        %v462 = vpop.permute.xlu0 %461
        %463 = vrot.lane.b32.xlu0 %v372, 125
        %v464 = vpop.permute.xlu0 %463
        %465 = vrot.lane.b32.xlu0 %v373, 125
        %v466 = vpop.permute.xlu0 %465
        %467 = vrot.lane.b32.xlu0 %v374, 125
        %v468 = vpop.permute.xlu0 %467
        %469 = vrot.lane.b32.xlu0 %v375, 125
        %v470 = vpop.permute.xlu0 %469
        %471 = vrot.lane.b32.xlu0 %v376, 125
        %v472 = vpop.permute.xlu0 %471
        %473 = vrot.lane.b32.xlu0 %v377, 125
        %v474 = vpop.permute.xlu0 %473
        %475 = vrot.lane.b32.xlu0 %v378, 125
        %v476 = vpop.permute.xlu0 %475
        %477 = vrot.lane.b32.xlu0 %v379, 125
        %v478 = vpop.permute.xlu0 %477
        %vm479 = vcmask 1022976
        %v480 = vsel %vm479, %v462, %v464
        %v481 = vsel %vm479, %v464, %v466
        %v482 = vsel %vm479, %v466, %v468
        %v483 = vsel %vm479, %v468, %v470
        %v484 = vsel %vm479, %v470, %v472
        %v485 = vsel %vm479, %v472, %v474
        %v486 = vsel %vm479, %v474, %v476
        %v487 = vsel %vm479, %v476, %v478
        %497 = vrot.lane.b32.xlu0 %v371, 124
        %v498 = vpop.permute.xlu0 %497
        %499 = vrot.lane.b32.xlu0 %v372, 124
        %v500 = vpop.permute.xlu0 %499
        %501 = vrot.lane.b32.xlu0 %v373, 124
        %v502 = vpop.permute.xlu0 %501
        %503 = vrot.lane.b32.xlu0 %v374, 124
        %v504 = vpop.permute.xlu0 %503
        %505 = vrot.lane.b32.xlu0 %v375, 124
        %v506 = vpop.permute.xlu0 %505
        %507 = vrot.lane.b32.xlu0 %v376, 124
        %v508 = vpop.permute.xlu0 %507
        %509 = vrot.lane.b32.xlu0 %v377, 124
        %v510 = vpop.permute.xlu0 %509
        %511 = vrot.lane.b32.xlu0 %v378, 124
        %v512 = vpop.permute.xlu0 %511
        %513 = vrot.lane.b32.xlu0 %v379, 124
        %v514 = vpop.permute.xlu0 %513
        %vm515 = vcmask 1014784
        %v516 = vsel %vm515, %v498, %v500
        %v517 = vsel %vm515, %v500, %v502
        %v518 = vsel %vm515, %v502, %v504
        %v519 = vsel %vm515, %v504, %v506
        %v520 = vsel %vm515, %v506, %v508
        %v521 = vsel %vm515, %v508, %v510
        %v522 = vsel %vm515, %v510, %v512
        %v523 = vsel %vm515, %v512, %v514
        %v533 = vld [vmem:[#allocation7] sm:$0xff]
        %535 = vset.pattern.permute.xlu0 40
        %536 = vperm.xlu0 %535, %v533
        %v537 = vpop.permute.xlu0 %536
        %vm539 = vcmask 326656
        %v540 = vsel %vm539, %v533, 0
        %542 = vmatprep.subr.mxu0 %v372
        %543 = vmatpush1.msra.mxu0 %v371
        %544 = vmatprep.subr.mxu0 %v409
        %545 = vmatpush1.msra.mxu0 %v408
        %546 = vmatprep.subr.mxu0 %v445
        %547 = vmatpush1.msra.mxu0 %v444
        %548 = vmatprep.subr.mxu0 %v481
        %549 = vmatpush1.msra.mxu0 %v480
        %550 = vmatprep.subr.mxu0 %v517
        %551 = vmatpush1.msra.mxu0 %v516
        %552 = vmatprep.subr.mxu0 0.0
        %553 = vmatpush1.msra.mxu0 0.0
        %554 = vmatprep.subr.mxu0 0.0
        %555 = vmatpush1.msra.mxu0 0.0
        %556 = vmatprep.subr.mxu0 0.0
        %557 = vmatpush1.msra.mxu0 0.0
        %558 = vmatprep.subr.mxu0 0.0
        %559 = vmatpush1.msra.mxu0 0.0
        %560 = vmatprep.subr.mxu0 0.0
        %561 = vmatpush1.msra.mxu0 0.0
        %562 = vmatprep.subr.mxu0 0.0
        %563 = vmatpush1.msra.mxu0 0.0
        %564 = vmatprep.subr.mxu0 0.0
        %565 = vmatpush1.msra.mxu0 0.0
        %566 = vmatprep.subr.mxu0 0.0
        %567 = vmatpush1.msra.mxu0 0.0
        %568 = vmatprep.subr.mxu0 0.0
        %569 = vmatpush1.msra.mxu0 0.0
        %570 = vmatprep.subr.mxu0 0.0
        %571 = vmatpush1.msra.mxu0 0.0
        %572 = vmatprep.subr.mxu0 0.0
        %573 = vmatpush1.msra.mxu0 0.0
        %574 = vmatprep.subr.mxu0 0.0
        %575 = vmatpush1.msra.mxu0 0.0
        %576 = vmatprep.subr.mxu0 0.0
        %577 = vmatpush1.msra.mxu0 0.0
        %578 = vmatprep.subr.mxu0 0.0
        %579 = vmatpush1.msra.mxu0 0.0
        %580 = vmatprep.subr.mxu0 0.0
        %581 = vmatpush1.msra.mxu0 0.0
        %582 = vmatprep.subr.mxu0 0.0
        %583 = vmatpush1.msra.mxu0 0.0
        %584 = vmatprep.subr.mxu0 0.0
        %585 = vmatpush1.msra.mxu0 0.0
        %586 = vmatprep.subr.mxu0 0.0
        %587 = vmatpush1.msra.mxu0 0.0
        %588 = vmatprep.subr.mxu0 0.0
        %589 = vmatpush1.msra.mxu0 0.0
        %590 = vmatprep.subr.mxu0 0.0
        %591 = vmatpush1.msra.mxu0 0.0
        %592 = vmatprep.subr.mxu0 0.0
        %593 = vmatpush1.msra.mxu0 0.0
        %594 = vmatprep.subr.mxu0 0.0
        %595 = vmatpush1.msra.mxu0 0.0
        %596 = vmatprep.subr.mxu0 0.0
        %597 = vmatpush1.msra.mxu0 0.0
        %598 = vmatprep.subr.mxu0 0.0
        %599 = vmatpush1.msra.mxu0 0.0
        %600 = vmatprep.subr.mxu0 0.0
        %601 = vmatpush1.msra.mxu0 0.0
        %602 = vmatprep.subr.mxu0 0.0
        %603 = vmatpush1.msra.mxu0 0.0
        %604 = vmatprep.subr.mxu0 0.0
        %605 = vmatpush1.msra.mxu0 0.0
        %606 = vmatprep.mubr.f32.mxu0 0.0
        %607 = vmatmul.mubr.f32.gmra.mrb[0].mxu0 %v540
        %v608 = vpop.f32.mrb[0].mxu0
        %v609 = vadd.f32 %v537, %v608
        %v610 = vpop.f32.mrb[0].mxu0
        %v611 = vadd.f32 %v537, %v610
        %612 = vdwg.mxu0
        %613 = vmatprep.subr.mxu0 %v374
        %614 = vmatpush1.msra.mxu0 %v373
        %615 = vmatprep.subr.mxu0 %v411
        %616 = vmatpush1.msra.mxu0 %v410
        %617 = vmatprep.subr.mxu0 %v447
        %618 = vmatpush1.msra.mxu0 %v446
        %619 = vmatprep.subr.mxu0 %v483
        %620 = vmatpush1.msra.mxu0 %v482
        %621 = vmatprep.subr.mxu0 %v519
        %622 = vmatpush1.msra.mxu0 %v518
        %623 = vmatprep.subr.mxu0 0.0
        %624 = vmatpush1.msra.mxu0 0.0
        %625 = vmatprep.subr.mxu0 0.0
        %626 = vmatpush1.msra.mxu0 0.0
        %627 = vmatprep.subr.mxu0 0.0
        %628 = vmatpush1.msra.mxu0 0.0
        %629 = vmatprep.subr.mxu0 0.0
        %630 = vmatpush1.msra.mxu0 0.0
        %631 = vmatprep.subr.mxu0 0.0
        %632 = vmatpush1.msra.mxu0 0.0
        %633 = vmatprep.subr.mxu0 0.0
        %634 = vmatpush1.msra.mxu0 0.0
        %635 = vmatprep.subr.mxu0 0.0
        %636 = vmatpush1.msra.mxu0 0.0
        %637 = vmatprep.subr.mxu0 0.0
        %638 = vmatpush1.msra.mxu0 0.0
        %639 = vmatprep.subr.mxu0 0.0
        %640 = vmatpush1.msra.mxu0 0.0
        %641 = vmatprep.subr.mxu0 0.0
        %642 = vmatpush1.msra.mxu0 0.0
        %643 = vmatprep.subr.mxu0 0.0
        %644 = vmatpush1.msra.mxu0 0.0
        %645 = vmatprep.subr.mxu0 0.0
        %646 = vmatpush1.msra.mxu0 0.0
        %647 = vmatprep.subr.mxu0 0.0
        %648 = vmatpush1.msra.mxu0 0.0
        %649 = vmatprep.subr.mxu0 0.0
        %650 = vmatpush1.msra.mxu0 0.0
        %651 = vmatprep.subr.mxu0 0.0
        %652 = vmatpush1.msra.mxu0 0.0
        %653 = vmatprep.subr.mxu0 0.0
        %654 = vmatpush1.msra.mxu0 0.0
        %655 = vmatprep.subr.mxu0 0.0
        %656 = vmatpush1.msra.mxu0 0.0
        %657 = vmatprep.subr.mxu0 0.0
        %658 = vmatpush1.msra.mxu0 0.0
        %659 = vmatprep.subr.mxu0 0.0
        %660 = vmatpush1.msra.mxu0 0.0
        %661 = vmatprep.subr.mxu0 0.0
        %662 = vmatpush1.msra.mxu0 0.0
        %663 = vmatprep.subr.mxu0 0.0
        %664 = vmatpush1.msra.mxu0 0.0
        %665 = vmatprep.subr.mxu0 0.0
        %666 = vmatpush1.msra.mxu0 0.0
        %667 = vmatprep.subr.mxu0 0.0
        %668 = vmatpush1.msra.mxu0 0.0
        %669 = vmatprep.subr.mxu0 0.0
        %670 = vmatpush1.msra.mxu0 0.0
        %671 = vmatprep.subr.mxu0 0.0
        %672 = vmatpush1.msra.mxu0 0.0
        %673 = vmatprep.subr.mxu0 0.0
        %674 = vmatpush1.msra.mxu0 0.0
        %675 = vmatprep.subr.mxu0 0.0
        %676 = vmatpush1.msra.mxu0 0.0
        %677 = vmatprep.mubr.f32.mxu0 0.0
        %678 = vmatmul.mubr.f32.gmra.mrb[0].mxu0 %v540
        %v679 = vpop.f32.mrb[0].mxu0
        %v680 = vadd.f32 %v537, %v679
        %v681 = vpop.f32.mrb[0].mxu0
        %v682 = vadd.f32 %v537, %v681
        %683 = vdwg.mxu0
        %684 = vmatprep.subr.mxu0 %v376
        %685 = vmatpush1.msra.mxu0 %v375
        %686 = vmatprep.subr.mxu0 %v413
        %687 = vmatpush1.msra.mxu0 %v412
        %688 = vmatprep.subr.mxu0 %v449
        %689 = vmatpush1.msra.mxu0 %v448
        %690 = vmatprep.subr.mxu0 %v485
        %691 = vmatpush1.msra.mxu0 %v484
        %692 = vmatprep.subr.mxu0 %v521
        %693 = vmatpush1.msra.mxu0 %v520
        %694 = vmatprep.subr.mxu0 0.0
        %695 = vmatpush1.msra.mxu0 0.0
        %696 = vmatprep.subr.mxu0 0.0
        %697 = vmatpush1.msra.mxu0 0.0
        %698 = vmatprep.subr.mxu0 0.0
        %699 = vmatpush1.msra.mxu0 0.0
        %700 = vmatprep.subr.mxu0 0.0
        %701 = vmatpush1.msra.mxu0 0.0
        %702 = vmatprep.subr.mxu0 0.0
        %703 = vmatpush1.msra.mxu0 0.0
        %704 = vmatprep.subr.mxu0 0.0
        %705 = vmatpush1.msra.mxu0 0.0
        %706 = vmatprep.subr.mxu0 0.0
        %707 = vmatpush1.msra.mxu0 0.0
        %708 = vmatprep.subr.mxu0 0.0
        %709 = vmatpush1.msra.mxu0 0.0
        %710 = vmatprep.subr.mxu0 0.0
        %711 = vmatpush1.msra.mxu0 0.0
        %712 = vmatprep.subr.mxu0 0.0
        %713 = vmatpush1.msra.mxu0 0.0
        %714 = vmatprep.subr.mxu0 0.0
        %715 = vmatpush1.msra.mxu0 0.0
        %716 = vmatprep.subr.mxu0 0.0
        %717 = vmatpush1.msra.mxu0 0.0
        %718 = vmatprep.subr.mxu0 0.0
        %719 = vmatpush1.msra.mxu0 0.0
        %720 = vmatprep.subr.mxu0 0.0
        %721 = vmatpush1.msra.mxu0 0.0
        %722 = vmatprep.subr.mxu0 0.0
        %723 = vmatpush1.msra.mxu0 0.0
        %724 = vmatprep.subr.mxu0 0.0
        %725 = vmatpush1.msra.mxu0 0.0
        %726 = vmatprep.subr.mxu0 0.0
        %727 = vmatpush1.msra.mxu0 0.0
        %728 = vmatprep.subr.mxu0 0.0
        %729 = vmatpush1.msra.mxu0 0.0
        %730 = vmatprep.subr.mxu0 0.0
        %731 = vmatpush1.msra.mxu0 0.0
        %732 = vmatprep.subr.mxu0 0.0
        %733 = vmatpush1.msra.mxu0 0.0
        %734 = vmatprep.subr.mxu0 0.0
        %735 = vmatpush1.msra.mxu0 0.0
        %736 = vmatprep.subr.mxu0 0.0
        %737 = vmatpush1.msra.mxu0 0.0
        %738 = vmatprep.subr.mxu0 0.0
        %739 = vmatpush1.msra.mxu0 0.0
        %740 = vmatprep.subr.mxu0 0.0
        %741 = vmatpush1.msra.mxu0 0.0
        %742 = vmatprep.subr.mxu0 0.0
        %743 = vmatpush1.msra.mxu0 0.0
        %744 = vmatprep.subr.mxu0 0.0
        %745 = vmatpush1.msra.mxu0 0.0
        %746 = vmatprep.subr.mxu0 0.0
        %747 = vmatpush1.msra.mxu0 0.0
        %748 = vmatprep.mubr.f32.mxu0 0.0
        %749 = vmatmul.mubr.f32.gmra.mrb[0].mxu0 %v540
        %v750 = vpop.f32.mrb[0].mxu0
        %v751 = vadd.f32 %v537, %v750
        %v752 = vpop.f32.mrb[0].mxu0
        %v753 = vadd.f32 %v537, %v752
        %754 = vdwg.mxu0
        %755 = vmatprep.subr.mxu0 %v378
        %756 = vmatpush1.msra.mxu0 %v377
        %757 = vmatprep.subr.mxu0 %v415
        %758 = vmatpush1.msra.mxu0 %v414
        %759 = vmatprep.subr.mxu0 %v451
        %760 = vmatpush1.msra.mxu0 %v450
        %761 = vmatprep.subr.mxu0 %v487
        %762 = vmatpush1.msra.mxu0 %v486
        %763 = vmatprep.subr.mxu0 %v523
        %764 = vmatpush1.msra.mxu0 %v522
        %765 = vmatprep.subr.mxu0 0.0
        %766 = vmatpush1.msra.mxu0 0.0
        %767 = vmatprep.subr.mxu0 0.0
        %768 = vmatpush1.msra.mxu0 0.0
        %769 = vmatprep.subr.mxu0 0.0
        %770 = vmatpush1.msra.mxu0 0.0
        %771 = vmatprep.subr.mxu0 0.0
        %772 = vmatpush1.msra.mxu0 0.0
        %773 = vmatprep.subr.mxu0 0.0
        %774 = vmatpush1.msra.mxu0 0.0
        %775 = vmatprep.subr.mxu0 0.0
        %776 = vmatpush1.msra.mxu0 0.0
        %777 = vmatprep.subr.mxu0 0.0
        %778 = vmatpush1.msra.mxu0 0.0
        %779 = vmatprep.subr.mxu0 0.0
        %780 = vmatpush1.msra.mxu0 0.0
        %781 = vmatprep.subr.mxu0 0.0
        %782 = vmatpush1.msra.mxu0 0.0
        %783 = vmatprep.subr.mxu0 0.0
        %784 = vmatpush1.msra.mxu0 0.0
        %785 = vmatprep.subr.mxu0 0.0
        %786 = vmatpush1.msra.mxu0 0.0
        %787 = vmatprep.subr.mxu0 0.0
        %788 = vmatpush1.msra.mxu0 0.0
        %789 = vmatprep.subr.mxu0 0.0
        %790 = vmatpush1.msra.mxu0 0.0
        %791 = vmatprep.subr.mxu0 0.0
        %792 = vmatpush1.msra.mxu0 0.0
        %793 = vmatprep.subr.mxu0 0.0
        %794 = vmatpush1.msra.mxu0 0.0
        %795 = vmatprep.subr.mxu0 0.0
        %796 = vmatpush1.msra.mxu0 0.0
        %797 = vmatprep.subr.mxu0 0.0
        %798 = vmatpush1.msra.mxu0 0.0
        %799 = vmatprep.subr.mxu0 0.0
        %800 = vmatpush1.msra.mxu0 0.0
        %801 = vmatprep.subr.mxu0 0.0
        %802 = vmatpush1.msra.mxu0 0.0
        %803 = vmatprep.subr.mxu0 0.0
        %804 = vmatpush1.msra.mxu0 0.0
        %805 = vmatprep.subr.mxu0 0.0
        %806 = vmatpush1.msra.mxu0 0.0
        %807 = vmatprep.subr.mxu0 0.0
        %808 = vmatpush1.msra.mxu0 0.0
        %809 = vmatprep.subr.mxu0 0.0
        %810 = vmatpush1.msra.mxu0 0.0
        %811 = vmatprep.subr.mxu0 0.0
        %812 = vmatpush1.msra.mxu0 0.0
        %813 = vmatprep.subr.mxu0 0.0
        %814 = vmatpush1.msra.mxu0 0.0
        %815 = vmatprep.subr.mxu0 0.0
        %816 = vmatpush1.msra.mxu0 0.0
        %817 = vmatprep.subr.mxu0 0.0
        %818 = vmatpush1.msra.mxu0 0.0
        %819 = vmatprep.mubr.f32.mxu0 0.0
        %820 = vmatmul.mubr.f32.gmra.mrb[0].mxu0 %v540
        %v821 = vpop.f32.mrb[0].mxu0
        %v822 = vadd.f32 %v537, %v821
        %v823 = vpop.f32.mrb[0].mxu0
        %v824 = vadd.f32 %v537, %v823
        %825 = vdwg.mxu0
        %826 = vmatprep.subr.mxu0 0.0
        %827 = vmatpush1.msra.mxu0 %v379
        %828 = vmatprep.subr.mxu0 0.0
        %829 = vmatpush1.msra.mxu0 %v406
        %830 = vmatprep.subr.mxu0 0.0
        %831 = vmatpush1.msra.mxu0 %v442
        %832 = vmatprep.subr.mxu0 0.0
        %833 = vmatpush1.msra.mxu0 %v478
        %834 = vmatprep.subr.mxu0 0.0
        %835 = vmatpush1.msra.mxu0 %v514
        %836 = vmatprep.subr.mxu0 0.0
        %837 = vmatpush1.msra.mxu0 0.0
        %838 = vmatprep.subr.mxu0 0.0
        %839 = vmatpush1.msra.mxu0 0.0
        %840 = vmatprep.subr.mxu0 0.0
        %841 = vmatpush1.msra.mxu0 0.0
        %842 = vmatprep.subr.mxu0 0.0
        %843 = vmatpush1.msra.mxu0 0.0
        %844 = vmatprep.subr.mxu0 0.0
        %845 = vmatpush1.msra.mxu0 0.0
        %846 = vmatprep.subr.mxu0 0.0
        %847 = vmatpush1.msra.mxu0 0.0
        %848 = vmatprep.subr.mxu0 0.0
        %849 = vmatpush1.msra.mxu0 0.0
        %850 = vmatprep.subr.mxu0 0.0
        %851 = vmatpush1.msra.mxu0 0.0
        %852 = vmatprep.subr.mxu0 0.0
        %853 = vmatpush1.msra.mxu0 0.0
        %854 = vmatprep.subr.mxu0 0.0
        %855 = vmatpush1.msra.mxu0 0.0
        %856 = vmatprep.subr.mxu0 0.0
        %857 = vmatpush1.msra.mxu0 0.0
        %858 = vmatprep.subr.mxu0 0.0
        %859 = vmatpush1.msra.mxu0 0.0
        %860 = vmatprep.subr.mxu0 0.0
        %861 = vmatpush1.msra.mxu0 0.0
        %862 = vmatprep.subr.mxu0 0.0
        %863 = vmatpush1.msra.mxu0 0.0
        %864 = vmatprep.subr.mxu0 0.0
        %865 = vmatpush1.msra.mxu0 0.0
        %866 = vmatprep.subr.mxu0 0.0
        %867 = vmatpush1.msra.mxu0 0.0
        %868 = vmatprep.subr.mxu0 0.0
        %869 = vmatpush1.msra.mxu0 0.0
        %870 = vmatprep.subr.mxu0 0.0
        %871 = vmatpush1.msra.mxu0 0.0
        %872 = vmatprep.subr.mxu0 0.0
        %873 = vmatpush1.msra.mxu0 0.0
        %874 = vmatprep.subr.mxu0 0.0
        %875 = vmatpush1.msra.mxu0 0.0
        %876 = vmatprep.subr.mxu0 0.0
        %877 = vmatpush1.msra.mxu0 0.0
        %878 = vmatprep.subr.mxu0 0.0
        %879 = vmatpush1.msra.mxu0 0.0
        %880 = vmatprep.subr.mxu0 0.0
        %881 = vmatpush1.msra.mxu0 0.0
        %882 = vmatprep.subr.mxu0 0.0
        %883 = vmatpush1.msra.mxu0 0.0
        %884 = vmatprep.subr.mxu0 0.0
        %885 = vmatpush1.msra.mxu0 0.0
        %886 = vmatprep.subr.mxu0 0.0
        %887 = vmatpush1.msra.mxu0 0.0
        %888 = vmatprep.subr.mxu0 0.0
        %889 = vmatpush1.msra.mxu0 0.0
        %890 = vmatprep.mubr.f32.mxu0 0.0
        %891 = vmatmul.mubr.f32.gmra.mrb[0].mxu0 %v540
        %v892 = vpop.f32.mrb[0].mxu0
        %v893 = vadd.f32 %v537, %v892
        %v894 = vpop.f32.mrb[0].mxu0
        %895 = vdwg.mxu0
        %vm896 = vcmp.ge.f32.partialorder %v609, 0.0
        %vm897 = vcmp.ge.f32.partialorder %v611, 0.0
        %vm898 = vcmp.ge.f32.partialorder %v680, 0.0
        %vm899 = vcmp.ge.f32.partialorder %v682, 0.0
        %vm900 = vcmp.ge.f32.partialorder %v751, 0.0
        %vm901 = vcmp.ge.f32.partialorder %v753, 0.0
        %vm902 = vcmp.ge.f32.partialorder %v822, 0.0
        %vm903 = vcmp.ge.f32.partialorder %v824, 0.0
        %vm904 = vcmp.ge.f32.partialorder %v893, 0.0
        %v905 = vmul.f32 %v609, 0.01
        %v906 = vmul.f32 %v611, 0.01
        %v907 = vmul.f32 %v680, 0.01
        %v908 = vmul.f32 %v682, 0.01
        %v909 = vmul.f32 %v751, 0.01
        %v910 = vmul.f32 %v753, 0.01
        %v911 = vmul.f32 %v822, 0.01
        %v912 = vmul.f32 %v824, 0.01
        %v913 = vmul.f32 %v893, 0.01
        %v914 = vsel %vm896, %v609, %v905
        %v915 = vsel %vm897, %v611, %v906
        %v916 = vsel %vm898, %v680, %v907
        %v917 = vsel %vm899, %v682, %v908
        %v918 = vsel %vm900, %v751, %v909
        %v919 = vsel %vm901, %v753, %v910
        %v920 = vsel %vm902, %v822, %v911
        %v921 = vsel %vm903, %v824, %v912
        %v922 = vsel %vm904, %v893, %v913
        %932 = vrot.lane.b32.xlu0 %v914, 127
        %v933 = vpop.permute.xlu0 %932
        %934 = vrot.lane.b32.xlu0 %v915, 127
        %v935 = vpop.permute.xlu0 %934
        %936 = vrot.lane.b32.xlu0 %v916, 127
        %v937 = vpop.permute.xlu0 %936
        %938 = vrot.lane.b32.xlu0 %v917, 127
        %v939 = vpop.permute.xlu0 %938
        %940 = vrot.lane.b32.xlu0 %v918, 127
        %v941 = vpop.permute.xlu0 %940
        %942 = vrot.lane.b32.xlu0 %v919, 127
        %v943 = vpop.permute.xlu0 %942
        %944 = vrot.lane.b32.xlu0 %v920, 127
        %v945 = vpop.permute.xlu0 %944
        %946 = vrot.lane.b32.xlu0 %v921, 127
        %v947 = vpop.permute.xlu0 %946
        %948 = vrot.lane.b32.xlu0 %v922, 127
        %v949 = vpop.permute.xlu0 %948
        %v950 = vsel %vm407, %v933, %v935
        %v951 = vsel %vm407, %v935, %v937
        %v952 = vsel %vm407, %v937, %v939
        %v953 = vsel %vm407, %v939, %v941
        %v954 = vsel %vm407, %v941, %v943
        %v955 = vsel %vm407, %v943, %v945
        %v956 = vsel %vm407, %v945, %v947
        %v957 = vsel %vm407, %v947, %v949
        %967 = vrot.lane.b32.xlu0 %v914, 126
        %v968 = vpop.permute.xlu0 %967
        %969 = vrot.lane.b32.xlu0 %v915, 126
        %v970 = vpop.permute.xlu0 %969
        %971 = vrot.lane.b32.xlu0 %v916, 126
        %v972 = vpop.permute.xlu0 %971
        %973 = vrot.lane.b32.xlu0 %v917, 126
        %v974 = vpop.permute.xlu0 %973
        %975 = vrot.lane.b32.xlu0 %v918, 126
        %v976 = vpop.permute.xlu0 %975
        %977 = vrot.lane.b32.xlu0 %v919, 126
        %v978 = vpop.permute.xlu0 %977
        %979 = vrot.lane.b32.xlu0 %v920, 126
        %v980 = vpop.permute.xlu0 %979
        %981 = vrot.lane.b32.xlu0 %v921, 126
        %v982 = vpop.permute.xlu0 %981
        %983 = vrot.lane.b32.xlu0 %v922, 126
        %v984 = vpop.permute.xlu0 %983
        %v985 = vsel %vm443, %v968, %v970
        %v986 = vsel %vm443, %v970, %v972
        %v987 = vsel %vm443, %v972, %v974
        %v988 = vsel %vm443, %v974, %v976
        %v989 = vsel %vm443, %v976, %v978
        %v990 = vsel %vm443, %v978, %v980
        %v991 = vsel %vm443, %v980, %v982
        %v992 = vsel %vm443, %v982, %v984
        %1002 = vrot.lane.b32.xlu0 %v914, 125
        %v1003 = vpop.permute.xlu0 %1002
        %1004 = vrot.lane.b32.xlu0 %v915, 125
        %v1005 = vpop.permute.xlu0 %1004
        %1006 = vrot.lane.b32.xlu0 %v916, 125
        %v1007 = vpop.permute.xlu0 %1006
        %1008 = vrot.lane.b32.xlu0 %v917, 125
        %v1009 = vpop.permute.xlu0 %1008
        %1010 = vrot.lane.b32.xlu0 %v918, 125
        %v1011 = vpop.permute.xlu0 %1010
        %1012 = vrot.lane.b32.xlu0 %v919, 125
        %v1013 = vpop.permute.xlu0 %1012
        %1014 = vrot.lane.b32.xlu0 %v920, 125
        %v1015 = vpop.permute.xlu0 %1014
        %1016 = vrot.lane.b32.xlu0 %v921, 125
        %v1017 = vpop.permute.xlu0 %1016
        %1018 = vrot.lane.b32.xlu0 %v922, 125
        %v1019 = vpop.permute.xlu0 %1018
        %v1020 = vsel %vm479, %v1003, %v1005
        %v1021 = vsel %vm479, %v1005, %v1007
        %v1022 = vsel %vm479, %v1007, %v1009
        %v1023 = vsel %vm479, %v1009, %v1011
        %v1024 = vsel %vm479, %v1011, %v1013
        %v1025 = vsel %vm479, %v1013, %v1015
        %v1026 = vsel %vm479, %v1015, %v1017
        %v1027 = vsel %vm479, %v1017, %v1019
        %1037 = vrot.lane.b32.xlu0 %v914, 124
        %v1038 = vpop.permute.xlu0 %1037
        %1039 = vrot.lane.b32.xlu0 %v915, 124
        %v1040 = vpop.permute.xlu0 %1039
        %1041 = vrot.lane.b32.xlu0 %v916, 124
        %v1042 = vpop.permute.xlu0 %1041
        %1043 = vrot.lane.b32.xlu0 %v917, 124
        %v1044 = vpop.permute.xlu0 %1043
        %1045 = vrot.lane.b32.xlu0 %v918, 124
        %v1046 = vpop.permute.xlu0 %1045
        %1047 = vrot.lane.b32.xlu0 %v919, 124
        %v1048 = vpop.permute.xlu0 %1047
        %1049 = vrot.lane.b32.xlu0 %v920, 124
        %v1050 = vpop.permute.xlu0 %1049
        %1051 = vrot.lane.b32.xlu0 %v921, 124
        %v1052 = vpop.permute.xlu0 %1051
        %1053 = vrot.lane.b32.xlu0 %v922, 124
        %v1054 = vpop.permute.xlu0 %1053
        %v1055 = vsel %vm515, %v1038, %v1040
        %v1056 = vsel %vm515, %v1040, %v1042
        %v1057 = vsel %vm515, %v1042, %v1044
        %v1058 = vsel %vm515, %v1044, %v1046
        %v1059 = vsel %vm515, %v1046, %v1048
        %v1060 = vsel %vm515, %v1048, %v1050
        %v1061 = vsel %vm515, %v1050, %v1052
        %v1062 = vsel %vm515, %v1052, %v1054
        %s1072 = scalar_lea.vmem [#allocation7], 8
        %v1073 = vld [vmem:[%s1072] sm:$0xff]
        %1075 = vset.pattern.permute.xlu0 40
        %1076 = vperm.xlu0 %1075, %v1073
        %v1077 = vpop.permute.xlu0 %1076
        %v1079 = vsel %vm539, %v1073, 0
        %1081 = vmatprep.subr.mxu0 %v915
        %1082 = vmatpush1.msra.mxu0 %v914
        %1083 = vmatprep.subr.mxu0 %v951
        %1084 = vmatpush1.msra.mxu0 %v950
        %1085 = vmatprep.subr.mxu0 %v986
        %1086 = vmatpush1.msra.mxu0 %v985
        %1087 = vmatprep.subr.mxu0 %v1021
        %1088 = vmatpush1.msra.mxu0 %v1020
        %1089 = vmatprep.subr.mxu0 %v1056
        %1090 = vmatpush1.msra.mxu0 %v1055
        %1091 = vmatprep.subr.mxu0 0.0
        %1092 = vmatpush1.msra.mxu0 0.0
        %1093 = vmatprep.subr.mxu0 0.0
        %1094 = vmatpush1.msra.mxu0 0.0
        %1095 = vmatprep.subr.mxu0 0.0
        %1096 = vmatpush1.msra.mxu0 0.0
        %1097 = vmatprep.subr.mxu0 0.0
        %1098 = vmatpush1.msra.mxu0 0.0
        %1099 = vmatprep.subr.mxu0 0.0
        %1100 = vmatpush1.msra.mxu0 0.0
        %1101 = vmatprep.subr.mxu0 0.0
        %1102 = vmatpush1.msra.mxu0 0.0
        %1103 = vmatprep.subr.mxu0 0.0
        %1104 = vmatpush1.msra.mxu0 0.0
        %1105 = vmatprep.subr.mxu0 0.0
        %1106 = vmatpush1.msra.mxu0 0.0
        %1107 = vmatprep.subr.mxu0 0.0
        %1108 = vmatpush1.msra.mxu0 0.0
        %1109 = vmatprep.subr.mxu0 0.0
        %1110 = vmatpush1.msra.mxu0 0.0
        %1111 = vmatprep.subr.mxu0 0.0
        %1112 = vmatpush1.msra.mxu0 0.0
        %1113 = vmatprep.subr.mxu0 0.0
        %1114 = vmatpush1.msra.mxu0 0.0
        %1115 = vmatprep.subr.mxu0 0.0
        %1116 = vmatpush1.msra.mxu0 0.0
        %1117 = vmatprep.subr.mxu0 0.0
        %1118 = vmatpush1.msra.mxu0 0.0
        %1119 = vmatprep.subr.mxu0 0.0
        %1120 = vmatpush1.msra.mxu0 0.0
        %1121 = vmatprep.subr.mxu0 0.0
        %1122 = vmatpush1.msra.mxu0 0.0
        %1123 = vmatprep.subr.mxu0 0.0
        %1124 = vmatpush1.msra.mxu0 0.0
        %1125 = vmatprep.subr.mxu0 0.0
        %1126 = vmatpush1.msra.mxu0 0.0
        %1127 = vmatprep.subr.mxu0 0.0
        %1128 = vmatpush1.msra.mxu0 0.0
        %1129 = vmatprep.subr.mxu0 0.0
        %1130 = vmatpush1.msra.mxu0 0.0
        %1131 = vmatprep.subr.mxu0 0.0
        %1132 = vmatpush1.msra.mxu0 0.0
        %1133 = vmatprep.subr.mxu0 0.0
        %1134 = vmatpush1.msra.mxu0 0.0
        %1135 = vmatprep.subr.mxu0 0.0
        %1136 = vmatpush1.msra.mxu0 0.0
        %1137 = vmatprep.subr.mxu0 0.0
        %1138 = vmatpush1.msra.mxu0 0.0
        %1139 = vmatprep.subr.mxu0 0.0
        %1140 = vmatpush1.msra.mxu0 0.0
        %1141 = vmatprep.subr.mxu0 0.0
        %1142 = vmatpush1.msra.mxu0 0.0
        %1143 = vmatprep.subr.mxu0 0.0
        %1144 = vmatpush1.msra.mxu0 0.0
        %1145 = vmatprep.mubr.f32.mxu0 0.0
        %1146 = vmatmul.mubr.f32.gmra.mrb[0].mxu0 %v1079
        %v1147 = vpop.f32.mrb[0].mxu0
        %v1148 = vadd.f32 %v1077, %v1147
        %v1149 = vpop.f32.mrb[0].mxu0
        %v1150 = vadd.f32 %v1077, %v1149
        %1151 = vdwg.mxu0
        %1152 = vmatprep.subr.mxu0 %v917
        %1153 = vmatpush1.msra.mxu0 %v916
        %1154 = vmatprep.subr.mxu0 %v953
        %1155 = vmatpush1.msra.mxu0 %v952
        %1156 = vmatprep.subr.mxu0 %v988
        %1157 = vmatpush1.msra.mxu0 %v987
        %1158 = vmatprep.subr.mxu0 %v1023
        %1159 = vmatpush1.msra.mxu0 %v1022
        %1160 = vmatprep.subr.mxu0 %v1058
        %1161 = vmatpush1.msra.mxu0 %v1057
        %1162 = vmatprep.subr.mxu0 0.0
        %1163 = vmatpush1.msra.mxu0 0.0
        %1164 = vmatprep.subr.mxu0 0.0
        %1165 = vmatpush1.msra.mxu0 0.0
        %1166 = vmatprep.subr.mxu0 0.0
        %1167 = vmatpush1.msra.mxu0 0.0
        %1168 = vmatprep.subr.mxu0 0.0
        %1169 = vmatpush1.msra.mxu0 0.0
        %1170 = vmatprep.subr.mxu0 0.0
        %1171 = vmatpush1.msra.mxu0 0.0
        %1172 = vmatprep.subr.mxu0 0.0
        %1173 = vmatpush1.msra.mxu0 0.0
        %1174 = vmatprep.subr.mxu0 0.0
        %1175 = vmatpush1.msra.mxu0 0.0
        %1176 = vmatprep.subr.mxu0 0.0
        %1177 = vmatpush1.msra.mxu0 0.0
        %1178 = vmatprep.subr.mxu0 0.0
        %1179 = vmatpush1.msra.mxu0 0.0
        %1180 = vmatprep.subr.mxu0 0.0
        %1181 = vmatpush1.msra.mxu0 0.0
        %1182 = vmatprep.subr.mxu0 0.0
        %1183 = vmatpush1.msra.mxu0 0.0
        %1184 = vmatprep.subr.mxu0 0.0
        %1185 = vmatpush1.msra.mxu0 0.0
        %1186 = vmatprep.subr.mxu0 0.0
        %1187 = vmatpush1.msra.mxu0 0.0
        %1188 = vmatprep.subr.mxu0 0.0
        %1189 = vmatpush1.msra.mxu0 0.0
        %1190 = vmatprep.subr.mxu0 0.0
        %1191 = vmatpush1.msra.mxu0 0.0
        %1192 = vmatprep.subr.mxu0 0.0
        %1193 = vmatpush1.msra.mxu0 0.0
        %1194 = vmatprep.subr.mxu0 0.0
        %1195 = vmatpush1.msra.mxu0 0.0
        %1196 = vmatprep.subr.mxu0 0.0
        %1197 = vmatpush1.msra.mxu0 0.0
        %1198 = vmatprep.subr.mxu0 0.0
        %1199 = vmatpush1.msra.mxu0 0.0
        %1200 = vmatprep.subr.mxu0 0.0
        %1201 = vmatpush1.msra.mxu0 0.0
        %1202 = vmatprep.subr.mxu0 0.0
        %1203 = vmatpush1.msra.mxu0 0.0
        %1204 = vmatprep.subr.mxu0 0.0
        %1205 = vmatpush1.msra.mxu0 0.0
        %1206 = vmatprep.subr.mxu0 0.0
        %1207 = vmatpush1.msra.mxu0 0.0
        %1208 = vmatprep.subr.mxu0 0.0
        %1209 = vmatpush1.msra.mxu0 0.0
        %1210 = vmatprep.subr.mxu0 0.0
        %1211 = vmatpush1.msra.mxu0 0.0
        %1212 = vmatprep.subr.mxu0 0.0
        %1213 = vmatpush1.msra.mxu0 0.0
        %1214 = vmatprep.subr.mxu0 0.0
        %1215 = vmatpush1.msra.mxu0 0.0
        %1216 = vmatprep.mubr.f32.mxu0 0.0
        %1217 = vmatmul.mubr.f32.gmra.mrb[0].mxu0 %v1079
        %v1218 = vpop.f32.mrb[0].mxu0
        %v1219 = vadd.f32 %v1077, %v1218
        %v1220 = vpop.f32.mrb[0].mxu0
        %v1221 = vadd.f32 %v1077, %v1220
        %1222 = vdwg.mxu0
        %1223 = vmatprep.subr.mxu0 %v919
        %1224 = vmatpush1.msra.mxu0 %v918
        %1225 = vmatprep.subr.mxu0 %v955
        %1226 = vmatpush1.msra.mxu0 %v954
        %1227 = vmatprep.subr.mxu0 %v990
        %1228 = vmatpush1.msra.mxu0 %v989
        %1229 = vmatprep.subr.mxu0 %v1025
        %1230 = vmatpush1.msra.mxu0 %v1024
        %1231 = vmatprep.subr.mxu0 %v1060
        %1232 = vmatpush1.msra.mxu0 %v1059
        %1233 = vmatprep.subr.mxu0 0.0
        %1234 = vmatpush1.msra.mxu0 0.0
        %1235 = vmatprep.subr.mxu0 0.0
        %1236 = vmatpush1.msra.mxu0 0.0
        %1237 = vmatprep.subr.mxu0 0.0
        %1238 = vmatpush1.msra.mxu0 0.0
        %1239 = vmatprep.subr.mxu0 0.0
        %1240 = vmatpush1.msra.mxu0 0.0
        %1241 = vmatprep.subr.mxu0 0.0
        %1242 = vmatpush1.msra.mxu0 0.0
        %1243 = vmatprep.subr.mxu0 0.0
        %1244 = vmatpush1.msra.mxu0 0.0
        %1245 = vmatprep.subr.mxu0 0.0
        %1246 = vmatpush1.msra.mxu0 0.0
        %1247 = vmatprep.subr.mxu0 0.0
        %1248 = vmatpush1.msra.mxu0 0.0
        %1249 = vmatprep.subr.mxu0 0.0
        %1250 = vmatpush1.msra.mxu0 0.0
        %1251 = vmatprep.subr.mxu0 0.0
        %1252 = vmatpush1.msra.mxu0 0.0
        %1253 = vmatprep.subr.mxu0 0.0
        %1254 = vmatpush1.msra.mxu0 0.0
        %1255 = vmatprep.subr.mxu0 0.0
        %1256 = vmatpush1.msra.mxu0 0.0
        %1257 = vmatprep.subr.mxu0 0.0
        %1258 = vmatpush1.msra.mxu0 0.0
        %1259 = vmatprep.subr.mxu0 0.0
        %1260 = vmatpush1.msra.mxu0 0.0
        %1261 = vmatprep.subr.mxu0 0.0
        %1262 = vmatpush1.msra.mxu0 0.0
        %1263 = vmatprep.subr.mxu0 0.0
        %1264 = vmatpush1.msra.mxu0 0.0
        %1265 = vmatprep.subr.mxu0 0.0
        %1266 = vmatpush1.msra.mxu0 0.0
        %1267 = vmatprep.subr.mxu0 0.0
        %1268 = vmatpush1.msra.mxu0 0.0
        %1269 = vmatprep.subr.mxu0 0.0
        %1270 = vmatpush1.msra.mxu0 0.0
        %1271 = vmatprep.subr.mxu0 0.0
        %1272 = vmatpush1.msra.mxu0 0.0
        %1273 = vmatprep.subr.mxu0 0.0
        %1274 = vmatpush1.msra.mxu0 0.0
        %1275 = vmatprep.subr.mxu0 0.0
        %1276 = vmatpush1.msra.mxu0 0.0
        %1277 = vmatprep.subr.mxu0 0.0
        %1278 = vmatpush1.msra.mxu0 0.0
        %1279 = vmatprep.subr.mxu0 0.0
        %1280 = vmatpush1.msra.mxu0 0.0
        %1281 = vmatprep.subr.mxu0 0.0
        %1282 = vmatpush1.msra.mxu0 0.0
        %1283 = vmatprep.subr.mxu0 0.0
        %1284 = vmatpush1.msra.mxu0 0.0
        %1285 = vmatprep.subr.mxu0 0.0
        %1286 = vmatpush1.msra.mxu0 0.0
        %1287 = vmatprep.mubr.f32.mxu0 0.0
        %1288 = vmatmul.mubr.f32.gmra.mrb[0].mxu0 %v1079
        %v1289 = vpop.f32.mrb[0].mxu0
        %v1290 = vadd.f32 %v1077, %v1289
        %v1291 = vpop.f32.mrb[0].mxu0
        %v1292 = vadd.f32 %v1077, %v1291
        %1293 = vdwg.mxu0
        %1294 = vmatprep.subr.mxu0 %v921
        %1295 = vmatpush1.msra.mxu0 %v920
        %1296 = vmatprep.subr.mxu0 %v957
        %1297 = vmatpush1.msra.mxu0 %v956
        %1298 = vmatprep.subr.mxu0 %v992
        %1299 = vmatpush1.msra.mxu0 %v991
        %1300 = vmatprep.subr.mxu0 %v1027
        %1301 = vmatpush1.msra.mxu0 %v1026
        %1302 = vmatprep.subr.mxu0 %v1062
        %1303 = vmatpush1.msra.mxu0 %v1061
        %1304 = vmatprep.subr.mxu0 0.0
        %1305 = vmatpush1.msra.mxu0 0.0
        %1306 = vmatprep.subr.mxu0 0.0
        %1307 = vmatpush1.msra.mxu0 0.0
        %1308 = vmatprep.subr.mxu0 0.0
        %1309 = vmatpush1.msra.mxu0 0.0
        %1310 = vmatprep.subr.mxu0 0.0
        %1311 = vmatpush1.msra.mxu0 0.0
        %1312 = vmatprep.subr.mxu0 0.0
        %1313 = vmatpush1.msra.mxu0 0.0
        %1314 = vmatprep.subr.mxu0 0.0
        %1315 = vmatpush1.msra.mxu0 0.0
        %1316 = vmatprep.subr.mxu0 0.0
        %1317 = vmatpush1.msra.mxu0 0.0
        %1318 = vmatprep.subr.mxu0 0.0
        %1319 = vmatpush1.msra.mxu0 0.0
        %1320 = vmatprep.subr.mxu0 0.0
        %1321 = vmatpush1.msra.mxu0 0.0
        %1322 = vmatprep.subr.mxu0 0.0
        %1323 = vmatpush1.msra.mxu0 0.0
        %1324 = vmatprep.subr.mxu0 0.0
        %1325 = vmatpush1.msra.mxu0 0.0
        %1326 = vmatprep.subr.mxu0 0.0
        %1327 = vmatpush1.msra.mxu0 0.0
        %1328 = vmatprep.subr.mxu0 0.0
        %1329 = vmatpush1.msra.mxu0 0.0
        %1330 = vmatprep.subr.mxu0 0.0
        %1331 = vmatpush1.msra.mxu0 0.0
        %1332 = vmatprep.subr.mxu0 0.0
        %1333 = vmatpush1.msra.mxu0 0.0
        %1334 = vmatprep.subr.mxu0 0.0
        %1335 = vmatpush1.msra.mxu0 0.0
        %1336 = vmatprep.subr.mxu0 0.0
        %1337 = vmatpush1.msra.mxu0 0.0
        %1338 = vmatprep.subr.mxu0 0.0
        %1339 = vmatpush1.msra.mxu0 0.0
        %1340 = vmatprep.subr.mxu0 0.0
        %1341 = vmatpush1.msra.mxu0 0.0
        %1342 = vmatprep.subr.mxu0 0.0
        %1343 = vmatpush1.msra.mxu0 0.0
        %1344 = vmatprep.subr.mxu0 0.0
        %1345 = vmatpush1.msra.mxu0 0.0
        %1346 = vmatprep.subr.mxu0 0.0
        %1347 = vmatpush1.msra.mxu0 0.0
        %1348 = vmatprep.subr.mxu0 0.0
        %1349 = vmatpush1.msra.mxu0 0.0
        %1350 = vmatprep.subr.mxu0 0.0
        %1351 = vmatpush1.msra.mxu0 0.0
        %1352 = vmatprep.subr.mxu0 0.0
        %1353 = vmatpush1.msra.mxu0 0.0
        %1354 = vmatprep.subr.mxu0 0.0
        %1355 = vmatpush1.msra.mxu0 0.0
        %1356 = vmatprep.subr.mxu0 0.0
        %1357 = vmatpush1.msra.mxu0 0.0
        %1358 = vmatprep.mubr.f32.mxu0 0.0
        %1359 = vmatmul.mubr.f32.gmra.mrb[0].mxu0 %v1079
        %v1360 = vpop.f32.mrb[0].mxu0
        %v1361 = vadd.f32 %v1077, %v1360
        %v1362 = vpop.f32.mrb[0].mxu0
        %v1363 = vadd.f32 %v1077, %v1362
        %1364 = vdwg.mxu0
        %1365 = vmatprep.subr.mxu0 0.0
        %1366 = vmatpush1.msra.mxu0 %v922
        %1367 = vmatprep.subr.mxu0 0.0
        %1368 = vmatpush1.msra.mxu0 %v949
        %1369 = vmatprep.subr.mxu0 0.0
        %1370 = vmatpush1.msra.mxu0 %v984
        %1371 = vmatprep.subr.mxu0 0.0
        %1372 = vmatpush1.msra.mxu0 %v1019
        %1373 = vmatprep.subr.mxu0 0.0
        %1374 = vmatpush1.msra.mxu0 %v1054
        %1375 = vmatprep.subr.mxu0 0.0
        %1376 = vmatpush1.msra.mxu0 0.0
        %1377 = vmatprep.subr.mxu0 0.0
        %1378 = vmatpush1.msra.mxu0 0.0
        %1379 = vmatprep.subr.mxu0 0.0
        %1380 = vmatpush1.msra.mxu0 0.0
        %1381 = vmatprep.subr.mxu0 0.0
        %1382 = vmatpush1.msra.mxu0 0.0
        %1383 = vmatprep.subr.mxu0 0.0
        %1384 = vmatpush1.msra.mxu0 0.0
        %1385 = vmatprep.subr.mxu0 0.0
        %1386 = vmatpush1.msra.mxu0 0.0
        %1387 = vmatprep.subr.mxu0 0.0
        %1388 = vmatpush1.msra.mxu0 0.0
        %1389 = vmatprep.subr.mxu0 0.0
        %1390 = vmatpush1.msra.mxu0 0.0
        %1391 = vmatprep.subr.mxu0 0.0
        %1392 = vmatpush1.msra.mxu0 0.0
        %1393 = vmatprep.subr.mxu0 0.0
        %1394 = vmatpush1.msra.mxu0 0.0
        %1395 = vmatprep.subr.mxu0 0.0
        %1396 = vmatpush1.msra.mxu0 0.0
        %1397 = vmatprep.subr.mxu0 0.0
        %1398 = vmatpush1.msra.mxu0 0.0
        %1399 = vmatprep.subr.mxu0 0.0
        %1400 = vmatpush1.msra.mxu0 0.0
        %1401 = vmatprep.subr.mxu0 0.0
        %1402 = vmatpush1.msra.mxu0 0.0
        %1403 = vmatprep.subr.mxu0 0.0
        %1404 = vmatpush1.msra.mxu0 0.0
        %1405 = vmatprep.subr.mxu0 0.0
        %1406 = vmatpush1.msra.mxu0 0.0
        %1407 = vmatprep.subr.mxu0 0.0
        %1408 = vmatpush1.msra.mxu0 0.0
        %1409 = vmatprep.subr.mxu0 0.0
        %1410 = vmatpush1.msra.mxu0 0.0
        %1411 = vmatprep.subr.mxu0 0.0
        %1412 = vmatpush1.msra.mxu0 0.0
        %1413 = vmatprep.subr.mxu0 0.0
        %1414 = vmatpush1.msra.mxu0 0.0
        %1415 = vmatprep.subr.mxu0 0.0
        %1416 = vmatpush1.msra.mxu0 0.0
        %1417 = vmatprep.subr.mxu0 0.0
        %1418 = vmatpush1.msra.mxu0 0.0
        %1419 = vmatprep.subr.mxu0 0.0
        %1420 = vmatpush1.msra.mxu0 0.0
        %1421 = vmatprep.subr.mxu0 0.0
        %1422 = vmatpush1.msra.mxu0 0.0
        %1423 = vmatprep.subr.mxu0 0.0
        %1424 = vmatpush1.msra.mxu0 0.0
        %1425 = vmatprep.subr.mxu0 0.0
        %1426 = vmatpush1.msra.mxu0 0.0
        %1427 = vmatprep.subr.mxu0 0.0
        %1428 = vmatpush1.msra.mxu0 0.0
        %1429 = vmatprep.mubr.f32.mxu0 0.0
        %1430 = vmatmul.mubr.f32.gmra.mrb[0].mxu0 %v1079
        %v1431 = vpop.f32.mrb[0].mxu0
        %v1432 = vadd.f32 %v1077, %v1431
        %v1433 = vpop.f32.mrb[0].mxu0
        %1434 = vdwg.mxu0
        %vm1435 = vcmp.ge.f32.partialorder %v1148, 0.0
        %vm1436 = vcmp.ge.f32.partialorder %v1150, 0.0
        %vm1437 = vcmp.ge.f32.partialorder %v1219, 0.0
        %vm1438 = vcmp.ge.f32.partialorder %v1221, 0.0
        %vm1439 = vcmp.ge.f32.partialorder %v1290, 0.0
        %vm1440 = vcmp.ge.f32.partialorder %v1292, 0.0
        %vm1441 = vcmp.ge.f32.partialorder %v1361, 0.0
        %vm1442 = vcmp.ge.f32.partialorder %v1363, 0.0
        %vm1443 = vcmp.ge.f32.partialorder %v1432, 0.0
        %v1444 = vmul.f32 %v1148, 0.01
        %v1445 = vmul.f32 %v1150, 0.01
        %v1446 = vmul.f32 %v1219, 0.01
        %v1447 = vmul.f32 %v1221, 0.01
        %v1448 = vmul.f32 %v1290, 0.01
        %v1449 = vmul.f32 %v1292, 0.01
        %v1450 = vmul.f32 %v1361, 0.01
        %v1451 = vmul.f32 %v1363, 0.01
        %v1452 = vmul.f32 %v1432, 0.01
        %v1453 = vsel %vm1435, %v1148, %v1444
        %v1454 = vsel %vm1436, %v1150, %v1445
        %v1455 = vsel %vm1437, %v1219, %v1446
        %v1456 = vsel %vm1438, %v1221, %v1447
        %v1457 = vsel %vm1439, %v1290, %v1448
        %v1458 = vsel %vm1440, %v1292, %v1449
        %v1459 = vsel %vm1441, %v1361, %v1450
        %v1460 = vsel %vm1442, %v1363, %v1451
        %v1461 = vsel %vm1443, %v1432, %v1452
        %1462 = vst [vmem:[%s347] sm:$0xff] %v1453
        %1463 = vst [vmem:[%s347 + $0x8] sm:$0xff] %v1454
        %1464 = vst [vmem:[%s347 + $0x10] sm:$0xff] %v1455
        %1465 = vst [vmem:[%s347 + $0x18] sm:$0xff] %v1456
        %1466 = vst [vmem:[%s347 + $0x20] sm:$0xff] %v1457
        %1467 = vst [vmem:[%s347 + $0x28] sm:$0xff] %v1458
        %1468 = vst [vmem:[%s347 + $0x30] sm:$0xff] %v1459
        %1469 = vst [vmem:[%s347 + $0x38] sm:$0xff] %v1460
        %1479 = vrot.lane.b32.xlu0 %v1453, 127
        %v1480 = vpop.permute.xlu0 %1479
        %1481 = vrot.lane.b32.xlu0 %v1454, 127
        %v1482 = vpop.permute.xlu0 %1481
        %1483 = vrot.lane.b32.xlu0 %v1455, 127
        %v1484 = vpop.permute.xlu0 %1483
        %1485 = vrot.lane.b32.xlu0 %v1456, 127
        %v1486 = vpop.permute.xlu0 %1485
        %1487 = vrot.lane.b32.xlu0 %v1457, 127
        %v1488 = vpop.permute.xlu0 %1487
        %1489 = vrot.lane.b32.xlu0 %v1458, 127
        %v1490 = vpop.permute.xlu0 %1489
        %1491 = vrot.lane.b32.xlu0 %v1459, 127
        %v1492 = vpop.permute.xlu0 %1491
        %1493 = vrot.lane.b32.xlu0 %v1460, 127
        %v1494 = vpop.permute.xlu0 %1493
        %1495 = vrot.lane.b32.xlu0 %v1461, 127
        %v1496 = vpop.permute.xlu0 %1495
        %v1497 = vsel %vm407, %v1480, %v1482
        %v1498 = vsel %vm407, %v1482, %v1484
        %v1499 = vsel %vm407, %v1484, %v1486
        %v1500 = vsel %vm407, %v1486, %v1488
        %v1501 = vsel %vm407, %v1488, %v1490
        %v1502 = vsel %vm407, %v1490, %v1492
        %v1503 = vsel %vm407, %v1492, %v1494
        %v1504 = vsel %vm407, %v1494, %v1496
        %1514 = vrot.lane.b32.xlu0 %v1453, 126
        %v1515 = vpop.permute.xlu0 %1514
        %1516 = vrot.lane.b32.xlu0 %v1454, 126
        %v1517 = vpop.permute.xlu0 %1516
        %1518 = vrot.lane.b32.xlu0 %v1455, 126
        %v1519 = vpop.permute.xlu0 %1518
        %1520 = vrot.lane.b32.xlu0 %v1456, 126
        %v1521 = vpop.permute.xlu0 %1520
        %1522 = vrot.lane.b32.xlu0 %v1457, 126
        %v1523 = vpop.permute.xlu0 %1522
        %1524 = vrot.lane.b32.xlu0 %v1458, 126
        %v1525 = vpop.permute.xlu0 %1524
        %1526 = vrot.lane.b32.xlu0 %v1459, 126
        %v1527 = vpop.permute.xlu0 %1526
        %1528 = vrot.lane.b32.xlu0 %v1460, 126
        %v1529 = vpop.permute.xlu0 %1528
        %1530 = vrot.lane.b32.xlu0 %v1461, 126
        %v1531 = vpop.permute.xlu0 %1530
        %v1532 = vsel %vm443, %v1515, %v1517
        %v1533 = vsel %vm443, %v1517, %v1519
        %v1534 = vsel %vm443, %v1519, %v1521
        %v1535 = vsel %vm443, %v1521, %v1523
        %v1536 = vsel %vm443, %v1523, %v1525
        %v1537 = vsel %vm443, %v1525, %v1527
        %v1538 = vsel %vm443, %v1527, %v1529
        %v1539 = vsel %vm443, %v1529, %v1531
        %1549 = vrot.lane.b32.xlu0 %v1453, 125
        %v1550 = vpop.permute.xlu0 %1549
        %1551 = vrot.lane.b32.xlu0 %v1454, 125
        %v1552 = vpop.permute.xlu0 %1551
        %1553 = vrot.lane.b32.xlu0 %v1455, 125
        %v1554 = vpop.permute.xlu0 %1553
        %1555 = vrot.lane.b32.xlu0 %v1456, 125
        %v1556 = vpop.permute.xlu0 %1555
        %1557 = vrot.lane.b32.xlu0 %v1457, 125
        %v1558 = vpop.permute.xlu0 %1557
        %1559 = vrot.lane.b32.xlu0 %v1458, 125
        %v1560 = vpop.permute.xlu0 %1559
        %1561 = vrot.lane.b32.xlu0 %v1459, 125
        %v1562 = vpop.permute.xlu0 %1561
        %1563 = vrot.lane.b32.xlu0 %v1460, 125
        %v1564 = vpop.permute.xlu0 %1563
        %1565 = vrot.lane.b32.xlu0 %v1461, 125
        %v1566 = vpop.permute.xlu0 %1565
        %v1567 = vsel %vm479, %v1550, %v1552
        %v1568 = vsel %vm479, %v1552, %v1554
        %v1569 = vsel %vm479, %v1554, %v1556
        %v1570 = vsel %vm479, %v1556, %v1558
        %v1571 = vsel %vm479, %v1558, %v1560
        %v1572 = vsel %vm479, %v1560, %v1562
        %v1573 = vsel %vm479, %v1562, %v1564
        %v1574 = vsel %vm479, %v1564, %v1566
        %1584 = vrot.lane.b32.xlu0 %v1453, 124
        %v1585 = vpop.permute.xlu0 %1584
        %1586 = vrot.lane.b32.xlu0 %v1454, 124
        %v1587 = vpop.permute.xlu0 %1586
        %1588 = vrot.lane.b32.xlu0 %v1455, 124
        %v1589 = vpop.permute.xlu0 %1588
        %1590 = vrot.lane.b32.xlu0 %v1456, 124
        %v1591 = vpop.permute.xlu0 %1590
        %1592 = vrot.lane.b32.xlu0 %v1457, 124
        %v1593 = vpop.permute.xlu0 %1592
        %1594 = vrot.lane.b32.xlu0 %v1458, 124
        %v1595 = vpop.permute.xlu0 %1594
        %1596 = vrot.lane.b32.xlu0 %v1459, 124
        %v1597 = vpop.permute.xlu0 %1596
        %1598 = vrot.lane.b32.xlu0 %v1460, 124
        %v1599 = vpop.permute.xlu0 %1598
        %1600 = vrot.lane.b32.xlu0 %v1461, 124
        %v1601 = vpop.permute.xlu0 %1600
        %v1602 = vsel %vm515, %v1585, %v1587
        %v1603 = vsel %vm515, %v1587, %v1589
        %v1604 = vsel %vm515, %v1589, %v1591
        %v1605 = vsel %vm515, %v1591, %v1593
        %v1606 = vsel %vm515, %v1593, %v1595
        %v1607 = vsel %vm515, %v1595, %v1597
        %v1608 = vsel %vm515, %v1597, %v1599
        %v1609 = vsel %vm515, %v1599, %v1601
        %s1619 = scalar_lea.vmem [#allocation7], 16
        %v1620 = vld [vmem:[%s1619] sm:$0xff]
        %1622 = vset.pattern.permute.xlu0 40
        %1623 = vperm.xlu0 %1622, %v1620
        %v1624 = vpop.permute.xlu0 %1623
        %v1626 = vsel %vm539, %v1620, 0
        %1628 = vmatprep.subr.mxu0 %v1454
        %1629 = vmatpush1.msra.mxu0 %v1453
        %1630 = vmatprep.subr.mxu0 %v1498
        %1631 = vmatpush1.msra.mxu0 %v1497
        %1632 = vmatprep.subr.mxu0 %v1533
        %1633 = vmatpush1.msra.mxu0 %v1532
        %1634 = vmatprep.subr.mxu0 %v1568
        %1635 = vmatpush1.msra.mxu0 %v1567
        %1636 = vmatprep.subr.mxu0 %v1603
        %1637 = vmatpush1.msra.mxu0 %v1602
        %1638 = vmatprep.subr.mxu0 0.0
        %1639 = vmatpush1.msra.mxu0 0.0
        %1640 = vmatprep.subr.mxu0 0.0
        %1641 = vmatpush1.msra.mxu0 0.0
        %1642 = vmatprep.subr.mxu0 0.0
        %1643 = vmatpush1.msra.mxu0 0.0
        %1644 = vmatprep.subr.mxu0 0.0
        %1645 = vmatpush1.msra.mxu0 0.0
        %1646 = vmatprep.subr.mxu0 0.0
        %1647 = vmatpush1.msra.mxu0 0.0
        %1648 = vmatprep.subr.mxu0 0.0
        %1649 = vmatpush1.msra.mxu0 0.0
        %1650 = vmatprep.subr.mxu0 0.0
        %1651 = vmatpush1.msra.mxu0 0.0
        %1652 = vmatprep.subr.mxu0 0.0
        %1653 = vmatpush1.msra.mxu0 0.0
        %1654 = vmatprep.subr.mxu0 0.0
        %1655 = vmatpush1.msra.mxu0 0.0
        %1656 = vmatprep.subr.mxu0 0.0
        %1657 = vmatpush1.msra.mxu0 0.0
        %1658 = vmatprep.subr.mxu0 0.0
        %1659 = vmatpush1.msra.mxu0 0.0
        %1660 = vmatprep.subr.mxu0 0.0
        %1661 = vmatpush1.msra.mxu0 0.0
        %1662 = vmatprep.subr.mxu0 0.0
        %1663 = vmatpush1.msra.mxu0 0.0
        %1664 = vmatprep.subr.mxu0 0.0
        %1665 = vmatpush1.msra.mxu0 0.0
        %1666 = vmatprep.subr.mxu0 0.0
        %1667 = vmatpush1.msra.mxu0 0.0
        %1668 = vmatprep.subr.mxu0 0.0
        %1669 = vmatpush1.msra.mxu0 0.0
        %1670 = vmatprep.subr.mxu0 0.0
        %1671 = vmatpush1.msra.mxu0 0.0
        %1672 = vmatprep.subr.mxu0 0.0
        %1673 = vmatpush1.msra.mxu0 0.0
        %1674 = vmatprep.subr.mxu0 0.0
        %1675 = vmatpush1.msra.mxu0 0.0
        %1676 = vmatprep.subr.mxu0 0.0
        %1677 = vmatpush1.msra.mxu0 0.0
        %1678 = vmatprep.subr.mxu0 0.0
        %1679 = vmatpush1.msra.mxu0 0.0
        %1680 = vmatprep.subr.mxu0 0.0
        %1681 = vmatpush1.msra.mxu0 0.0
        %1682 = vmatprep.subr.mxu0 0.0
        %1683 = vmatpush1.msra.mxu0 0.0
        %1684 = vmatprep.subr.mxu0 0.0
        %1685 = vmatpush1.msra.mxu0 0.0
        %1686 = vmatprep.subr.mxu0 0.0
        %1687 = vmatpush1.msra.mxu0 0.0
        %1688 = vmatprep.subr.mxu0 0.0
        %1689 = vmatpush1.msra.mxu0 0.0
        %1690 = vmatprep.subr.mxu0 0.0
        %1691 = vmatpush1.msra.mxu0 0.0
        %1692 = vmatprep.mubr.f32.mxu0 0.0
        %1693 = vmatmul.mubr.f32.gmra.mrb[0].mxu0 %v1626
        %v1694 = vpop.f32.mrb[0].mxu0
        %v1695 = vadd.f32 %v1624, %v1694
        %v1696 = vpop.f32.mrb[0].mxu0
        %v1697 = vadd.f32 %v1624, %v1696
        %1698 = vdwg.mxu0
        %1699 = vmatprep.subr.mxu0 %v1456
        %1700 = vmatpush1.msra.mxu0 %v1455
        %1701 = vmatprep.subr.mxu0 %v1500
        %1702 = vmatpush1.msra.mxu0 %v1499
        %1703 = vmatprep.subr.mxu0 %v1535
        %1704 = vmatpush1.msra.mxu0 %v1534
        %1705 = vmatprep.subr.mxu0 %v1570
        %1706 = vmatpush1.msra.mxu0 %v1569
        %1707 = vmatprep.subr.mxu0 %v1605
        %1708 = vmatpush1.msra.mxu0 %v1604
        %1709 = vmatprep.subr.mxu0 0.0
        %1710 = vmatpush1.msra.mxu0 0.0
        %1711 = vmatprep.subr.mxu0 0.0
        %1712 = vmatpush1.msra.mxu0 0.0
        %1713 = vmatprep.subr.mxu0 0.0
        %1714 = vmatpush1.msra.mxu0 0.0
        %1715 = vmatprep.subr.mxu0 0.0
        %1716 = vmatpush1.msra.mxu0 0.0
        %1717 = vmatprep.subr.mxu0 0.0
        %1718 = vmatpush1.msra.mxu0 0.0
        %1719 = vmatprep.subr.mxu0 0.0
        %1720 = vmatpush1.msra.mxu0 0.0
        %1721 = vmatprep.subr.mxu0 0.0
        %1722 = vmatpush1.msra.mxu0 0.0
        %1723 = vmatprep.subr.mxu0 0.0
        %1724 = vmatpush1.msra.mxu0 0.0
        %1725 = vmatprep.subr.mxu0 0.0
        %1726 = vmatpush1.msra.mxu0 0.0
        %1727 = vmatprep.subr.mxu0 0.0
        %1728 = vmatpush1.msra.mxu0 0.0
        %1729 = vmatprep.subr.mxu0 0.0
        %1730 = vmatpush1.msra.mxu0 0.0
        %1731 = vmatprep.subr.mxu0 0.0
        %1732 = vmatpush1.msra.mxu0 0.0
        %1733 = vmatprep.subr.mxu0 0.0
        %1734 = vmatpush1.msra.mxu0 0.0
        %1735 = vmatprep.subr.mxu0 0.0
        %1736 = vmatpush1.msra.mxu0 0.0
        %1737 = vmatprep.subr.mxu0 0.0
        %1738 = vmatpush1.msra.mxu0 0.0
        %1739 = vmatprep.subr.mxu0 0.0
        %1740 = vmatpush1.msra.mxu0 0.0
        %1741 = vmatprep.subr.mxu0 0.0
        %1742 = vmatpush1.msra.mxu0 0.0
        %1743 = vmatprep.subr.mxu0 0.0
        %1744 = vmatpush1.msra.mxu0 0.0
        %1745 = vmatprep.subr.mxu0 0.0
        %1746 = vmatpush1.msra.mxu0 0.0
        %1747 = vmatprep.subr.mxu0 0.0
        %1748 = vmatpush1.msra.mxu0 0.0
        %1749 = vmatprep.subr.mxu0 0.0
        %1750 = vmatpush1.msra.mxu0 0.0
        %1751 = vmatprep.subr.mxu0 0.0
        %1752 = vmatpush1.msra.mxu0 0.0
        %1753 = vmatprep.subr.mxu0 0.0
        %1754 = vmatpush1.msra.mxu0 0.0
        %1755 = vmatprep.subr.mxu0 0.0
        %1756 = vmatpush1.msra.mxu0 0.0
        %1757 = vmatprep.subr.mxu0 0.0
        %1758 = vmatpush1.msra.mxu0 0.0
        %1759 = vmatprep.subr.mxu0 0.0
        %1760 = vmatpush1.msra.mxu0 0.0
        %1761 = vmatprep.subr.mxu0 0.0
        %1762 = vmatpush1.msra.mxu0 0.0
        %1763 = vmatprep.mubr.f32.mxu0 0.0
        %1764 = vmatmul.mubr.f32.gmra.mrb[0].mxu0 %v1626
        %v1765 = vpop.f32.mrb[0].mxu0
        %v1766 = vadd.f32 %v1624, %v1765
        %v1767 = vpop.f32.mrb[0].mxu0
        %v1768 = vadd.f32 %v1624, %v1767
        %1769 = vdwg.mxu0
        %1770 = vmatprep.subr.mxu0 %v1458
        %1771 = vmatpush1.msra.mxu0 %v1457
        %1772 = vmatprep.subr.mxu0 %v1502
        %1773 = vmatpush1.msra.mxu0 %v1501
        %1774 = vmatprep.subr.mxu0 %v1537
        %1775 = vmatpush1.msra.mxu0 %v1536
        %1776 = vmatprep.subr.mxu0 %v1572
        %1777 = vmatpush1.msra.mxu0 %v1571
        %1778 = vmatprep.subr.mxu0 %v1607
        %1779 = vmatpush1.msra.mxu0 %v1606
        %1780 = vmatprep.subr.mxu0 0.0
        %1781 = vmatpush1.msra.mxu0 0.0
        %1782 = vmatprep.subr.mxu0 0.0
        %1783 = vmatpush1.msra.mxu0 0.0
        %1784 = vmatprep.subr.mxu0 0.0
        %1785 = vmatpush1.msra.mxu0 0.0
        %1786 = vmatprep.subr.mxu0 0.0
        %1787 = vmatpush1.msra.mxu0 0.0
        %1788 = vmatprep.subr.mxu0 0.0
        %1789 = vmatpush1.msra.mxu0 0.0
        %1790 = vmatprep.subr.mxu0 0.0
        %1791 = vmatpush1.msra.mxu0 0.0
        %1792 = vmatprep.subr.mxu0 0.0
        %1793 = vmatpush1.msra.mxu0 0.0
        %1794 = vmatprep.subr.mxu0 0.0
        %1795 = vmatpush1.msra.mxu0 0.0
        %1796 = vmatprep.subr.mxu0 0.0
        %1797 = vmatpush1.msra.mxu0 0.0
        %1798 = vmatprep.subr.mxu0 0.0
        %1799 = vmatpush1.msra.mxu0 0.0
        %1800 = vmatprep.subr.mxu0 0.0
        %1801 = vmatpush1.msra.mxu0 0.0
        %1802 = vmatprep.subr.mxu0 0.0
        %1803 = vmatpush1.msra.mxu0 0.0
        %1804 = vmatprep.subr.mxu0 0.0
        %1805 = vmatpush1.msra.mxu0 0.0
        %1806 = vmatprep.subr.mxu0 0.0
        %1807 = vmatpush1.msra.mxu0 0.0
        %1808 = vmatprep.subr.mxu0 0.0
        %1809 = vmatpush1.msra.mxu0 0.0
        %1810 = vmatprep.subr.mxu0 0.0
        %1811 = vmatpush1.msra.mxu0 0.0
        %1812 = vmatprep.subr.mxu0 0.0
        %1813 = vmatpush1.msra.mxu0 0.0
        %1814 = vmatprep.subr.mxu0 0.0
        %1815 = vmatpush1.msra.mxu0 0.0
        %1816 = vmatprep.subr.mxu0 0.0
        %1817 = vmatpush1.msra.mxu0 0.0
        %1818 = vmatprep.subr.mxu0 0.0
        %1819 = vmatpush1.msra.mxu0 0.0
        %1820 = vmatprep.subr.mxu0 0.0
        %1821 = vmatpush1.msra.mxu0 0.0
        %1822 = vmatprep.subr.mxu0 0.0
        %1823 = vmatpush1.msra.mxu0 0.0
        %1824 = vmatprep.subr.mxu0 0.0
        %1825 = vmatpush1.msra.mxu0 0.0
        %1826 = vmatprep.subr.mxu0 0.0
        %1827 = vmatpush1.msra.mxu0 0.0
        %1828 = vmatprep.subr.mxu0 0.0
        %1829 = vmatpush1.msra.mxu0 0.0
        %1830 = vmatprep.subr.mxu0 0.0
        %1831 = vmatpush1.msra.mxu0 0.0
        %1832 = vmatprep.subr.mxu0 0.0
        %1833 = vmatpush1.msra.mxu0 0.0
        %1834 = vmatprep.mubr.f32.mxu0 0.0
        %1835 = vmatmul.mubr.f32.gmra.mrb[0].mxu0 %v1626
        %v1836 = vpop.f32.mrb[0].mxu0
        %v1837 = vadd.f32 %v1624, %v1836
        %v1838 = vpop.f32.mrb[0].mxu0
        %v1839 = vadd.f32 %v1624, %v1838
        %1840 = vdwg.mxu0
        %1841 = vmatprep.subr.mxu0 %v1460
        %1842 = vmatpush1.msra.mxu0 %v1459
        %1843 = vmatprep.subr.mxu0 %v1504
        %1844 = vmatpush1.msra.mxu0 %v1503
        %1845 = vmatprep.subr.mxu0 %v1539
        %1846 = vmatpush1.msra.mxu0 %v1538
        %1847 = vmatprep.subr.mxu0 %v1574
        %1848 = vmatpush1.msra.mxu0 %v1573
        %1849 = vmatprep.subr.mxu0 %v1609
        %1850 = vmatpush1.msra.mxu0 %v1608
        %1851 = vmatprep.subr.mxu0 0.0
        %1852 = vmatpush1.msra.mxu0 0.0
        %1853 = vmatprep.subr.mxu0 0.0
        %1854 = vmatpush1.msra.mxu0 0.0
        %1855 = vmatprep.subr.mxu0 0.0
        %1856 = vmatpush1.msra.mxu0 0.0
        %1857 = vmatprep.subr.mxu0 0.0
        %1858 = vmatpush1.msra.mxu0 0.0
        %1859 = vmatprep.subr.mxu0 0.0
        %1860 = vmatpush1.msra.mxu0 0.0
        %1861 = vmatprep.subr.mxu0 0.0
        %1862 = vmatpush1.msra.mxu0 0.0
        %1863 = vmatprep.subr.mxu0 0.0
        %1864 = vmatpush1.msra.mxu0 0.0
        %1865 = vmatprep.subr.mxu0 0.0
        %1866 = vmatpush1.msra.mxu0 0.0
        %1867 = vmatprep.subr.mxu0 0.0
        %1868 = vmatpush1.msra.mxu0 0.0
        %1869 = vmatprep.subr.mxu0 0.0
        %1870 = vmatpush1.msra.mxu0 0.0
        %1871 = vmatprep.subr.mxu0 0.0
        %1872 = vmatpush1.msra.mxu0 0.0
        %1873 = vmatprep.subr.mxu0 0.0
        %1874 = vmatpush1.msra.mxu0 0.0
        %1875 = vmatprep.subr.mxu0 0.0
        %1876 = vmatpush1.msra.mxu0 0.0
        %1877 = vmatprep.subr.mxu0 0.0
        %1878 = vmatpush1.msra.mxu0 0.0
        %1879 = vmatprep.subr.mxu0 0.0
        %1880 = vmatpush1.msra.mxu0 0.0
        %1881 = vmatprep.subr.mxu0 0.0
        %1882 = vmatpush1.msra.mxu0 0.0
        %1883 = vmatprep.subr.mxu0 0.0
        %1884 = vmatpush1.msra.mxu0 0.0
        %1885 = vmatprep.subr.mxu0 0.0
        %1886 = vmatpush1.msra.mxu0 0.0
        %1887 = vmatprep.subr.mxu0 0.0
        %1888 = vmatpush1.msra.mxu0 0.0
        %1889 = vmatprep.subr.mxu0 0.0
        %1890 = vmatpush1.msra.mxu0 0.0
        %1891 = vmatprep.subr.mxu0 0.0
        %1892 = vmatpush1.msra.mxu0 0.0
        %1893 = vmatprep.subr.mxu0 0.0
        %1894 = vmatpush1.msra.mxu0 0.0
        %1895 = vmatprep.subr.mxu0 0.0
        %1896 = vmatpush1.msra.mxu0 0.0
        %1897 = vmatprep.subr.mxu0 0.0
        %1898 = vmatpush1.msra.mxu0 0.0
        %1899 = vmatprep.subr.mxu0 0.0
        %1900 = vmatpush1.msra.mxu0 0.0
        %1901 = vmatprep.subr.mxu0 0.0
        %1902 = vmatpush1.msra.mxu0 0.0
        %1903 = vmatprep.subr.mxu0 0.0
        %1904 = vmatpush1.msra.mxu0 0.0
        %1905 = vmatprep.mubr.f32.mxu0 0.0
        %1906 = vmatmul.mubr.f32.gmra.mrb[0].mxu0 %v1626
        %v1907 = vpop.f32.mrb[0].mxu0
        %v1908 = vadd.f32 %v1624, %v1907
        %v1909 = vpop.f32.mrb[0].mxu0
        %v1910 = vadd.f32 %v1624, %v1909
        %1911 = vdwg.mxu0
        %1912 = vmatprep.subr.mxu0 0.0
        %1913 = vmatpush1.msra.mxu0 %v1461
        %1914 = vmatprep.subr.mxu0 0.0
        %1915 = vmatpush1.msra.mxu0 %v1496
        %1916 = vmatprep.subr.mxu0 0.0
        %1917 = vmatpush1.msra.mxu0 %v1531
        %1918 = vmatprep.subr.mxu0 0.0
        %1919 = vmatpush1.msra.mxu0 %v1566
        %1920 = vmatprep.subr.mxu0 0.0
        %1921 = vmatpush1.msra.mxu0 %v1601
        %1922 = vmatprep.subr.mxu0 0.0
        %1923 = vmatpush1.msra.mxu0 0.0
        %1924 = vmatprep.subr.mxu0 0.0
        %1925 = vmatpush1.msra.mxu0 0.0
        %1926 = vmatprep.subr.mxu0 0.0
        %1927 = vmatpush1.msra.mxu0 0.0
        %1928 = vmatprep.subr.mxu0 0.0
        %1929 = vmatpush1.msra.mxu0 0.0
        %1930 = vmatprep.subr.mxu0 0.0
        %1931 = vmatpush1.msra.mxu0 0.0
        %1932 = vmatprep.subr.mxu0 0.0
        %1933 = vmatpush1.msra.mxu0 0.0
        %1934 = vmatprep.subr.mxu0 0.0
        %1935 = vmatpush1.msra.mxu0 0.0
        %1936 = vmatprep.subr.mxu0 0.0
        %1937 = vmatpush1.msra.mxu0 0.0
        %1938 = vmatprep.subr.mxu0 0.0
        %1939 = vmatpush1.msra.mxu0 0.0
        %1940 = vmatprep.subr.mxu0 0.0
        %1941 = vmatpush1.msra.mxu0 0.0
        %1942 = vmatprep.subr.mxu0 0.0
        %1943 = vmatpush1.msra.mxu0 0.0
        %1944 = vmatprep.subr.mxu0 0.0
        %1945 = vmatpush1.msra.mxu0 0.0
        %1946 = vmatprep.subr.mxu0 0.0
        %1947 = vmatpush1.msra.mxu0 0.0
        %1948 = vmatprep.subr.mxu0 0.0
        %1949 = vmatpush1.msra.mxu0 0.0
        %1950 = vmatprep.subr.mxu0 0.0
        %1951 = vmatpush1.msra.mxu0 0.0
        %1952 = vmatprep.subr.mxu0 0.0
        %1953 = vmatpush1.msra.mxu0 0.0
        %1954 = vmatprep.subr.mxu0 0.0
        %1955 = vmatpush1.msra.mxu0 0.0
        %1956 = vmatprep.subr.mxu0 0.0
        %1957 = vmatpush1.msra.mxu0 0.0
        %1958 = vmatprep.subr.mxu0 0.0
        %1959 = vmatpush1.msra.mxu0 0.0
        %1960 = vmatprep.subr.mxu0 0.0
        %1961 = vmatpush1.msra.mxu0 0.0
        %1962 = vmatprep.subr.mxu0 0.0
        %1963 = vmatpush1.msra.mxu0 0.0
        %1964 = vmatprep.subr.mxu0 0.0
        %1965 = vmatpush1.msra.mxu0 0.0
        %1966 = vmatprep.subr.mxu0 0.0
        %1967 = vmatpush1.msra.mxu0 0.0
        %1968 = vmatprep.subr.mxu0 0.0
        %1969 = vmatpush1.msra.mxu0 0.0
        %1970 = vmatprep.subr.mxu0 0.0
        %1971 = vmatpush1.msra.mxu0 0.0
        %1972 = vmatprep.subr.mxu0 0.0
        %1973 = vmatpush1.msra.mxu0 0.0
        %1974 = vmatprep.subr.mxu0 0.0
        %1975 = vmatpush1.msra.mxu0 0.0
        %1976 = vmatprep.mubr.f32.mxu0 0.0
        %1977 = vmatmul.mubr.f32.gmra.mrb[0].mxu0 %v1626
        %v1978 = vpop.f32.mrb[0].mxu0
        %v1979 = vadd.f32 %v1624, %v1978
        %v1980 = vpop.f32.mrb[0].mxu0
        %1981 = vdwg.mxu0
        %vm1982 = vcmp.ge.f32.partialorder %v1695, 0.0
        %vm1983 = vcmp.ge.f32.partialorder %v1697, 0.0
        %vm1984 = vcmp.ge.f32.partialorder %v1766, 0.0
        %vm1985 = vcmp.ge.f32.partialorder %v1768, 0.0
        %vm1986 = vcmp.ge.f32.partialorder %v1837, 0.0
        %vm1987 = vcmp.ge.f32.partialorder %v1839, 0.0
        %vm1988 = vcmp.ge.f32.partialorder %v1908, 0.0
        %vm1989 = vcmp.ge.f32.partialorder %v1910, 0.0
        %vm1990 = vcmp.ge.f32.partialorder %v1979, 0.0
        %v1991 = vmul.f32 %v1695, 0.01
        %v1992 = vmul.f32 %v1697, 0.01
        %v1993 = vmul.f32 %v1766, 0.01
        %v1994 = vmul.f32 %v1768, 0.01
        %v1995 = vmul.f32 %v1837, 0.01
        %v1996 = vmul.f32 %v1839, 0.01
        %v1997 = vmul.f32 %v1908, 0.01
        %v1998 = vmul.f32 %v1910, 0.01
        %v1999 = vmul.f32 %v1979, 0.01
        %v2000 = vsel %vm1982, %v1695, %v1991
        %v2001 = vsel %vm1983, %v1697, %v1992
        %v2002 = vsel %vm1984, %v1766, %v1993
        %v2003 = vsel %vm1985, %v1768, %v1994
        %v2004 = vsel %vm1986, %v1837, %v1995
        %v2005 = vsel %vm1987, %v1839, %v1996
        %v2006 = vsel %vm1988, %v1908, %v1997
        %v2007 = vsel %vm1989, %v1910, %v1998
        %v2008 = vsel %vm1990, %v1979, %v1999
        %2018 = vrot.lane.b32.xlu0 %v2000, 127
        %v2019 = vpop.permute.xlu0 %2018
        %2020 = vrot.lane.b32.xlu0 %v2001, 127
        %v2021 = vpop.permute.xlu0 %2020
        %2022 = vrot.lane.b32.xlu0 %v2002, 127
        %v2023 = vpop.permute.xlu0 %2022
        %2024 = vrot.lane.b32.xlu0 %v2003, 127
        %v2025 = vpop.permute.xlu0 %2024
        %2026 = vrot.lane.b32.xlu0 %v2004, 127
        %v2027 = vpop.permute.xlu0 %2026
        %2028 = vrot.lane.b32.xlu0 %v2005, 127
        %v2029 = vpop.permute.xlu0 %2028
        %2030 = vrot.lane.b32.xlu0 %v2006, 127
        %v2031 = vpop.permute.xlu0 %2030
        %2032 = vrot.lane.b32.xlu0 %v2007, 127
        %v2033 = vpop.permute.xlu0 %2032
        %2034 = vrot.lane.b32.xlu0 %v2008, 127
        %v2035 = vpop.permute.xlu0 %2034
        %v2036 = vsel %vm407, %v2019, %v2021
        %v2037 = vsel %vm407, %v2021, %v2023
        %v2038 = vsel %vm407, %v2023, %v2025
        %v2039 = vsel %vm407, %v2025, %v2027
        %v2040 = vsel %vm407, %v2027, %v2029
        %v2041 = vsel %vm407, %v2029, %v2031
        %v2042 = vsel %vm407, %v2031, %v2033
        %v2043 = vsel %vm407, %v2033, %v2035
        %2053 = vrot.lane.b32.xlu0 %v2000, 126
        %v2054 = vpop.permute.xlu0 %2053
        %2055 = vrot.lane.b32.xlu0 %v2001, 126
        %v2056 = vpop.permute.xlu0 %2055
        %2057 = vrot.lane.b32.xlu0 %v2002, 126
        %v2058 = vpop.permute.xlu0 %2057
        %2059 = vrot.lane.b32.xlu0 %v2003, 126
        %v2060 = vpop.permute.xlu0 %2059
        %2061 = vrot.lane.b32.xlu0 %v2004, 126
        %v2062 = vpop.permute.xlu0 %2061
        %2063 = vrot.lane.b32.xlu0 %v2005, 126
        %v2064 = vpop.permute.xlu0 %2063
        %2065 = vrot.lane.b32.xlu0 %v2006, 126
        %v2066 = vpop.permute.xlu0 %2065
        %2067 = vrot.lane.b32.xlu0 %v2007, 126
        %v2068 = vpop.permute.xlu0 %2067
        %2069 = vrot.lane.b32.xlu0 %v2008, 126
        %v2070 = vpop.permute.xlu0 %2069
        %v2071 = vsel %vm443, %v2054, %v2056
        %v2072 = vsel %vm443, %v2056, %v2058
        %v2073 = vsel %vm443, %v2058, %v2060
        %v2074 = vsel %vm443, %v2060, %v2062
        %v2075 = vsel %vm443, %v2062, %v2064
        %v2076 = vsel %vm443, %v2064, %v2066
        %v2077 = vsel %vm443, %v2066, %v2068
        %v2078 = vsel %vm443, %v2068, %v2070
        %2088 = vrot.lane.b32.xlu0 %v2000, 125
        %v2089 = vpop.permute.xlu0 %2088
        %2090 = vrot.lane.b32.xlu0 %v2001, 125
        %v2091 = vpop.permute.xlu0 %2090
        %2092 = vrot.lane.b32.xlu0 %v2002, 125
        %v2093 = vpop.permute.xlu0 %2092
        %2094 = vrot.lane.b32.xlu0 %v2003, 125
        %v2095 = vpop.permute.xlu0 %2094
        %2096 = vrot.lane.b32.xlu0 %v2004, 125
        %v2097 = vpop.permute.xlu0 %2096
        %2098 = vrot.lane.b32.xlu0 %v2005, 125
        %v2099 = vpop.permute.xlu0 %2098
        %2100 = vrot.lane.b32.xlu0 %v2006, 125
        %v2101 = vpop.permute.xlu0 %2100
        %2102 = vrot.lane.b32.xlu0 %v2007, 125
        %v2103 = vpop.permute.xlu0 %2102
        %2104 = vrot.lane.b32.xlu0 %v2008, 125
        %v2105 = vpop.permute.xlu0 %2104
        %v2106 = vsel %vm479, %v2089, %v2091
        %v2107 = vsel %vm479, %v2091, %v2093
        %v2108 = vsel %vm479, %v2093, %v2095
        %v2109 = vsel %vm479, %v2095, %v2097
        %v2110 = vsel %vm479, %v2097, %v2099
        %v2111 = vsel %vm479, %v2099, %v2101
        %v2112 = vsel %vm479, %v2101, %v2103
        %v2113 = vsel %vm479, %v2103, %v2105
        %2123 = vrot.lane.b32.xlu0 %v2000, 124
        %v2124 = vpop.permute.xlu0 %2123
        %2125 = vrot.lane.b32.xlu0 %v2001, 124
        %v2126 = vpop.permute.xlu0 %2125
        %2127 = vrot.lane.b32.xlu0 %v2002, 124
        %v2128 = vpop.permute.xlu0 %2127
        %2129 = vrot.lane.b32.xlu0 %v2003, 124
        %v2130 = vpop.permute.xlu0 %2129
        %2131 = vrot.lane.b32.xlu0 %v2004, 124
        %v2132 = vpop.permute.xlu0 %2131
        %2133 = vrot.lane.b32.xlu0 %v2005, 124
        %v2134 = vpop.permute.xlu0 %2133
        %2135 = vrot.lane.b32.xlu0 %v2006, 124
        %v2136 = vpop.permute.xlu0 %2135
        %2137 = vrot.lane.b32.xlu0 %v2007, 124
        %v2138 = vpop.permute.xlu0 %2137
        %2139 = vrot.lane.b32.xlu0 %v2008, 124
        %v2140 = vpop.permute.xlu0 %2139
        %v2141 = vsel %vm515, %v2124, %v2126
        %v2142 = vsel %vm515, %v2126, %v2128
        %v2143 = vsel %vm515, %v2128, %v2130
        %v2144 = vsel %vm515, %v2130, %v2132
        %v2145 = vsel %vm515, %v2132, %v2134
        %v2146 = vsel %vm515, %v2134, %v2136
        %v2147 = vsel %vm515, %v2136, %v2138
        %v2148 = vsel %vm515, %v2138, %v2140
        %s2158 = scalar_lea.vmem [#allocation7], 24
        %v2159 = vld [vmem:[%s2158] sm:$0xff]
        %2161 = vset.pattern.permute.xlu0 40
        %2162 = vperm.xlu0 %2161, %v2159
        %v2163 = vpop.permute.xlu0 %2162
        %v2165 = vsel %vm539, %v2159, 0
        %2167 = vmatprep.subr.mxu0 %v2001
        %2168 = vmatpush1.msra.mxu0 %v2000
        %2169 = vmatprep.subr.mxu0 %v2037
        %2170 = vmatpush1.msra.mxu0 %v2036
        %2171 = vmatprep.subr.mxu0 %v2072
        %2172 = vmatpush1.msra.mxu0 %v2071
        %2173 = vmatprep.subr.mxu0 %v2107
        %2174 = vmatpush1.msra.mxu0 %v2106
        %2175 = vmatprep.subr.mxu0 %v2142
        %2176 = vmatpush1.msra.mxu0 %v2141
        %2177 = vmatprep.subr.mxu0 0.0
        %2178 = vmatpush1.msra.mxu0 0.0
        %2179 = vmatprep.subr.mxu0 0.0
        %2180 = vmatpush1.msra.mxu0 0.0
        %2181 = vmatprep.subr.mxu0 0.0
        %2182 = vmatpush1.msra.mxu0 0.0
        %2183 = vmatprep.subr.mxu0 0.0
        %2184 = vmatpush1.msra.mxu0 0.0
        %2185 = vmatprep.subr.mxu0 0.0
        %2186 = vmatpush1.msra.mxu0 0.0
        %2187 = vmatprep.subr.mxu0 0.0
        %2188 = vmatpush1.msra.mxu0 0.0
        %2189 = vmatprep.subr.mxu0 0.0
        %2190 = vmatpush1.msra.mxu0 0.0
        %2191 = vmatprep.subr.mxu0 0.0
        %2192 = vmatpush1.msra.mxu0 0.0
        %2193 = vmatprep.subr.mxu0 0.0
        %2194 = vmatpush1.msra.mxu0 0.0
        %2195 = vmatprep.subr.mxu0 0.0
        %2196 = vmatpush1.msra.mxu0 0.0
        %2197 = vmatprep.subr.mxu0 0.0
        %2198 = vmatpush1.msra.mxu0 0.0
        %2199 = vmatprep.subr.mxu0 0.0
        %2200 = vmatpush1.msra.mxu0 0.0
        %2201 = vmatprep.subr.mxu0 0.0
        %2202 = vmatpush1.msra.mxu0 0.0
        %2203 = vmatprep.subr.mxu0 0.0
        %2204 = vmatpush1.msra.mxu0 0.0
        %2205 = vmatprep.subr.mxu0 0.0
        %2206 = vmatpush1.msra.mxu0 0.0
        %2207 = vmatprep.subr.mxu0 0.0
        %2208 = vmatpush1.msra.mxu0 0.0
        %2209 = vmatprep.subr.mxu0 0.0
        %2210 = vmatpush1.msra.mxu0 0.0
        %2211 = vmatprep.subr.mxu0 0.0
        %2212 = vmatpush1.msra.mxu0 0.0
        %2213 = vmatprep.subr.mxu0 0.0
        %2214 = vmatpush1.msra.mxu0 0.0
        %2215 = vmatprep.subr.mxu0 0.0
        %2216 = vmatpush1.msra.mxu0 0.0
        %2217 = vmatprep.subr.mxu0 0.0
        %2218 = vmatpush1.msra.mxu0 0.0
        %2219 = vmatprep.subr.mxu0 0.0
        %2220 = vmatpush1.msra.mxu0 0.0
        %2221 = vmatprep.subr.mxu0 0.0
        %2222 = vmatpush1.msra.mxu0 0.0
        %2223 = vmatprep.subr.mxu0 0.0
        %2224 = vmatpush1.msra.mxu0 0.0
        %2225 = vmatprep.subr.mxu0 0.0
        %2226 = vmatpush1.msra.mxu0 0.0
        %2227 = vmatprep.subr.mxu0 0.0
        %2228 = vmatpush1.msra.mxu0 0.0
        %2229 = vmatprep.subr.mxu0 0.0
        %2230 = vmatpush1.msra.mxu0 0.0
        %2231 = vmatprep.mubr.f32.mxu0 0.0
        %2232 = vmatmul.mubr.f32.gmra.mrb[0].mxu0 %v2165
        %v2233 = vpop.f32.mrb[0].mxu0
        %v2234 = vadd.f32 %v2163, %v2233
        %v2235 = vpop.f32.mrb[0].mxu0
        %v2236 = vadd.f32 %v2163, %v2235
        %2237 = vdwg.mxu0
        %2238 = vmatprep.subr.mxu0 %v2003
        %2239 = vmatpush1.msra.mxu0 %v2002
        %2240 = vmatprep.subr.mxu0 %v2039
        %2241 = vmatpush1.msra.mxu0 %v2038
        %2242 = vmatprep.subr.mxu0 %v2074
        %2243 = vmatpush1.msra.mxu0 %v2073
        %2244 = vmatprep.subr.mxu0 %v2109
        %2245 = vmatpush1.msra.mxu0 %v2108
        %2246 = vmatprep.subr.mxu0 %v2144
        %2247 = vmatpush1.msra.mxu0 %v2143
        %2248 = vmatprep.subr.mxu0 0.0
        %2249 = vmatpush1.msra.mxu0 0.0
        %2250 = vmatprep.subr.mxu0 0.0
        %2251 = vmatpush1.msra.mxu0 0.0
        %2252 = vmatprep.subr.mxu0 0.0
        %2253 = vmatpush1.msra.mxu0 0.0
        %2254 = vmatprep.subr.mxu0 0.0
        %2255 = vmatpush1.msra.mxu0 0.0
        %2256 = vmatprep.subr.mxu0 0.0
        %2257 = vmatpush1.msra.mxu0 0.0
        %2258 = vmatprep.subr.mxu0 0.0
        %2259 = vmatpush1.msra.mxu0 0.0
        %2260 = vmatprep.subr.mxu0 0.0
        %2261 = vmatpush1.msra.mxu0 0.0
        %2262 = vmatprep.subr.mxu0 0.0
        %2263 = vmatpush1.msra.mxu0 0.0
        %2264 = vmatprep.subr.mxu0 0.0
        %2265 = vmatpush1.msra.mxu0 0.0
        %2266 = vmatprep.subr.mxu0 0.0
        %2267 = vmatpush1.msra.mxu0 0.0
        %2268 = vmatprep.subr.mxu0 0.0
        %2269 = vmatpush1.msra.mxu0 0.0
        %2270 = vmatprep.subr.mxu0 0.0
        %2271 = vmatpush1.msra.mxu0 0.0
        %2272 = vmatprep.subr.mxu0 0.0
        %2273 = vmatpush1.msra.mxu0 0.0
        %2274 = vmatprep.subr.mxu0 0.0
        %2275 = vmatpush1.msra.mxu0 0.0
        %2276 = vmatprep.subr.mxu0 0.0
        %2277 = vmatpush1.msra.mxu0 0.0
        %2278 = vmatprep.subr.mxu0 0.0
        %2279 = vmatpush1.msra.mxu0 0.0
        %2280 = vmatprep.subr.mxu0 0.0
        %2281 = vmatpush1.msra.mxu0 0.0
        %2282 = vmatprep.subr.mxu0 0.0
        %2283 = vmatpush1.msra.mxu0 0.0
        %2284 = vmatprep.subr.mxu0 0.0
        %2285 = vmatpush1.msra.mxu0 0.0
        %2286 = vmatprep.subr.mxu0 0.0
        %2287 = vmatpush1.msra.mxu0 0.0
        %2288 = vmatprep.subr.mxu0 0.0
        %2289 = vmatpush1.msra.mxu0 0.0
        %2290 = vmatprep.subr.mxu0 0.0
        %2291 = vmatpush1.msra.mxu0 0.0
        %2292 = vmatprep.subr.mxu0 0.0
        %2293 = vmatpush1.msra.mxu0 0.0
        %2294 = vmatprep.subr.mxu0 0.0
        %2295 = vmatpush1.msra.mxu0 0.0
        %2296 = vmatprep.subr.mxu0 0.0
        %2297 = vmatpush1.msra.mxu0 0.0
        %2298 = vmatprep.subr.mxu0 0.0
        %2299 = vmatpush1.msra.mxu0 0.0
        %2300 = vmatprep.subr.mxu0 0.0
        %2301 = vmatpush1.msra.mxu0 0.0
        %2302 = vmatprep.mubr.f32.mxu0 0.0
        %2303 = vmatmul.mubr.f32.gmra.mrb[0].mxu0 %v2165
        %v2304 = vpop.f32.mrb[0].mxu0
        %v2305 = vadd.f32 %v2163, %v2304
        %v2306 = vpop.f32.mrb[0].mxu0
        %v2307 = vadd.f32 %v2163, %v2306
        %2308 = vdwg.mxu0
        %2309 = vmatprep.subr.mxu0 %v2005
        %2310 = vmatpush1.msra.mxu0 %v2004
        %2311 = vmatprep.subr.mxu0 %v2041
        %2312 = vmatpush1.msra.mxu0 %v2040
        %2313 = vmatprep.subr.mxu0 %v2076
        %2314 = vmatpush1.msra.mxu0 %v2075
        %2315 = vmatprep.subr.mxu0 %v2111
        %2316 = vmatpush1.msra.mxu0 %v2110
        %2317 = vmatprep.subr.mxu0 %v2146
        %2318 = vmatpush1.msra.mxu0 %v2145
        %2319 = vmatprep.subr.mxu0 0.0
        %2320 = vmatpush1.msra.mxu0 0.0
        %2321 = vmatprep.subr.mxu0 0.0
        %2322 = vmatpush1.msra.mxu0 0.0
        %2323 = vmatprep.subr.mxu0 0.0
        %2324 = vmatpush1.msra.mxu0 0.0
        %2325 = vmatprep.subr.mxu0 0.0
        %2326 = vmatpush1.msra.mxu0 0.0
        %2327 = vmatprep.subr.mxu0 0.0
        %2328 = vmatpush1.msra.mxu0 0.0
        %2329 = vmatprep.subr.mxu0 0.0
        %2330 = vmatpush1.msra.mxu0 0.0
        %2331 = vmatprep.subr.mxu0 0.0
        %2332 = vmatpush1.msra.mxu0 0.0
        %2333 = vmatprep.subr.mxu0 0.0
        %2334 = vmatpush1.msra.mxu0 0.0
        %2335 = vmatprep.subr.mxu0 0.0
        %2336 = vmatpush1.msra.mxu0 0.0
        %2337 = vmatprep.subr.mxu0 0.0
        %2338 = vmatpush1.msra.mxu0 0.0
        %2339 = vmatprep.subr.mxu0 0.0
        %2340 = vmatpush1.msra.mxu0 0.0
        %2341 = vmatprep.subr.mxu0 0.0
        %2342 = vmatpush1.msra.mxu0 0.0
        %2343 = vmatprep.subr.mxu0 0.0
        %2344 = vmatpush1.msra.mxu0 0.0
        %2345 = vmatprep.subr.mxu0 0.0
        %2346 = vmatpush1.msra.mxu0 0.0
        %2347 = vmatprep.subr.mxu0 0.0
        %2348 = vmatpush1.msra.mxu0 0.0
        %2349 = vmatprep.subr.mxu0 0.0
        %2350 = vmatpush1.msra.mxu0 0.0
        %2351 = vmatprep.subr.mxu0 0.0
        %2352 = vmatpush1.msra.mxu0 0.0
        %2353 = vmatprep.subr.mxu0 0.0
        %2354 = vmatpush1.msra.mxu0 0.0
        %2355 = vmatprep.subr.mxu0 0.0
        %2356 = vmatpush1.msra.mxu0 0.0
        %2357 = vmatprep.subr.mxu0 0.0
        %2358 = vmatpush1.msra.mxu0 0.0
        %2359 = vmatprep.subr.mxu0 0.0
        %2360 = vmatpush1.msra.mxu0 0.0
        %2361 = vmatprep.subr.mxu0 0.0
        %2362 = vmatpush1.msra.mxu0 0.0
        %2363 = vmatprep.subr.mxu0 0.0
        %2364 = vmatpush1.msra.mxu0 0.0
        %2365 = vmatprep.subr.mxu0 0.0
        %2366 = vmatpush1.msra.mxu0 0.0
        %2367 = vmatprep.subr.mxu0 0.0
        %2368 = vmatpush1.msra.mxu0 0.0
        %2369 = vmatprep.subr.mxu0 0.0
        %2370 = vmatpush1.msra.mxu0 0.0
        %2371 = vmatprep.subr.mxu0 0.0
        %2372 = vmatpush1.msra.mxu0 0.0
        %2373 = vmatprep.mubr.f32.mxu0 0.0
        %2374 = vmatmul.mubr.f32.gmra.mrb[0].mxu0 %v2165
        %v2375 = vpop.f32.mrb[0].mxu0
        %v2376 = vadd.f32 %v2163, %v2375
        %v2377 = vpop.f32.mrb[0].mxu0
        %v2378 = vadd.f32 %v2163, %v2377
        %2379 = vdwg.mxu0
        %2380 = vmatprep.subr.mxu0 %v2007
        %2381 = vmatpush1.msra.mxu0 %v2006
        %2382 = vmatprep.subr.mxu0 %v2043
        %2383 = vmatpush1.msra.mxu0 %v2042
        %2384 = vmatprep.subr.mxu0 %v2078
        %2385 = vmatpush1.msra.mxu0 %v2077
        %2386 = vmatprep.subr.mxu0 %v2113
        %2387 = vmatpush1.msra.mxu0 %v2112
        %2388 = vmatprep.subr.mxu0 %v2148
        %2389 = vmatpush1.msra.mxu0 %v2147
        %2390 = vmatprep.subr.mxu0 0.0
        %2391 = vmatpush1.msra.mxu0 0.0
        %2392 = vmatprep.subr.mxu0 0.0
        %2393 = vmatpush1.msra.mxu0 0.0
        %2394 = vmatprep.subr.mxu0 0.0
        %2395 = vmatpush1.msra.mxu0 0.0
        %2396 = vmatprep.subr.mxu0 0.0
        %2397 = vmatpush1.msra.mxu0 0.0
        %2398 = vmatprep.subr.mxu0 0.0
        %2399 = vmatpush1.msra.mxu0 0.0
        %2400 = vmatprep.subr.mxu0 0.0
        %2401 = vmatpush1.msra.mxu0 0.0
        %2402 = vmatprep.subr.mxu0 0.0
        %2403 = vmatpush1.msra.mxu0 0.0
        %2404 = vmatprep.subr.mxu0 0.0
        %2405 = vmatpush1.msra.mxu0 0.0
        %2406 = vmatprep.subr.mxu0 0.0
        %2407 = vmatpush1.msra.mxu0 0.0
        %2408 = vmatprep.subr.mxu0 0.0
        %2409 = vmatpush1.msra.mxu0 0.0
        %2410 = vmatprep.subr.mxu0 0.0
        %2411 = vmatpush1.msra.mxu0 0.0
        %2412 = vmatprep.subr.mxu0 0.0
        %2413 = vmatpush1.msra.mxu0 0.0
        %2414 = vmatprep.subr.mxu0 0.0
        %2415 = vmatpush1.msra.mxu0 0.0
        %2416 = vmatprep.subr.mxu0 0.0
        %2417 = vmatpush1.msra.mxu0 0.0
        %2418 = vmatprep.subr.mxu0 0.0
        %2419 = vmatpush1.msra.mxu0 0.0
        %2420 = vmatprep.subr.mxu0 0.0
        %2421 = vmatpush1.msra.mxu0 0.0
        %2422 = vmatprep.subr.mxu0 0.0
        %2423 = vmatpush1.msra.mxu0 0.0
        %2424 = vmatprep.subr.mxu0 0.0
        %2425 = vmatpush1.msra.mxu0 0.0
        %2426 = vmatprep.subr.mxu0 0.0
        %2427 = vmatpush1.msra.mxu0 0.0
        %2428 = vmatprep.subr.mxu0 0.0
        %2429 = vmatpush1.msra.mxu0 0.0
        %2430 = vmatprep.subr.mxu0 0.0
        %2431 = vmatpush1.msra.mxu0 0.0
        %2432 = vmatprep.subr.mxu0 0.0
        %2433 = vmatpush1.msra.mxu0 0.0
        %2434 = vmatprep.subr.mxu0 0.0
        %2435 = vmatpush1.msra.mxu0 0.0
        %2436 = vmatprep.subr.mxu0 0.0
        %2437 = vmatpush1.msra.mxu0 0.0
        %2438 = vmatprep.subr.mxu0 0.0
        %2439 = vmatpush1.msra.mxu0 0.0
        %2440 = vmatprep.subr.mxu0 0.0
        %2441 = vmatpush1.msra.mxu0 0.0
        %2442 = vmatprep.subr.mxu0 0.0
        %2443 = vmatpush1.msra.mxu0 0.0
        %2444 = vmatprep.mubr.f32.mxu0 0.0
        %2445 = vmatmul.mubr.f32.gmra.mrb[0].mxu0 %v2165
        %v2446 = vpop.f32.mrb[0].mxu0
        %v2447 = vadd.f32 %v2163, %v2446
        %v2448 = vpop.f32.mrb[0].mxu0
        %v2449 = vadd.f32 %v2163, %v2448
        %2450 = vdwg.mxu0
        %2451 = vmatprep.subr.mxu0 0.0
        %2452 = vmatpush1.msra.mxu0 %v2008
        %2453 = vmatprep.subr.mxu0 0.0
        %2454 = vmatpush1.msra.mxu0 %v2035
        %2455 = vmatprep.subr.mxu0 0.0
        %2456 = vmatpush1.msra.mxu0 %v2070
        %2457 = vmatprep.subr.mxu0 0.0
        %2458 = vmatpush1.msra.mxu0 %v2105
        %2459 = vmatprep.subr.mxu0 0.0
        %2460 = vmatpush1.msra.mxu0 %v2140
        %2461 = vmatprep.subr.mxu0 0.0
        %2462 = vmatpush1.msra.mxu0 0.0
        %2463 = vmatprep.subr.mxu0 0.0
        %2464 = vmatpush1.msra.mxu0 0.0
        %2465 = vmatprep.subr.mxu0 0.0
        %2466 = vmatpush1.msra.mxu0 0.0
        %2467 = vmatprep.subr.mxu0 0.0
        %2468 = vmatpush1.msra.mxu0 0.0
        %2469 = vmatprep.subr.mxu0 0.0
        %2470 = vmatpush1.msra.mxu0 0.0
        %2471 = vmatprep.subr.mxu0 0.0
        %2472 = vmatpush1.msra.mxu0 0.0
        %2473 = vmatprep.subr.mxu0 0.0
        %2474 = vmatpush1.msra.mxu0 0.0
        %2475 = vmatprep.subr.mxu0 0.0
        %2476 = vmatpush1.msra.mxu0 0.0
        %2477 = vmatprep.subr.mxu0 0.0
        %2478 = vmatpush1.msra.mxu0 0.0
        %2479 = vmatprep.subr.mxu0 0.0
        %2480 = vmatpush1.msra.mxu0 0.0
        %2481 = vmatprep.subr.mxu0 0.0
        %2482 = vmatpush1.msra.mxu0 0.0
        %2483 = vmatprep.subr.mxu0 0.0
        %2484 = vmatpush1.msra.mxu0 0.0
        %2485 = vmatprep.subr.mxu0 0.0
        %2486 = vmatpush1.msra.mxu0 0.0
        %2487 = vmatprep.subr.mxu0 0.0
        %2488 = vmatpush1.msra.mxu0 0.0
        %2489 = vmatprep.subr.mxu0 0.0
        %2490 = vmatpush1.msra.mxu0 0.0
        %2491 = vmatprep.subr.mxu0 0.0
        %2492 = vmatpush1.msra.mxu0 0.0
        %2493 = vmatprep.subr.mxu0 0.0
        %2494 = vmatpush1.msra.mxu0 0.0
        %2495 = vmatprep.subr.mxu0 0.0
        %2496 = vmatpush1.msra.mxu0 0.0
        %2497 = vmatprep.subr.mxu0 0.0
        %2498 = vmatpush1.msra.mxu0 0.0
        %2499 = vmatprep.subr.mxu0 0.0
        %2500 = vmatpush1.msra.mxu0 0.0
        %2501 = vmatprep.subr.mxu0 0.0
        %2502 = vmatpush1.msra.mxu0 0.0
        %2503 = vmatprep.subr.mxu0 0.0
        %2504 = vmatpush1.msra.mxu0 0.0
        %2505 = vmatprep.subr.mxu0 0.0
        %2506 = vmatpush1.msra.mxu0 0.0
        %2507 = vmatprep.subr.mxu0 0.0
        %2508 = vmatpush1.msra.mxu0 0.0
        %2509 = vmatprep.subr.mxu0 0.0
        %2510 = vmatpush1.msra.mxu0 0.0
        %2511 = vmatprep.subr.mxu0 0.0
        %2512 = vmatpush1.msra.mxu0 0.0
        %2513 = vmatprep.subr.mxu0 0.0
        %2514 = vmatpush1.msra.mxu0 0.0
        %2515 = vmatprep.mubr.f32.mxu0 0.0
        %2516 = vmatmul.mubr.f32.gmra.mrb[0].mxu0 %v2165
        %v2517 = vpop.f32.mrb[0].mxu0
        %v2518 = vadd.f32 %v2163, %v2517
        %v2519 = vpop.f32.mrb[0].mxu0
        %2520 = vdwg.mxu0
        %vm2521 = vcmp.ge.f32.partialorder %v2234, 0.0
        %vm2522 = vcmp.ge.f32.partialorder %v2236, 0.0
        %vm2523 = vcmp.ge.f32.partialorder %v2305, 0.0
        %vm2524 = vcmp.ge.f32.partialorder %v2307, 0.0
        %vm2525 = vcmp.ge.f32.partialorder %v2376, 0.0
        %vm2526 = vcmp.ge.f32.partialorder %v2378, 0.0
        %vm2527 = vcmp.ge.f32.partialorder %v2447, 0.0
        %vm2528 = vcmp.ge.f32.partialorder %v2449, 0.0
        %vm2529 = vcmp.ge.f32.partialorder %v2518, 0.0
        %v2530 = vmul.f32 %v2234, 0.01
        %v2531 = vmul.f32 %v2236, 0.01
        %v2532 = vmul.f32 %v2305, 0.01
        %v2533 = vmul.f32 %v2307, 0.01
        %v2534 = vmul.f32 %v2376, 0.01
        %v2535 = vmul.f32 %v2378, 0.01
        %v2536 = vmul.f32 %v2447, 0.01
        %v2537 = vmul.f32 %v2449, 0.01
        %v2538 = vmul.f32 %v2518, 0.01
        %v2539 = vsel %vm2521, %v2234, %v2530
        %v2540 = vsel %vm2522, %v2236, %v2531
        %v2541 = vsel %vm2523, %v2305, %v2532
        %v2542 = vsel %vm2524, %v2307, %v2533
        %v2543 = vsel %vm2525, %v2376, %v2534
        %v2544 = vsel %vm2526, %v2378, %v2535
        %v2545 = vsel %vm2527, %v2447, %v2536
        %v2546 = vsel %vm2528, %v2449, %v2537
        %v2547 = vsel %vm2529, %v2518, %v2538
        %2557 = vrot.lane.b32.xlu0 %v2539, 127
        %v2558 = vpop.permute.xlu0 %2557
        %2559 = vrot.lane.b32.xlu0 %v2540, 127
        %v2560 = vpop.permute.xlu0 %2559
        %2561 = vrot.lane.b32.xlu0 %v2541, 127
        %v2562 = vpop.permute.xlu0 %2561
        %2563 = vrot.lane.b32.xlu0 %v2542, 127
        %v2564 = vpop.permute.xlu0 %2563
        %2565 = vrot.lane.b32.xlu0 %v2543, 127
        %v2566 = vpop.permute.xlu0 %2565
        %2567 = vrot.lane.b32.xlu0 %v2544, 127
        %v2568 = vpop.permute.xlu0 %2567
        %2569 = vrot.lane.b32.xlu0 %v2545, 127
        %v2570 = vpop.permute.xlu0 %2569
        %2571 = vrot.lane.b32.xlu0 %v2546, 127
        %v2572 = vpop.permute.xlu0 %2571
        %2573 = vrot.lane.b32.xlu0 %v2547, 127
        %v2574 = vpop.permute.xlu0 %2573
        %v2575 = vsel %vm407, %v2558, %v2560
        %v2576 = vsel %vm407, %v2560, %v2562
        %v2577 = vsel %vm407, %v2562, %v2564
        %v2578 = vsel %vm407, %v2564, %v2566
        %v2579 = vsel %vm407, %v2566, %v2568
        %v2580 = vsel %vm407, %v2568, %v2570
        %v2581 = vsel %vm407, %v2570, %v2572
        %v2582 = vsel %vm407, %v2572, %v2574
        %2591 = vrot.lane.b32.xlu0 %v2539, 126
        %v2592 = vpop.permute.xlu0 %2591
        %2593 = vrot.lane.b32.xlu0 %v2540, 126
        %v2594 = vpop.permute.xlu0 %2593
        %2595 = vrot.lane.b32.xlu0 %v2541, 126
        %v2596 = vpop.permute.xlu0 %2595
        %2597 = vrot.lane.b32.xlu0 %v2542, 126
        %v2598 = vpop.permute.xlu0 %2597
        %2599 = vrot.lane.b32.xlu0 %v2543, 126
        %v2600 = vpop.permute.xlu0 %2599
        %2601 = vrot.lane.b32.xlu0 %v2544, 126
        %v2602 = vpop.permute.xlu0 %2601
        %2603 = vrot.lane.b32.xlu0 %v2545, 126
        %v2604 = vpop.permute.xlu0 %2603
        %2605 = vrot.lane.b32.xlu0 %v2546, 126
        %v2606 = vpop.permute.xlu0 %2605
        %2607 = vrot.lane.b32.xlu0 %v2547, 126
        %v2608 = vpop.permute.xlu0 %2607
        %v2609 = vsel %vm443, %v2592, %v2594
        %v2610 = vsel %vm443, %v2594, %v2596
        %v2611 = vsel %vm443, %v2596, %v2598
        %v2612 = vsel %vm443, %v2598, %v2600
        %v2613 = vsel %vm443, %v2600, %v2602
        %v2614 = vsel %vm443, %v2602, %v2604
        %v2615 = vsel %vm443, %v2604, %v2606
        %v2616 = vsel %vm443, %v2606, %v2608
        %2625 = vrot.lane.b32.xlu0 %v2539, 125
        %v2626 = vpop.permute.xlu0 %2625
        %2627 = vrot.lane.b32.xlu0 %v2540, 125
        %v2628 = vpop.permute.xlu0 %2627
        %2629 = vrot.lane.b32.xlu0 %v2541, 125
        %v2630 = vpop.permute.xlu0 %2629
        %2631 = vrot.lane.b32.xlu0 %v2542, 125
        %v2632 = vpop.permute.xlu0 %2631
        %2633 = vrot.lane.b32.xlu0 %v2543, 125
        %v2634 = vpop.permute.xlu0 %2633
        %2635 = vrot.lane.b32.xlu0 %v2544, 125
        %v2636 = vpop.permute.xlu0 %2635
        %2637 = vrot.lane.b32.xlu0 %v2545, 125
        %v2638 = vpop.permute.xlu0 %2637
        %2639 = vrot.lane.b32.xlu0 %v2546, 125
        %v2640 = vpop.permute.xlu0 %2639
        %2641 = vrot.lane.b32.xlu0 %v2547, 125
        %v2642 = vpop.permute.xlu0 %2641
        %v2643 = vsel %vm479, %v2626, %v2628
        %v2644 = vsel %vm479, %v2628, %v2630
        %v2645 = vsel %vm479, %v2630, %v2632
        %v2646 = vsel %vm479, %v2632, %v2634
        %v2647 = vsel %vm479, %v2634, %v2636
        %v2648 = vsel %vm479, %v2636, %v2638
        %v2649 = vsel %vm479, %v2638, %v2640
        %v2650 = vsel %vm479, %v2640, %v2642
        %2659 = vrot.lane.b32.xlu0 %v2539, 124
        %v2660 = vpop.permute.xlu0 %2659
        %2661 = vrot.lane.b32.xlu0 %v2540, 124
        %v2662 = vpop.permute.xlu0 %2661
        %2663 = vrot.lane.b32.xlu0 %v2541, 124
        %v2664 = vpop.permute.xlu0 %2663
        %2665 = vrot.lane.b32.xlu0 %v2542, 124
        %v2666 = vpop.permute.xlu0 %2665
        %2667 = vrot.lane.b32.xlu0 %v2543, 124
        %v2668 = vpop.permute.xlu0 %2667
        %2669 = vrot.lane.b32.xlu0 %v2544, 124
        %v2670 = vpop.permute.xlu0 %2669
        %2671 = vrot.lane.b32.xlu0 %v2545, 124
        %v2672 = vpop.permute.xlu0 %2671
        %2673 = vrot.lane.b32.xlu0 %v2546, 124
        %v2674 = vpop.permute.xlu0 %2673
        %2675 = vrot.lane.b32.xlu0 %v2547, 124
        %v2676 = vpop.permute.xlu0 %2675
        %v2677 = vsel %vm515, %v2660, %v2662
        %v2678 = vsel %vm515, %v2662, %v2664
        %v2679 = vsel %vm515, %v2664, %v2666
        %v2680 = vsel %vm515, %v2666, %v2668
        %v2681 = vsel %vm515, %v2668, %v2670
        %v2682 = vsel %vm515, %v2670, %v2672
        %v2683 = vsel %vm515, %v2672, %v2674
        %v2684 = vsel %vm515, %v2674, %v2676
        %s2693 = scalar_lea.vmem [#allocation7], 32
        %v2694 = vld [vmem:[%s2693] sm:$0xff]
        %2696 = vset.pattern.permute.xlu0 40
        %2697 = vperm.xlu0 %2696, %v2694
        %v2698 = vpop.permute.xlu0 %2697
        %v2700 = vsel %vm539, %v2694, 0
        %2702 = vmatprep.subr.mxu0 %v2540
        %2703 = vmatpush1.msra.mxu0 %v2539
        %2704 = vmatprep.subr.mxu0 %v2576
        %2705 = vmatpush1.msra.mxu0 %v2575
        %2706 = vmatprep.subr.mxu0 %v2610
        %2707 = vmatpush1.msra.mxu0 %v2609
        %2708 = vmatprep.subr.mxu0 %v2644
        %2709 = vmatpush1.msra.mxu0 %v2643
        %2710 = vmatprep.subr.mxu0 %v2678
        %2711 = vmatpush1.msra.mxu0 %v2677
        %2712 = vmatprep.subr.mxu0 0.0
        %2713 = vmatpush1.msra.mxu0 0.0
        %2714 = vmatprep.subr.mxu0 0.0
        %2715 = vmatpush1.msra.mxu0 0.0
        %2716 = vmatprep.subr.mxu0 0.0
        %2717 = vmatpush1.msra.mxu0 0.0
        %2718 = vmatprep.subr.mxu0 0.0
        %2719 = vmatpush1.msra.mxu0 0.0
        %2720 = vmatprep.subr.mxu0 0.0
        %2721 = vmatpush1.msra.mxu0 0.0
        %2722 = vmatprep.subr.mxu0 0.0
        %2723 = vmatpush1.msra.mxu0 0.0
        %2724 = vmatprep.subr.mxu0 0.0
        %2725 = vmatpush1.msra.mxu0 0.0
        %2726 = vmatprep.subr.mxu0 0.0
        %2727 = vmatpush1.msra.mxu0 0.0
        %2728 = vmatprep.subr.mxu0 0.0
        %2729 = vmatpush1.msra.mxu0 0.0
        %2730 = vmatprep.subr.mxu0 0.0
        %2731 = vmatpush1.msra.mxu0 0.0
        %2732 = vmatprep.subr.mxu0 0.0
        %2733 = vmatpush1.msra.mxu0 0.0
        %2734 = vmatprep.subr.mxu0 0.0
        %2735 = vmatpush1.msra.mxu0 0.0
        %2736 = vmatprep.subr.mxu0 0.0
        %2737 = vmatpush1.msra.mxu0 0.0
        %2738 = vmatprep.subr.mxu0 0.0
        %2739 = vmatpush1.msra.mxu0 0.0
        %2740 = vmatprep.subr.mxu0 0.0
        %2741 = vmatpush1.msra.mxu0 0.0
        %2742 = vmatprep.subr.mxu0 0.0
        %2743 = vmatpush1.msra.mxu0 0.0
        %2744 = vmatprep.subr.mxu0 0.0
        %2745 = vmatpush1.msra.mxu0 0.0
        %2746 = vmatprep.subr.mxu0 0.0
        %2747 = vmatpush1.msra.mxu0 0.0
        %2748 = vmatprep.subr.mxu0 0.0
        %2749 = vmatpush1.msra.mxu0 0.0
        %2750 = vmatprep.subr.mxu0 0.0
        %2751 = vmatpush1.msra.mxu0 0.0
        %2752 = vmatprep.subr.mxu0 0.0
        %2753 = vmatpush1.msra.mxu0 0.0
        %2754 = vmatprep.subr.mxu0 0.0
        %2755 = vmatpush1.msra.mxu0 0.0
        %2756 = vmatprep.subr.mxu0 0.0
        %2757 = vmatpush1.msra.mxu0 0.0
        %2758 = vmatprep.subr.mxu0 0.0
        %2759 = vmatpush1.msra.mxu0 0.0
        %2760 = vmatprep.subr.mxu0 0.0
        %2761 = vmatpush1.msra.mxu0 0.0
        %2762 = vmatprep.subr.mxu0 0.0
        %2763 = vmatpush1.msra.mxu0 0.0
        %2764 = vmatprep.subr.mxu0 0.0
        %2765 = vmatpush1.msra.mxu0 0.0
        %2766 = vmatprep.mubr.f32.mxu0 0.0
        %2767 = vmatmul.mubr.f32.gmra.mrb[0].mxu0 %v2700
        %v2768 = vpop.f32.mrb[0].mxu0
        %v2769 = vadd.f32 %v2698, %v2768
        %v2770 = vpop.f32.mrb[0].mxu0
        %v2771 = vadd.f32 %v2698, %v2770
        %2772 = vdwg.mxu0
        %2773 = vmatprep.subr.mxu0 %v2542
        %2774 = vmatpush1.msra.mxu0 %v2541
        %2775 = vmatprep.subr.mxu0 %v2578
        %2776 = vmatpush1.msra.mxu0 %v2577
        %2777 = vmatprep.subr.mxu0 %v2612
        %2778 = vmatpush1.msra.mxu0 %v2611
        %2779 = vmatprep.subr.mxu0 %v2646
        %2780 = vmatpush1.msra.mxu0 %v2645
        %2781 = vmatprep.subr.mxu0 %v2680
        %2782 = vmatpush1.msra.mxu0 %v2679
        %2783 = vmatprep.subr.mxu0 0.0
        %2784 = vmatpush1.msra.mxu0 0.0
        %2785 = vmatprep.subr.mxu0 0.0
        %2786 = vmatpush1.msra.mxu0 0.0
        %2787 = vmatprep.subr.mxu0 0.0
        %2788 = vmatpush1.msra.mxu0 0.0
        %2789 = vmatprep.subr.mxu0 0.0
        %2790 = vmatpush1.msra.mxu0 0.0
        %2791 = vmatprep.subr.mxu0 0.0
        %2792 = vmatpush1.msra.mxu0 0.0
        %2793 = vmatprep.subr.mxu0 0.0
        %2794 = vmatpush1.msra.mxu0 0.0
        %2795 = vmatprep.subr.mxu0 0.0
        %2796 = vmatpush1.msra.mxu0 0.0
        %2797 = vmatprep.subr.mxu0 0.0
        %2798 = vmatpush1.msra.mxu0 0.0
        %2799 = vmatprep.subr.mxu0 0.0
        %2800 = vmatpush1.msra.mxu0 0.0
        %2801 = vmatprep.subr.mxu0 0.0
        %2802 = vmatpush1.msra.mxu0 0.0
        %2803 = vmatprep.subr.mxu0 0.0
        %2804 = vmatpush1.msra.mxu0 0.0
        %2805 = vmatprep.subr.mxu0 0.0
        %2806 = vmatpush1.msra.mxu0 0.0
        %2807 = vmatprep.subr.mxu0 0.0
        %2808 = vmatpush1.msra.mxu0 0.0
        %2809 = vmatprep.subr.mxu0 0.0
        %2810 = vmatpush1.msra.mxu0 0.0
        %2811 = vmatprep.subr.mxu0 0.0
        %2812 = vmatpush1.msra.mxu0 0.0
        %2813 = vmatprep.subr.mxu0 0.0
        %2814 = vmatpush1.msra.mxu0 0.0
        %2815 = vmatprep.subr.mxu0 0.0
        %2816 = vmatpush1.msra.mxu0 0.0
        %2817 = vmatprep.subr.mxu0 0.0
        %2818 = vmatpush1.msra.mxu0 0.0
        %2819 = vmatprep.subr.mxu0 0.0
        %2820 = vmatpush1.msra.mxu0 0.0
        %2821 = vmatprep.subr.mxu0 0.0
        %2822 = vmatpush1.msra.mxu0 0.0
        %2823 = vmatprep.subr.mxu0 0.0
        %2824 = vmatpush1.msra.mxu0 0.0
        %2825 = vmatprep.subr.mxu0 0.0
        %2826 = vmatpush1.msra.mxu0 0.0
        %2827 = vmatprep.subr.mxu0 0.0
        %2828 = vmatpush1.msra.mxu0 0.0
        %2829 = vmatprep.subr.mxu0 0.0
        %2830 = vmatpush1.msra.mxu0 0.0
        %2831 = vmatprep.subr.mxu0 0.0
        %2832 = vmatpush1.msra.mxu0 0.0
        %2833 = vmatprep.subr.mxu0 0.0
        %2834 = vmatpush1.msra.mxu0 0.0
        %2835 = vmatprep.subr.mxu0 0.0
        %2836 = vmatpush1.msra.mxu0 0.0
        %2837 = vmatprep.mubr.f32.mxu0 0.0
        %2838 = vmatmul.mubr.f32.gmra.mrb[0].mxu0 %v2700
        %v2839 = vpop.f32.mrb[0].mxu0
        %v2840 = vadd.f32 %v2698, %v2839
        %v2841 = vpop.f32.mrb[0].mxu0
        %v2842 = vadd.f32 %v2698, %v2841
        %2843 = vdwg.mxu0
        %2844 = vmatprep.subr.mxu0 %v2544
        %2845 = vmatpush1.msra.mxu0 %v2543
        %2846 = vmatprep.subr.mxu0 %v2580
        %2847 = vmatpush1.msra.mxu0 %v2579
        %2848 = vmatprep.subr.mxu0 %v2614
        %2849 = vmatpush1.msra.mxu0 %v2613
        %2850 = vmatprep.subr.mxu0 %v2648
        %2851 = vmatpush1.msra.mxu0 %v2647
        %2852 = vmatprep.subr.mxu0 %v2682
        %2853 = vmatpush1.msra.mxu0 %v2681
        %2854 = vmatprep.subr.mxu0 0.0
        %2855 = vmatpush1.msra.mxu0 0.0
        %2856 = vmatprep.subr.mxu0 0.0
        %2857 = vmatpush1.msra.mxu0 0.0
        %2858 = vmatprep.subr.mxu0 0.0
        %2859 = vmatpush1.msra.mxu0 0.0
        %2860 = vmatprep.subr.mxu0 0.0
        %2861 = vmatpush1.msra.mxu0 0.0
        %2862 = vmatprep.subr.mxu0 0.0
        %2863 = vmatpush1.msra.mxu0 0.0
        %2864 = vmatprep.subr.mxu0 0.0
        %2865 = vmatpush1.msra.mxu0 0.0
        %2866 = vmatprep.subr.mxu0 0.0
        %2867 = vmatpush1.msra.mxu0 0.0
        %2868 = vmatprep.subr.mxu0 0.0
        %2869 = vmatpush1.msra.mxu0 0.0
        %2870 = vmatprep.subr.mxu0 0.0
        %2871 = vmatpush1.msra.mxu0 0.0
        %2872 = vmatprep.subr.mxu0 0.0
        %2873 = vmatpush1.msra.mxu0 0.0
        %2874 = vmatprep.subr.mxu0 0.0
        %2875 = vmatpush1.msra.mxu0 0.0
        %2876 = vmatprep.subr.mxu0 0.0
        %2877 = vmatpush1.msra.mxu0 0.0
        %2878 = vmatprep.subr.mxu0 0.0
        %2879 = vmatpush1.msra.mxu0 0.0
        %2880 = vmatprep.subr.mxu0 0.0
        %2881 = vmatpush1.msra.mxu0 0.0
        %2882 = vmatprep.subr.mxu0 0.0
        %2883 = vmatpush1.msra.mxu0 0.0
        %2884 = vmatprep.subr.mxu0 0.0
        %2885 = vmatpush1.msra.mxu0 0.0
        %2886 = vmatprep.subr.mxu0 0.0
        %2887 = vmatpush1.msra.mxu0 0.0
        %2888 = vmatprep.subr.mxu0 0.0
        %2889 = vmatpush1.msra.mxu0 0.0
        %2890 = vmatprep.subr.mxu0 0.0
        %2891 = vmatpush1.msra.mxu0 0.0
        %2892 = vmatprep.subr.mxu0 0.0
        %2893 = vmatpush1.msra.mxu0 0.0
        %2894 = vmatprep.subr.mxu0 0.0
        %2895 = vmatpush1.msra.mxu0 0.0
        %2896 = vmatprep.subr.mxu0 0.0
        %2897 = vmatpush1.msra.mxu0 0.0
        %2898 = vmatprep.subr.mxu0 0.0
        %2899 = vmatpush1.msra.mxu0 0.0
        %2900 = vmatprep.subr.mxu0 0.0
        %2901 = vmatpush1.msra.mxu0 0.0
        %2902 = vmatprep.subr.mxu0 0.0
        %2903 = vmatpush1.msra.mxu0 0.0
        %2904 = vmatprep.subr.mxu0 0.0
        %2905 = vmatpush1.msra.mxu0 0.0
        %2906 = vmatprep.subr.mxu0 0.0
        %2907 = vmatpush1.msra.mxu0 0.0
        %2908 = vmatprep.mubr.f32.mxu0 0.0
        %2909 = vmatmul.mubr.f32.gmra.mrb[0].mxu0 %v2700
        %v2910 = vpop.f32.mrb[0].mxu0
        %v2911 = vadd.f32 %v2698, %v2910
        %v2912 = vpop.f32.mrb[0].mxu0
        %v2913 = vadd.f32 %v2698, %v2912
        %2914 = vdwg.mxu0
        %2915 = vmatprep.subr.mxu0 %v2546
        %2916 = vmatpush1.msra.mxu0 %v2545
        %2917 = vmatprep.subr.mxu0 %v2582
        %2918 = vmatpush1.msra.mxu0 %v2581
        %2919 = vmatprep.subr.mxu0 %v2616
        %2920 = vmatpush1.msra.mxu0 %v2615
        %2921 = vmatprep.subr.mxu0 %v2650
        %2922 = vmatpush1.msra.mxu0 %v2649
        %2923 = vmatprep.subr.mxu0 %v2684
        %2924 = vmatpush1.msra.mxu0 %v2683
        %2925 = vmatprep.subr.mxu0 0.0
        %2926 = vmatpush1.msra.mxu0 0.0
        %2927 = vmatprep.subr.mxu0 0.0
        %2928 = vmatpush1.msra.mxu0 0.0
        %2929 = vmatprep.subr.mxu0 0.0
        %2930 = vmatpush1.msra.mxu0 0.0
        %2931 = vmatprep.subr.mxu0 0.0
        %2932 = vmatpush1.msra.mxu0 0.0
        %2933 = vmatprep.subr.mxu0 0.0
        %2934 = vmatpush1.msra.mxu0 0.0
        %2935 = vmatprep.subr.mxu0 0.0
        %2936 = vmatpush1.msra.mxu0 0.0
        %2937 = vmatprep.subr.mxu0 0.0
        %2938 = vmatpush1.msra.mxu0 0.0
        %2939 = vmatprep.subr.mxu0 0.0
        %2940 = vmatpush1.msra.mxu0 0.0
        %2941 = vmatprep.subr.mxu0 0.0
        %2942 = vmatpush1.msra.mxu0 0.0
        %2943 = vmatprep.subr.mxu0 0.0
        %2944 = vmatpush1.msra.mxu0 0.0
        %2945 = vmatprep.subr.mxu0 0.0
        %2946 = vmatpush1.msra.mxu0 0.0
        %2947 = vmatprep.subr.mxu0 0.0
        %2948 = vmatpush1.msra.mxu0 0.0
        %2949 = vmatprep.subr.mxu0 0.0
        %2950 = vmatpush1.msra.mxu0 0.0
        %2951 = vmatprep.subr.mxu0 0.0
        %2952 = vmatpush1.msra.mxu0 0.0
        %2953 = vmatprep.subr.mxu0 0.0
        %2954 = vmatpush1.msra.mxu0 0.0
        %2955 = vmatprep.subr.mxu0 0.0
        %2956 = vmatpush1.msra.mxu0 0.0
        %2957 = vmatprep.subr.mxu0 0.0
        %2958 = vmatpush1.msra.mxu0 0.0
        %2959 = vmatprep.subr.mxu0 0.0
        %2960 = vmatpush1.msra.mxu0 0.0
        %2961 = vmatprep.subr.mxu0 0.0
        %2962 = vmatpush1.msra.mxu0 0.0
        %2963 = vmatprep.subr.mxu0 0.0
        %2964 = vmatpush1.msra.mxu0 0.0
        %2965 = vmatprep.subr.mxu0 0.0
        %2966 = vmatpush1.msra.mxu0 0.0
        %2967 = vmatprep.subr.mxu0 0.0
        %2968 = vmatpush1.msra.mxu0 0.0
        %2969 = vmatprep.subr.mxu0 0.0
        %2970 = vmatpush1.msra.mxu0 0.0
        %2971 = vmatprep.subr.mxu0 0.0
        %2972 = vmatpush1.msra.mxu0 0.0
        %2973 = vmatprep.subr.mxu0 0.0
        %2974 = vmatpush1.msra.mxu0 0.0
        %2975 = vmatprep.subr.mxu0 0.0
        %2976 = vmatpush1.msra.mxu0 0.0
        %2977 = vmatprep.subr.mxu0 0.0
        %2978 = vmatpush1.msra.mxu0 0.0
        %2979 = vmatprep.mubr.f32.mxu0 0.0
        %2980 = vmatmul.mubr.f32.gmra.mrb[0].mxu0 %v2700
        %v2981 = vpop.f32.mrb[0].mxu0
        %v2982 = vadd.f32 %v2698, %v2981
        %v2983 = vpop.f32.mrb[0].mxu0
        %v2984 = vadd.f32 %v2698, %v2983
        %2985 = vdwg.mxu0
        %vm2986 = vcmp.ge.f32.partialorder %v2769, 0.0
        %vm2987 = vcmp.ge.f32.partialorder %v2771, 0.0
        %vm2988 = vcmp.ge.f32.partialorder %v2840, 0.0
        %vm2989 = vcmp.ge.f32.partialorder %v2842, 0.0
        %vm2990 = vcmp.ge.f32.partialorder %v2911, 0.0
        %vm2991 = vcmp.ge.f32.partialorder %v2913, 0.0
        %vm2992 = vcmp.ge.f32.partialorder %v2982, 0.0
        %vm2993 = vcmp.ge.f32.partialorder %v2984, 0.0
        %v2994 = vmul.f32 %v2769, 0.01
        %v2995 = vmul.f32 %v2771, 0.01
        %v2996 = vmul.f32 %v2840, 0.01
        %v2997 = vmul.f32 %v2842, 0.01
        %v2998 = vmul.f32 %v2911, 0.01
        %v2999 = vmul.f32 %v2913, 0.01
        %v3000 = vmul.f32 %v2982, 0.01
        %v3001 = vmul.f32 %v2984, 0.01
        %v3002 = vsel %vm2986, %v2769, %v2994
        %v3003 = vsel %vm2987, %v2771, %v2995
        %v3004 = vsel %vm2988, %v2840, %v2996
        %v3005 = vsel %vm2989, %v2842, %v2997
        %v3006 = vsel %vm2990, %v2911, %v2998
        %v3007 = vsel %vm2991, %v2913, %v2999
        %v3008 = vsel %vm2992, %v2982, %v3000
        %v3009 = vsel %vm2993, %v2984, %v3001
        %v3010 = vld [vmem:[#allocation8] sm:$0xff]
        %v3011 = vld [vmem:[#allocation8 + $0x8] sm:$0xff]
        %v3012 = vld [vmem:[#allocation8 + $0x10] sm:$0xff]
        %v3013 = vld [vmem:[#allocation8 + $0x18] sm:$0xff]
        %v3014 = vld [vmem:[#allocation8 + $0x20] sm:$0xff]
        %v3015 = vld [vmem:[#allocation8 + $0x28] sm:$0xff]
        %v3016 = vld [vmem:[#allocation8 + $0x30] sm:$0xff]
        %v3017 = vld [vmem:[#allocation8 + $0x38] sm:$0xff]
        %v3018 = vld [vmem:[#allocation8 + $0x40] sm:$0xff]
        %v3019 = vld [vmem:[#allocation8 + $0x48] sm:$0xff]
        %v3020 = vld [vmem:[#allocation8 + $0x50] sm:$0xff]
        %v3021 = vld [vmem:[#allocation8 + $0x58] sm:$0xff]
        %v3022 = vld [vmem:[#allocation8 + $0x60] sm:$0xff]
        %v3023 = vld [vmem:[#allocation8 + $0x68] sm:$0xff]
        %v3024 = vld [vmem:[#allocation8 + $0x70] sm:$0xff]
        %v3025 = vld [vmem:[#allocation8 + $0x78] sm:$0xff]
        %v3026 = vld [vmem:[#allocation8 + $0x80] sm:$0xff]
        %v3027 = vld [vmem:[#allocation8 + $0x88] sm:$0xff]
        %v3028 = vld [vmem:[#allocation8 + $0x90] sm:$0xff]
        %v3029 = vld [vmem:[#allocation8 + $0x98] sm:$0xff]
        %v3030 = vld [vmem:[#allocation8 + $0xa0] sm:$0xff]
        %v3031 = vld [vmem:[#allocation8 + $0xa8] sm:$0xff]
        %v3032 = vld [vmem:[#allocation8 + $0xb0] sm:$0xff]
        %v3033 = vld [vmem:[#allocation8 + $0xb8] sm:$0xff]
        %v3034 = vld [vmem:[#allocation8 + $0xc0] sm:$0xff]
        %v3035 = vld [vmem:[#allocation8 + $0xc8] sm:$0xff]
        %v3036 = vld [vmem:[#allocation8 + $0xd0] sm:$0xff]
        %v3037 = vld [vmem:[#allocation8 + $0xd8] sm:$0xff]
        %v3038 = vld [vmem:[#allocation8 + $0xe0] sm:$0xff]
        %v3039 = vld [vmem:[#allocation8 + $0xe8] sm:$0xff]
        %v3040 = vld [vmem:[#allocation8 + $0xf0] sm:$0xff]
        %v3041 = vld [vmem:[#allocation8 + $0xf8] sm:$0xff]
        %3042 = vmatprep.subr.mxu0 0.0
        %3043 = vmatpush1.msra.mxu0 %v3010
        %3044 = vmatprep.subr.mxu0 0.0
        %3045 = vmatpush1.msra.mxu0 %v3011
        %3046 = vmatprep.subr.mxu0 0.0
        %3047 = vmatpush1.msra.mxu0 %v3012
        %3048 = vmatprep.subr.mxu0 0.0
        %3049 = vmatpush1.msra.mxu0 %v3013
        %3050 = vmatprep.subr.mxu0 0.0
        %3051 = vmatpush1.msra.mxu0 %v3014
        %3052 = vmatprep.subr.mxu0 0.0
        %3053 = vmatpush1.msra.mxu0 %v3015
        %3054 = vmatprep.subr.mxu0 0.0
        %3055 = vmatpush1.msra.mxu0 %v3016
        %3056 = vmatprep.subr.mxu0 0.0
        %3057 = vmatpush1.msra.mxu0 %v3017
        %3058 = vmatprep.subr.mxu0 0.0
        %3059 = vmatpush1.msra.mxu0 %v3018
        %3060 = vmatprep.subr.mxu0 0.0
        %3061 = vmatpush1.msra.mxu0 %v3019
        %3062 = vmatprep.subr.mxu0 0.0
        %3063 = vmatpush1.msra.mxu0 %v3020
        %3064 = vmatprep.subr.mxu0 0.0
        %3065 = vmatpush1.msra.mxu0 %v3021
        %3066 = vmatprep.subr.mxu0 0.0
        %3067 = vmatpush1.msra.mxu0 %v3022
        %3068 = vmatprep.subr.mxu0 0.0
        %3069 = vmatpush1.msra.mxu0 %v3023
        %3070 = vmatprep.subr.mxu0 0.0
        %3071 = vmatpush1.msra.mxu0 %v3024
        %3072 = vmatprep.subr.mxu0 0.0
        %3073 = vmatpush1.msra.mxu0 %v3025
        %3074 = vmatprep.subr.mxu0 0.0
        %3075 = vmatpush1.msra.mxu0 %v3026
        %3076 = vmatprep.subr.mxu0 0.0
        %3077 = vmatpush1.msra.mxu0 %v3027
        %3078 = vmatprep.subr.mxu0 0.0
        %3079 = vmatpush1.msra.mxu0 %v3028
        %3080 = vmatprep.subr.mxu0 0.0
        %3081 = vmatpush1.msra.mxu0 %v3029
        %3082 = vmatprep.subr.mxu0 0.0
        %3083 = vmatpush1.msra.mxu0 %v3030
        %3084 = vmatprep.subr.mxu0 0.0
        %3085 = vmatpush1.msra.mxu0 %v3031
        %3086 = vmatprep.subr.mxu0 0.0
        %3087 = vmatpush1.msra.mxu0 %v3032
        %3088 = vmatprep.subr.mxu0 0.0
        %3089 = vmatpush1.msra.mxu0 %v3033
        %3090 = vmatprep.subr.mxu0 0.0
        %3091 = vmatpush1.msra.mxu0 %v3034
        %3092 = vmatprep.subr.mxu0 0.0
        %3093 = vmatpush1.msra.mxu0 %v3035
        %3094 = vmatprep.subr.mxu0 0.0
        %3095 = vmatpush1.msra.mxu0 %v3036
        %3096 = vmatprep.subr.mxu0 0.0
        %3097 = vmatpush1.msra.mxu0 %v3037
        %3098 = vmatprep.subr.mxu0 0.0
        %3099 = vmatpush1.msra.mxu0 %v3038
        %3100 = vmatprep.subr.mxu0 0.0
        %3101 = vmatpush1.msra.mxu0 %v3039
        %3102 = vmatprep.subr.mxu0 0.0
        %3103 = vmatpush1.msra.mxu0 %v3040
        %3104 = vmatprep.subr.mxu0 0.0
        %3105 = vmatpush1.msra.mxu0 %v3041
        %3106 = vmatprep.mubr.f32.mxu0 %v3003
        %3107 = vmatmul.mubr.f32.gmra.mrb[0].mxu0 %v3002
        %v3108 = vpop.f32.mrb[0].mxu0
        %v3109 = vadd.f32 0.0, %v3108
        %v3110 = vpop.f32.mrb[0].mxu0
        %3111 = vdwg.mxu0
        %3112 = vmatprep.subr.mxu0 0.0
        %3113 = vmatpush1.msra.mxu0 %v3010
        %3114 = vmatprep.subr.mxu0 0.0
        %3115 = vmatpush1.msra.mxu0 %v3011
        %3116 = vmatprep.subr.mxu0 0.0
        %3117 = vmatpush1.msra.mxu0 %v3012
        %3118 = vmatprep.subr.mxu0 0.0
        %3119 = vmatpush1.msra.mxu0 %v3013
        %3120 = vmatprep.subr.mxu0 0.0
        %3121 = vmatpush1.msra.mxu0 %v3014
        %3122 = vmatprep.subr.mxu0 0.0
        %3123 = vmatpush1.msra.mxu0 %v3015
        %3124 = vmatprep.subr.mxu0 0.0
        %3125 = vmatpush1.msra.mxu0 %v3016
        %3126 = vmatprep.subr.mxu0 0.0
        %3127 = vmatpush1.msra.mxu0 %v3017
        %3128 = vmatprep.subr.mxu0 0.0
        %3129 = vmatpush1.msra.mxu0 %v3018
        %3130 = vmatprep.subr.mxu0 0.0
        %3131 = vmatpush1.msra.mxu0 %v3019
        %3132 = vmatprep.subr.mxu0 0.0
        %3133 = vmatpush1.msra.mxu0 %v3020
        %3134 = vmatprep.subr.mxu0 0.0
        %3135 = vmatpush1.msra.mxu0 %v3021
        %3136 = vmatprep.subr.mxu0 0.0
        %3137 = vmatpush1.msra.mxu0 %v3022
        %3138 = vmatprep.subr.mxu0 0.0
        %3139 = vmatpush1.msra.mxu0 %v3023
        %3140 = vmatprep.subr.mxu0 0.0
        %3141 = vmatpush1.msra.mxu0 %v3024
        %3142 = vmatprep.subr.mxu0 0.0
        %3143 = vmatpush1.msra.mxu0 %v3025
        %3144 = vmatprep.subr.mxu0 0.0
        %3145 = vmatpush1.msra.mxu0 %v3026
        %3146 = vmatprep.subr.mxu0 0.0
        %3147 = vmatpush1.msra.mxu0 %v3027
        %3148 = vmatprep.subr.mxu0 0.0
        %3149 = vmatpush1.msra.mxu0 %v3028
        %3150 = vmatprep.subr.mxu0 0.0
        %3151 = vmatpush1.msra.mxu0 %v3029
        %3152 = vmatprep.subr.mxu0 0.0
        %3153 = vmatpush1.msra.mxu0 %v3030
        %3154 = vmatprep.subr.mxu0 0.0
        %3155 = vmatpush1.msra.mxu0 %v3031
        %3156 = vmatprep.subr.mxu0 0.0
        %3157 = vmatpush1.msra.mxu0 %v3032
        %3158 = vmatprep.subr.mxu0 0.0
        %3159 = vmatpush1.msra.mxu0 %v3033
        %3160 = vmatprep.subr.mxu0 0.0
        %3161 = vmatpush1.msra.mxu0 %v3034
        %3162 = vmatprep.subr.mxu0 0.0
        %3163 = vmatpush1.msra.mxu0 %v3035
        %3164 = vmatprep.subr.mxu0 0.0
        %3165 = vmatpush1.msra.mxu0 %v3036
        %3166 = vmatprep.subr.mxu0 0.0
        %3167 = vmatpush1.msra.mxu0 %v3037
        %3168 = vmatprep.subr.mxu0 0.0
        %3169 = vmatpush1.msra.mxu0 %v3038
        %3170 = vmatprep.subr.mxu0 0.0
        %3171 = vmatpush1.msra.mxu0 %v3039
        %3172 = vmatprep.subr.mxu0 0.0
        %3173 = vmatpush1.msra.mxu0 %v3040
        %3174 = vmatprep.subr.mxu0 0.0
        %3175 = vmatpush1.msra.mxu0 %v3041
        %3176 = vmatprep.mubr.f32.mxu0 %v3005
        %3177 = vmatmul.mubr.f32.gmra.mrb[0].mxu0 %v3004
        %v3178 = vpop.f32.mrb[0].mxu0
        %v3179 = vadd.f32 0.0, %v3178
        %v3180 = vpop.f32.mrb[0].mxu0
        %3181 = vdwg.mxu0
        %3182 = vmatprep.subr.mxu0 0.0
        %3183 = vmatpush1.msra.mxu0 %v3010
        %3184 = vmatprep.subr.mxu0 0.0
        %3185 = vmatpush1.msra.mxu0 %v3011
        %3186 = vmatprep.subr.mxu0 0.0
        %3187 = vmatpush1.msra.mxu0 %v3012
        %3188 = vmatprep.subr.mxu0 0.0
        %3189 = vmatpush1.msra.mxu0 %v3013
        %3190 = vmatprep.subr.mxu0 0.0
        %3191 = vmatpush1.msra.mxu0 %v3014
        %3192 = vmatprep.subr.mxu0 0.0
        %3193 = vmatpush1.msra.mxu0 %v3015
        %3194 = vmatprep.subr.mxu0 0.0
        %3195 = vmatpush1.msra.mxu0 %v3016
        %3196 = vmatprep.subr.mxu0 0.0
        %3197 = vmatpush1.msra.mxu0 %v3017
        %3198 = vmatprep.subr.mxu0 0.0
        %3199 = vmatpush1.msra.mxu0 %v3018
        %3200 = vmatprep.subr.mxu0 0.0
        %3201 = vmatpush1.msra.mxu0 %v3019
        %3202 = vmatprep.subr.mxu0 0.0
        %3203 = vmatpush1.msra.mxu0 %v3020
        %3204 = vmatprep.subr.mxu0 0.0
        %3205 = vmatpush1.msra.mxu0 %v3021
        %3206 = vmatprep.subr.mxu0 0.0
        %3207 = vmatpush1.msra.mxu0 %v3022
        %3208 = vmatprep.subr.mxu0 0.0
        %3209 = vmatpush1.msra.mxu0 %v3023
        %3210 = vmatprep.subr.mxu0 0.0
        %3211 = vmatpush1.msra.mxu0 %v3024
        %3212 = vmatprep.subr.mxu0 0.0
        %3213 = vmatpush1.msra.mxu0 %v3025
        %3214 = vmatprep.subr.mxu0 0.0
        %3215 = vmatpush1.msra.mxu0 %v3026
        %3216 = vmatprep.subr.mxu0 0.0
        %3217 = vmatpush1.msra.mxu0 %v3027
        %3218 = vmatprep.subr.mxu0 0.0
        %3219 = vmatpush1.msra.mxu0 %v3028
        %3220 = vmatprep.subr.mxu0 0.0
        %3221 = vmatpush1.msra.mxu0 %v3029
        %3222 = vmatprep.subr.mxu0 0.0
        %3223 = vmatpush1.msra.mxu0 %v3030
        %3224 = vmatprep.subr.mxu0 0.0
        %3225 = vmatpush1.msra.mxu0 %v3031
        %3226 = vmatprep.subr.mxu0 0.0
        %3227 = vmatpush1.msra.mxu0 %v3032
        %3228 = vmatprep.subr.mxu0 0.0
        %3229 = vmatpush1.msra.mxu0 %v3033
        %3230 = vmatprep.subr.mxu0 0.0
        %3231 = vmatpush1.msra.mxu0 %v3034
        %3232 = vmatprep.subr.mxu0 0.0
        %3233 = vmatpush1.msra.mxu0 %v3035
        %3234 = vmatprep.subr.mxu0 0.0
        %3235 = vmatpush1.msra.mxu0 %v3036
        %3236 = vmatprep.subr.mxu0 0.0
        %3237 = vmatpush1.msra.mxu0 %v3037
        %3238 = vmatprep.subr.mxu0 0.0
        %3239 = vmatpush1.msra.mxu0 %v3038
        %3240 = vmatprep.subr.mxu0 0.0
        %3241 = vmatpush1.msra.mxu0 %v3039
        %3242 = vmatprep.subr.mxu0 0.0
        %3243 = vmatpush1.msra.mxu0 %v3040
        %3244 = vmatprep.subr.mxu0 0.0
        %3245 = vmatpush1.msra.mxu0 %v3041
        %3246 = vmatprep.mubr.f32.mxu0 %v3007
        %3247 = vmatmul.mubr.f32.gmra.mrb[0].mxu0 %v3006
        %v3248 = vpop.f32.mrb[0].mxu0
        %v3249 = vadd.f32 0.0, %v3248
        %v3250 = vpop.f32.mrb[0].mxu0
        %3251 = vdwg.mxu0
        %3252 = vmatprep.subr.mxu0 0.0
        %3253 = vmatpush1.msra.mxu0 %v3010
        %3254 = vmatprep.subr.mxu0 0.0
        %3255 = vmatpush1.msra.mxu0 %v3011
        %3256 = vmatprep.subr.mxu0 0.0
        %3257 = vmatpush1.msra.mxu0 %v3012
        %3258 = vmatprep.subr.mxu0 0.0
        %3259 = vmatpush1.msra.mxu0 %v3013
        %3260 = vmatprep.subr.mxu0 0.0
        %3261 = vmatpush1.msra.mxu0 %v3014
        %3262 = vmatprep.subr.mxu0 0.0
        %3263 = vmatpush1.msra.mxu0 %v3015
        %3264 = vmatprep.subr.mxu0 0.0
        %3265 = vmatpush1.msra.mxu0 %v3016
        %3266 = vmatprep.subr.mxu0 0.0
        %3267 = vmatpush1.msra.mxu0 %v3017
        %3268 = vmatprep.subr.mxu0 0.0
        %3269 = vmatpush1.msra.mxu0 %v3018
        %3270 = vmatprep.subr.mxu0 0.0
        %3271 = vmatpush1.msra.mxu0 %v3019
        %3272 = vmatprep.subr.mxu0 0.0
        %3273 = vmatpush1.msra.mxu0 %v3020
        %3274 = vmatprep.subr.mxu0 0.0
        %3275 = vmatpush1.msra.mxu0 %v3021
        %3276 = vmatprep.subr.mxu0 0.0
        %3277 = vmatpush1.msra.mxu0 %v3022
        %3278 = vmatprep.subr.mxu0 0.0
        %3279 = vmatpush1.msra.mxu0 %v3023
        %3280 = vmatprep.subr.mxu0 0.0
        %3281 = vmatpush1.msra.mxu0 %v3024
        %3282 = vmatprep.subr.mxu0 0.0
        %3283 = vmatpush1.msra.mxu0 %v3025
        %3284 = vmatprep.subr.mxu0 0.0
        %3285 = vmatpush1.msra.mxu0 %v3026
        %3286 = vmatprep.subr.mxu0 0.0
        %3287 = vmatpush1.msra.mxu0 %v3027
        %3288 = vmatprep.subr.mxu0 0.0
        %3289 = vmatpush1.msra.mxu0 %v3028
        %3290 = vmatprep.subr.mxu0 0.0
        %3291 = vmatpush1.msra.mxu0 %v3029
        %3292 = vmatprep.subr.mxu0 0.0
        %3293 = vmatpush1.msra.mxu0 %v3030
        %3294 = vmatprep.subr.mxu0 0.0
        %3295 = vmatpush1.msra.mxu0 %v3031
        %3296 = vmatprep.subr.mxu0 0.0
        %3297 = vmatpush1.msra.mxu0 %v3032
        %3298 = vmatprep.subr.mxu0 0.0
        %3299 = vmatpush1.msra.mxu0 %v3033
        %3300 = vmatprep.subr.mxu0 0.0
        %3301 = vmatpush1.msra.mxu0 %v3034
        %3302 = vmatprep.subr.mxu0 0.0
        %3303 = vmatpush1.msra.mxu0 %v3035
        %3304 = vmatprep.subr.mxu0 0.0
        %3305 = vmatpush1.msra.mxu0 %v3036
        %3306 = vmatprep.subr.mxu0 0.0
        %3307 = vmatpush1.msra.mxu0 %v3037
        %3308 = vmatprep.subr.mxu0 0.0
        %3309 = vmatpush1.msra.mxu0 %v3038
        %3310 = vmatprep.subr.mxu0 0.0
        %3311 = vmatpush1.msra.mxu0 %v3039
        %3312 = vmatprep.subr.mxu0 0.0
        %3313 = vmatpush1.msra.mxu0 %v3040
        %3314 = vmatprep.subr.mxu0 0.0
        %3315 = vmatpush1.msra.mxu0 %v3041
        %3316 = vmatprep.mubr.f32.mxu0 %v3009
        %3317 = vmatmul.mubr.f32.gmra.mrb[0].mxu0 %v3008
        %v3318 = vpop.f32.mrb[0].mxu0
        %v3319 = vadd.f32 0.0, %v3318
        %v3320 = vpop.f32.mrb[0].mxu0
        %3321 = vdwg.mxu0
        %3322 = vst [vmem:[%s340] sm:$0xff] %v3109
        %3323 = vst [vmem:[%s340 + $0x8] sm:$0xff] %v3179
        %3324 = vst [vmem:[%s340 + $0x10] sm:$0xff] %v3249
        %3325 = vst [vmem:[%s340 + $0x18] sm:$0xff] %v3319
        %s3326 = sand.u32 %s154, 1
        %s3327 = scalar_lea.sflag [#allocation4], %s3326
        %s3328 = sand.u32 %s154, 1
        %s3329 = smul.addr %s3328, 32
        %s3330 = scalar_lea.vmem [#allocation10], %s3329
        %s3331 = sand.u32 %s182, 1
        %s3332 = scalar_lea.sflag [#allocation12], %s3331
        %s3333 = sand.u32 %s182, 1
        %s3334 = smul.addr %s3333, 64
        %s3335 = scalar_lea.vmem [#allocation11], %s3334
        // Predicated region
        $region53: #{tpu_custom_call.1} parent=35 // pred_check
          %p3336 = pneg %p164
        $region54: #{tpu_custom_call.1} parent=35 // pred_check_branch
          %3338 = sbr.rel (%p3336) target = $region56
        $region55: #{tpu_custom_call.1} parent=35 // pred_region
          %s3339 = smul.u32 4, %s35
          %s3341 = ssub.s32 512, 512
          %3342 = vsyncadd %s3327, %s3341
          %s3343 = smul.addr %s34, 8
          %s3344 = sadd.s32 %s3339, %s3343
          %s3345 = smul.addr %s3344, 128
          %s3346 = scalar_lea.hbm %s4, %s3345
          %s3348 = sshll.u32 %s3330, 4
          %s3349 = int_to_ptr.vmem [resolvable:$true] %s3348
          %3351 = dma.vmem_to_hbm [thread:$0]  %s3349, 512, %s3346, %s3327
        $region56: #{tpu_custom_call.1} parent=35 // pred_fallthru
          _
        // Predicated region
        $region57: #{tpu_custom_call.1} parent=35 // pred_check
          %p3352 = pneg %p192
        $region58: #{tpu_custom_call.1} parent=35 // pred_check_branch
          %3354 = sbr.rel (%p3352) target = $region60
        $region59: #{tpu_custom_call.1} parent=35 // pred_region
          %s3355 = smul.u32 8, %s35
          %s3357 = ssub.s32 1024, 1024
          %3358 = vsyncadd %s3332, %s3357
          %s3359 = smul.addr %s34, 16
          %s3360 = sadd.s32 %s3355, %s3359
          %s3361 = smul.addr %s3360, 128
          %s3362 = scalar_lea.hbm %s5, %s3361
          %s3364 = sshll.u32 %s3335, 4
          %s3365 = int_to_ptr.vmem [resolvable:$true] %s3364
          %3367 = dma.vmem_to_hbm [thread:$0]  %s3365, 1024, %s3362, %s3332
        $region60: #{tpu_custom_call.1} parent=35 // pred_fallthru
          _
      $region36: #{tpu_custom_call.1} parent=5 // pred_fallthru
        _
      %p3368 = scmp.le.s32.totalorder 2, %s25
      // Predicated region
      $region61: #{tpu_custom_call.1} parent=5 // pred_check
        %p3369 = pneg %p3368
      $region62: #{tpu_custom_call.1} parent=5 // pred_check_branch
        %3371 = sbr.rel (%p3369) target = $region64
      $region63: #{tpu_custom_call.1} parent=5 // pred_region
        %s3372 = ssub.s32 %s25, 2
        // Predicated region
        $region65: #{tpu_custom_call.1} parent=63 // pred_check
          %p3373 = pneg %p170
        $region66: #{tpu_custom_call.1} parent=63 // pred_check_branch
          %3375 = sbr.rel (%p3373) target = $region68
        $region67: #{tpu_custom_call.1} parent=63 // pred_region
          %s3376 = sand.u32 %s155, 1
          %s3377 = scalar_lea.sflag [#allocation4], %s3376
          %s3378 = sand.u32 %s155, 1
          %s3379 = smul.addr %s3378, 32
          %s3380 = scalar_lea.vmem [#allocation10], %s3379
          %3381 = dma.done %s3377, 512
        $region68: #{tpu_custom_call.1} parent=63 // pred_fallthru
          _
        // Predicated region
        $region69: #{tpu_custom_call.1} parent=63 // pred_check
          %p3382 = pneg %p198
        $region70: #{tpu_custom_call.1} parent=63 // pred_check_branch
          %3384 = sbr.rel (%p3382) target = $region72
        $region71: #{tpu_custom_call.1} parent=63 // pred_region
          %s3385 = sand.u32 %s183, 1
          %s3386 = scalar_lea.sflag [#allocation12], %s3385
          %s3387 = sand.u32 %s183, 1
          %s3388 = smul.addr %s3387, 64
          %s3389 = scalar_lea.vmem [#allocation11], %s3388
          %3390 = dma.done %s3386, 1024
        $region72: #{tpu_custom_call.1} parent=63 // pred_fallthru
          _
      $region64: #{tpu_custom_call.1} parent=5 // pred_fallthru
        _
    $region6: #{tpu_custom_call.1} parent=1 // loop_footer
      %s29 = sadd.s32 1, %s25
    $region7: #{tpu_custom_call.1} parent=1 // loop_footer_branch
      %24 = sbr.rel target = $region3
    $region8: #{tpu_custom_call.1} parent=1 // loop_exit
      _
    %3391 = vsyncpa [#allocation3], 1
    %s3392 = scalar_lea.sflag [#allocation3], 1
    %3393 = vsyncpa %s3392, 1
    %3394 = vsyncpa [#allocation6], 1
    %s3395 = scalar_lea.sflag [#allocation6], 1
    %3396 = vsyncpa %s3395, 1
    %3397 = vsyncpa [#allocation9], 1
    %3398 = vsyncpa [#allocation4], 1
    %s3399 = scalar_lea.sflag [#allocation4], 1
    %3400 = vsyncpa %s3399, 1
    %3401 = vsyncpa [#allocation12], 1
    %s3402 = scalar_lea.sflag [#allocation12], 1
    %3403 = vsyncpa %s3402, 1

</llo_original>
